<compile_context>
chip_gen: v7x
topology: tpu7x:2x2x1
jax: 0.10.0
libtpu: 0.0.40
codegen_flags: <defaults>
</compile_context>

<pallas_src>
import functools
import math

import jax
import jax.numpy as jnp
from jax.experimental import pallas as pl
from jax.experimental.pallas import tpu as pltpu

ACT_DTYPE = jnp.bfloat16


# ---------------------------------------------------------------------------
# Generation-dependent budgets (review: don't size v6e/v5e for v7x's VMEM).
# ---------------------------------------------------------------------------
def _tpu_vmem_capacity_bytes():
  try:
    info = pltpu.get_tpu_info()
    cap = getattr(info, "vmem_capacity_bytes", None)
    if cap:
      return int(cap)
  except Exception:
    pass
  return 64 * 1024 * 1024  # conservative (v7x-sized) fallback


_VMEM_CAP = _tpu_vmem_capacity_bytes()
# ~96 MiB on 128 MiB parts (v5e/v6e), ~48 MiB on v7x's 64 MiB.
VMEM_LIMIT = min(_VMEM_CAP * 3 // 4, 100 * 1024 * 1024)

if _VMEM_CAP >= 96 * 1024 * 1024:   # v5e / v6e (128 MiB VMEM)
  TM_PREF, TN_PREF, TK_PREF, TS_PREF = 512, 512, 512, 256
else:                                # v7x (64 MiB VMEM, 2 TensorCores)
  TM_PREF, TN_PREF, TK_PREF, TS_PREF = 256, 256, 512, 256


def _pick_tile(dim, pref, align):
  """Largest divisor of `dim` that is <= `pref` and a multiple of `align`.

  Falls back to the full dimension (always a legal block) only when no
  aligned divisor exists.
  """
  if dim <= pref:
    return dim
  t = (pref // align) * align
  while t >= align:
    if dim % t == 0:
      return t
    t -= align
  # TODO(synk): pad the operand instead of a full-dim block for pathological
  # (prime-ish) dims; at huge sizes a full-dim block can exceed VMEM_LIMIT.
  return dim


# ---------------------------------------------------------------------------
# Grouped matmul kernel: out[g] = act(x @ w[g] + b[g]).  Grid (G, M, N, K)
# with K last ("arbitrary"); f32 accumulator resident across K.
# ---------------------------------------------------------------------------
def _matmul_kernel(x_ref, w_ref, b_ref, o_ref, acc_ref, *, activation, k_axis):
  k = pl.program_id(k_axis)

  @pl.when(k == 0)
  def _():
    acc_ref[...] = jnp.zeros_like(acc_ref)

  acc_ref[...] += jnp.dot(x_ref[...], w_ref[...],
                          preferred_element_type=jnp.float32)

  @pl.when(k == pl.num_programs(k_axis) - 1)
  def _():
    out = acc_ref[...] + b_ref[...].astype(jnp.float32)
    if activation == "relu":
      out = jnp.maximum(out, 0.0)
    o_ref[...] = out.astype(o_ref.dtype)


def grouped_linear(x, w, b, *, activation=None, out_dtype=None):
  """x: [M, K]; w: [G, K, N]; b: [G, 1, N] -> out: [G, M, N]."""
  M, K = x.shape
  G, Kw, N = w.shape
  assert K == Kw and b.shape == (G, 1, N)
  out_dtype = out_dtype or x.dtype
  tm = _pick_tile(M, TM_PREF, 8)
  tn = _pick_tile(N, TN_PREF, 128)
  tk = _pick_tile(K, TK_PREF, 128)
  kernel = functools.partial(_matmul_kernel, activation=activation, k_axis=3)
  return pl.pallas_call(
      kernel,
      out_shape=jax.ShapeDtypeStruct((G, M, N), out_dtype),
      grid_spec=pltpu.PrefetchScalarGridSpec(
          num_scalar_prefetch=0,
          grid=(G, M // tm, N // tn, K // tk),
          in_specs=[
              pl.BlockSpec((tm, tk), lambda g, i, j, k: (i, k)),
              pl.BlockSpec((None, tk, tn), lambda g, i, j, k: (g, k, j)),
              pl.BlockSpec((None, 1, tn), lambda g, i, j, k: (g, 0, j)),
          ],
          out_specs=pl.BlockSpec((None, tm, tn), lambda g, i, j, k: (g, i, j)),
          scratch_shapes=[pltpu.VMEM((tm, tn), jnp.float32)],
      ),
      compiler_params=pltpu.CompilerParams(
          dimension_semantics=("parallel", "parallel", "parallel", "arbitrary"),
          vmem_limit_bytes=VMEM_LIMIT),
  )(x, w, b)


# ---------------------------------------------------------------------------
# Matmul with fused residual-add + LayerNorm epilogue (post-LN):
#   out = LN(x @ w + b + residual) * gamma + beta,  N == d_model (untiled).
# ---------------------------------------------------------------------------
def _matmul_ln_kernel(x_ref, w_ref, b_ref, res_ref, g_ref, beta_ref, o_ref,
                      acc_ref, *, eps):
  k = pl.program_id(1)

  @pl.when(k == 0)
  def _():
    acc_ref[...] = jnp.zeros_like(acc_ref)

  acc_ref[...] += jnp.dot(x_ref[...], w_ref[...],
                          preferred_element_type=jnp.float32)

  @pl.when(k == pl.num_programs(1) - 1)
  def _():
    y = (acc_ref[...] + b_ref[...].astype(jnp.float32)
         + res_ref[...].astype(jnp.float32))
    mean = jnp.mean(y, axis=-1, keepdims=True)
    yc = y - mean
    var = jnp.mean(yc * yc, axis=-1, keepdims=True)
    inv = jax.lax.rsqrt(var + eps)
    o_ref[...] = (yc * inv * g_ref[...].astype(jnp.float32)
                  + beta_ref[...].astype(jnp.float32)).astype(o_ref.dtype)


def linear_add_ln(x, w, b, residual, gamma, beta, *, eps=1e-5):
  M, K = x.shape
  Kw, N = w.shape
  assert K == Kw and residual.shape == (M, N)
  tm = _pick_tile(M, TM_PREF, 8)
  tk = _pick_tile(K, TK_PREF, 128)
  kernel = functools.partial(_matmul_ln_kernel, eps=eps)
  return pl.pallas_call(
      kernel,
      out_shape=jax.ShapeDtypeStruct((M, N), x.dtype),
      grid_spec=pltpu.PrefetchScalarGridSpec(
          num_scalar_prefetch=0,
          grid=(M // tm, K // tk),
          in_specs=[
              pl.BlockSpec((tm, tk), lambda i, k: (i, k)),
              pl.BlockSpec((tk, N), lambda i, k: (k, 0)),
              pl.BlockSpec((1, N), lambda i, k: (0, 0)),
              # residual/gamma/beta block indices are k-invariant -> fetched
              # once per row tile, not per K step.
              pl.BlockSpec((tm, N), lambda i, k: (i, 0)),
              pl.BlockSpec((1, N), lambda i, k: (0, 0)),
              pl.BlockSpec((1, N), lambda i, k: (0, 0)),
          ],
          out_specs=pl.BlockSpec((tm, N), lambda i, k: (i, 0)),
          scratch_shapes=[pltpu.VMEM((tm, N), jnp.float32)],
      ),
      compiler_params=pltpu.CompilerParams(
          dimension_semantics=("parallel", "arbitrary"),
          vmem_limit_bytes=VMEM_LIMIT),
  )(x, w, b.reshape(1, N), residual, gamma.reshape(1, N), beta.reshape(1, N))


# ---------------------------------------------------------------------------
# Flash attention: grid (B, q_tiles, kv_tiles), kv last ("arbitrary").
# q/k/v arrive as d_model-wide blocks sliced from the grouped projection
# tensors via the leading group index; heads are processed with static Dh
# lane slices inside the kernel.  Softmax scale is pre-folded into W_q.
# ---------------------------------------------------------------------------
def _flash_attn_kernel(q_ref, k_ref, v_ref, o_ref, m_sc, l_sc, acc_sc, *,
                       num_heads, head_dim):
  ki = pl.program_id(2)

  @pl.when(ki == 0)
  def _():
    m_sc[...] = jnp.full_like(m_sc, -jnp.inf)
    l_sc[...] = jnp.zeros_like(l_sc)
    acc_sc[...] = jnp.zeros_like(acc_sc)

  # TODO(synk): src_mask/tgt_mask (e.g. causal) would be applied here as an
  # additive -inf bias; the reference forward is exercised with mask=None.
  for h in range(num_heads):
    c0 = h * head_dim
    qh = q_ref[:, c0:c0 + head_dim]          # (tq, Dh)  bf16 (pre-scaled)
    kh = k_ref[:, c0:c0 + head_dim]          # (tkv, Dh)
    vh = v_ref[:, c0:c0 + head_dim]
    s = jax.lax.dot_general(
        qh, kh, dimension_numbers=(((1,), (1,)), ((), ())),
        preferred_element_type=jnp.float32)  # (tq, tkv)
    m_prev = m_sc[h]
    m_new = jnp.maximum(m_prev, jnp.max(s, axis=-1, keepdims=True))
    alpha = jnp.exp(m_prev - m_new)
    p = jnp.exp(s - m_new)
    l_sc[h] = alpha * l_sc[h] + jnp.sum(p, axis=-1, keepdims=True)
    acc_sc[h] = alpha * acc_sc[h] + jnp.dot(
        p.astype(vh.dtype), vh, preferred_element_type=jnp.float32)
    m_sc[h] = m_new

  @pl.when(ki == pl.num_programs(2) - 1)
  def _():
    for h in range(num_heads):
      c0 = h * head_dim
      inv = pl.reciprocal(l_sc[h], approx=True)
      o_ref[:, c0:c0 + head_dim] = (acc_sc[h] * inv).astype(o_ref.dtype)


def flash_attention(q_arr, k_arr, v_arr, *, q_idx, k_idx, v_idx,
                    B, Sq, Skv, H):
  """q_arr: [Gq, B, Sq, D]; k_arr/v_arr: [Gkv, B, Skv, D] -> [B*Sq, D]."""
  D = q_arr.shape[-1]
  assert D % H == 0
  Dh = D // H
  tq = _pick_tile(Sq, TS_PREF, 8)
  tkv = _pick_tile(Skv, TS_PREF, 8)
  kernel = functools.partial(_flash_attn_kernel, num_heads=H, head_dim=Dh)
  out = pl.pallas_call(
      kernel,
      out_shape=jax.ShapeDtypeStruct((B, Sq, D), q_arr.dtype),
      grid_spec=pltpu.PrefetchScalarGridSpec(
          num_scalar_prefetch=0,
          grid=(B, Sq // tq, Skv // tkv),
          in_specs=[
              pl.BlockSpec((None, None, tq, D),
                           lambda b, qi, ki, g=q_idx: (g, b, qi, 0)),
              pl.BlockSpec((None, None, tkv, D),
                           lambda b, qi, ki, g=k_idx: (g, b, ki, 0)),
              pl.BlockSpec((None, None, tkv, D),
                           lambda b, qi, ki, g=v_idx: (g, b, ki, 0)),
          ],
          out_specs=pl.BlockSpec((None, tq, D), lambda b, qi, ki: (b, qi, 0)),
          scratch_shapes=[
              pltpu.VMEM((H, tq, 1), jnp.float32),   # m
              pltpu.VMEM((H, tq, 1), jnp.float32),   # l
              pltpu.VMEM((H, tq, Dh), jnp.float32),  # acc
          ],
      ),
      compiler_params=pltpu.CompilerParams(
          dimension_semantics=("parallel", "parallel", "arbitrary"),
          vmem_limit_bytes=VMEM_LIMIT),
  )(q_arr, k_arr, v_arr)
  return out.reshape(B * Sq, D)


# ---------------------------------------------------------------------------
# Transformer blocks (dropout omitted: eval/inference semantics).
# ---------------------------------------------------------------------------
def embed(tokens, emb_table, pos_enc):
  # Embedding gather stays in XLA (jnp.take); sqrt(d_model) is folded into
  # the table at init.
  B, S = tokens.shape
  D = emb_table.shape[-1]
  x = jnp.take(emb_table, tokens, axis=0) + pos_enc[:S][None, :, :]
  return x.astype(ACT_DTYPE).reshape(B * S, D)


def self_attention_block(x, p, ln_g, ln_b, *, B, S, H):
  D = x.shape[-1]
  qkv = grouped_linear(x, p["w_qkv"], p["b_qkv"]).reshape(3, B, S, D)
  ctx = flash_attention(qkv, qkv, qkv, q_idx=0, k_idx=1, v_idx=2,
                        B=B, Sq=S, Skv=S, H=H)
  # out-projection with fused residual-add + LayerNorm epilogue.
  return linear_add_ln(ctx, p["w_o"], p["b_o"], x, ln_g, ln_b)


def cross_attention_block(x, enc, p, ln_g, ln_b, *, B, St, Ss, H):
  D = x.shape[-1]
  q = grouped_linear(x, p["w_q"], p["b_q"]).reshape(1, B, St, D)
  kv = grouped_linear(enc, p["w_kv"], p["b_kv"]).reshape(2, B, Ss, D)
  ctx = flash_attention(q, kv, kv, q_idx=0, k_idx=0, v_idx=1,
                        B=B, Sq=St, Skv=Ss, H=H)
  return linear_add_ln(ctx, p["w_o"], p["b_o"], x, ln_g, ln_b)


def ffn_block(x, p, ln_g, ln_b):
  h = grouped_linear(x, p["w1"], p["b1"], activation="relu")
  h = h.reshape(h.shape[1], h.shape[2])
  return linear_add_ln(h, p["w2"], p["b2"], x, ln_g, ln_b)


def encoder_layer(x, p, *, B, S, H):
  x = self_attention_block(x, p["self_attn"], p["ln1_g"], p["ln1_b"],
                           B=B, S=S, H=H)
  x = ffn_block(x, p["ffn"], p["ln2_g"], p["ln2_b"])
  return x


def decoder_layer(x, enc, p, *, B, St, Ss, H):
  x = self_attention_block(x, p["self_attn"], p["ln1_g"], p["ln1_b"],
                           B=B, S=St, H=H)
  x = cross_attention_block(x, enc, p["cross_attn"], p["ln2_g"], p["ln2_b"],
                            B=B, St=St, Ss=Ss, H=H)
  x = ffn_block(x, p["ffn"], p["ln3_g"], p["ln3_b"])
  return x


def transformer_forward(params, src, tgt, src_mask=None, tgt_mask=None, *,
                        d_model, num_heads):
  # TODO(synk): src_mask / tgt_mask attention masking not implemented; the
  # reference forward is exercised with the default mask=None.
  B, Ss = src.shape
  _, St = tgt.shape
  H = num_heads

  enc = embed(src, params["src_emb"], params["pos_enc"])
  for lp in params["enc_layers"]:
    enc = encoder_layer(enc, lp, B=B, S=Ss, H=H)

  dec = embed(tgt, params["tgt_emb"], params["pos_enc"])
  for lp in params["dec_layers"]:
    dec = decoder_layer(dec, enc, lp, B=B, St=St, Ss=Ss, H=H)

  # Vocab projection; logits emitted in bf16 (cast in the consumer if f32
  # is needed) to halve the writeback of the largest output.
  tgt_vocab = params["w_out"].shape[-1]
  logits = grouped_linear(dec, params["w_out"], params["b_out"])
  return logits.reshape(B, St, tgt_vocab)


# ---------------------------------------------------------------------------
# Parameter construction.
# ---------------------------------------------------------------------------
def sinusoidal_pos_encoding(max_len, d_model):
  pos = jnp.arange(max_len)[:, None].astype(jnp.float32)
  i = jnp.arange(0, d_model, 2).astype(jnp.float32)
  angle = pos / jnp.power(10000.0, i / d_model)
  pe = jnp.zeros((max_len, d_model), jnp.float32)
  pe = pe.at[:, 0::2].set(jnp.sin(angle))
  pe = pe.at[:, 1::2].set(jnp.cos(angle))
  return pe


def init_params(key, src_vocab, tgt_vocab, d_model, num_heads, d_ff,
                num_layers, max_len):
  head_dim = d_model // num_heads
  q_scale = 1.0 / math.sqrt(head_dim)   # folded into the Q projection
  keys = iter(jax.random.split(key, 1024))

  def gdense(g, fan_in, fan_out):
    w = (jax.random.normal(next(keys), (g, fan_in, fan_out), jnp.float32)
         * (1.0 / math.sqrt(fan_in)))
    b = jnp.zeros((g, 1, fan_out), jnp.float32)
    return w, b

  def pdense(fan_in, fan_out):
    w = (jax.random.normal(next(keys), (fan_in, fan_out), jnp.float32)
         * (1.0 / math.sqrt(fan_in)))
    b = jnp.zeros((fan_out,), jnp.float32)
    return w, b

  def self_attn_params():
    w_qkv, b_qkv = gdense(3, d_model, d_model)
    w_qkv = w_qkv.at[0].multiply(q_scale)
    b_qkv = b_qkv.at[0].multiply(q_scale)
    w_o, b_o = pdense(d_model, d_model)
    return dict(w_qkv=w_qkv.astype(ACT_DTYPE), b_qkv=b_qkv.astype(ACT_DTYPE),
                w_o=w_o.astype(ACT_DTYPE), b_o=b_o.astype(ACT_DTYPE))

  def cross_attn_params():
    w_q, b_q = gdense(1, d_model, d_model)
    w_q = w_q * q_scale
    b_q = b_q * q_scale
    w_kv, b_kv = gdense(2, d_model, d_model)
    w_o, b_o = pdense(d_model, d_model)
    return dict(w_q=w_q.astype(ACT_DTYPE), b_q=b_q.astype(ACT_DTYPE),
                w_kv=w_kv.astype(ACT_DTYPE), b_kv=b_kv.astype(ACT_DTYPE),
                w_o=w_o.astype(ACT_DTYPE), b_o=b_o.astype(ACT_DTYPE))

  def ffn_params():
    w1, b1 = gdense(1, d_model, d_ff)
    w2, b2 = pdense(d_ff, d_model)
    return dict(w1=w1.astype(ACT_DTYPE), b1=b1.astype(ACT_DTYPE),
                w2=w2.astype(ACT_DTYPE), b2=b2.astype(ACT_DTYPE))

  def ln_params():
    return jnp.ones((d_model,), ACT_DTYPE), jnp.zeros((d_model,), ACT_DTYPE)

  enc_layers = []
  for _ in range(num_layers):
    g1, b1 = ln_params()
    g2, b2 = ln_params()
    enc_layers.append(dict(self_attn=self_attn_params(), ffn=ffn_params(),
                           ln1_g=g1, ln1_b=b1, ln2_g=g2, ln2_b=b2))

  dec_layers = []
  for _ in range(num_layers):
    g1, b1 = ln_params()
    g2, b2 = ln_params()
    g3, b3 = ln_params()
    dec_layers.append(dict(self_attn=self_attn_params(),
                           cross_attn=cross_attn_params(), ffn=ffn_params(),
                           ln1_g=g1, ln1_b=b1, ln2_g=g2, ln2_b=b2,
                           ln3_g=g3, ln3_b=b3))

  # sqrt(d_model) embedding scale folded into the tables.
  emb_scale = 0.02 * math.sqrt(d_model)
  src_emb = jax.random.normal(next(keys), (src_vocab, d_model),
                              jnp.float32) * emb_scale
  tgt_emb = jax.random.normal(next(keys), (tgt_vocab, d_model),
                              jnp.float32) * emb_scale
  w_out, b_out = gdense(1, d_model, tgt_vocab)
  pos_enc = sinusoidal_pos_encoding(max_len, d_model)
  return dict(src_emb=src_emb, tgt_emb=tgt_emb, pos_enc=pos_enc,
              enc_layers=enc_layers, dec_layers=dec_layers,
              w_out=w_out.astype(ACT_DTYPE), b_out=b_out.astype(ACT_DTYPE))


if __name__ == "__main__":
  SRC_VOCAB = 64
  TGT_VOCAB = 64
  D_MODEL = 32
  NUM_HEADS = 4
  D_FF = 64
  NUM_LAYERS = 2
  MAX_LEN = 64
  BATCH = 2
  SRC_SEQ = 8
  TGT_SEQ = 8

  key = jax.random.PRNGKey(0)
  pkey, skey, tkey = jax.random.split(key, 3)
  params = init_params(pkey, SRC_VOCAB, TGT_VOCAB, D_MODEL, NUM_HEADS, D_FF,
                       NUM_LAYERS, MAX_LEN)
  src = jax.random.randint(skey, (BATCH, SRC_SEQ), 0, SRC_VOCAB, jnp.int32)
  tgt = jax.random.randint(tkey, (BATCH, TGT_SEQ), 0, TGT_VOCAB, jnp.int32)

  fwd = jax.jit(functools.partial(transformer_forward,
                                  d_model=D_MODEL, num_heads=NUM_HEADS))
  out = fwd(params, src, tgt)
  jax.block_until_ready(out)
  assert out.shape == (BATCH, TGT_SEQ, TGT_VOCAB), out.shape
  assert bool(jnp.isfinite(out.astype(jnp.float32)).all())
  print("KERNEL_OK")
</pallas_src>

<mosaic_0001>
module attributes {stable_mosaic.version = 11 : i64} {
  func.func @_matmul_kernel(%arg0: i32, %arg1: i32, %arg2: i32, %arg3: i32, %arg4: memref<16x32xbf16, #tpu.memory_space<vmem>>, %arg5: memref<1x32x32xbf16, #tpu.memory_space<vmem>>, %arg6: memref<1x1x32xbf16, #tpu.memory_space<vmem>>, %arg7: memref<1x16x32xbf16, #tpu.memory_space<vmem>>, %arg8: memref<16x32xf32, #tpu.memory_space<vmem>>) attributes {dimension_semantics = [#tpu.dimension_semantics<parallel>, #tpu.dimension_semantics<parallel>, #tpu.dimension_semantics<parallel>, #tpu.dimension_semantics<arbitrary>], iteration_bounds = array<i64: 3, 1, 1, 1>, scalar_prefetch = 0 : i64, scratch_operands = 1 : i64, tpu.core_type = #tpu.core_type<tc>, window_params = [{transform_indices = @transform_0, window_bounds = array<i64: 16, 32>}, {transform_indices = @transform_1, window_bounds = array<i64: 1, 32, 32>}, {transform_indices = @transform_2, window_bounds = array<i64: 1, 1, 32>}, {transform_indices = @transform_3, window_bounds = array<i64: 1, 16, 32>}]} {
    %c0_i32 = arith.constant 0 : i32
    %0 = arith.cmpi eq, %arg3, %c0_i32 : i32
    %1 = arith.extui %0 : i1 to i32
    %c0_i32_0 = arith.constant 0 : i32
    %2 = arith.cmpi ne, %1, %c0_i32_0 : i32
    scf.if %2 {
      %cst_11 = arith.constant 0.000000e+00 : f32
      %13 = vector.broadcast %cst_11 : f32 to vector<16x32xf32>
      %c0_12 = arith.constant 0 : index
      %c0_13 = arith.constant 0 : index
      %14 = vector.load %arg8[%c0_12, %c0_13] : memref<16x32xf32, #tpu.memory_space<vmem>>, vector<16x32xf32>
      tpu.vector_store %arg8[%c0_12, %c0_13], %13 {strides = array<i32>} : memref<16x32xf32, #tpu.memory_space<vmem>>, vector<16x32xf32>,
    } else {
    }
    %c0 = arith.constant 0 : index
    %c0_1 = arith.constant 0 : index
    %3 = vector.load %arg8[%c0, %c0_1] : memref<16x32xf32, #tpu.memory_space<vmem>>, vector<16x32xf32>
    %c0_2 = arith.constant 0 : index
    %c0_3 = arith.constant 0 : index
    %4 = vector.load %arg4[%c0_2, %c0_3] : memref<16x32xbf16, #tpu.memory_space<vmem>>, vector<16x32xbf16>
    %c0_4 = arith.constant 0 : index
    %c0_5 = arith.constant 0 : index
    %c0_6 = arith.constant 0 : index
    %5 = vector.load %arg5[%c0_4, %c0_5, %c0_6] : memref<1x32x32xbf16, #tpu.memory_space<vmem>>, vector<1x32x32xbf16>
    %6 = vector.shape_cast %5 : vector<1x32x32xbf16> to vector<32x32xbf16>
    %cst = arith.constant dense<0.000000e+00> : vector<16x32xf32>
    %7 = tpu.matmul %4, %6, %cst {dimension_numbers = #tpu.dot_dimension_numbers<[1], [0], [0], [1], [0, 0, 1, 1], [], []>} : vector<16x32xbf16>, vector<32x32xbf16>, vector<16x32xf32> -> vector<16x32xf32>
    %8 = arith.addf %3, %7 : vector<16x32xf32>
    %c0_7 = arith.constant 0 : index
    %c0_8 = arith.constant 0 : index
    %9 = vector.load %arg8[%c0_7, %c0_8] : memref<16x32xf32, #tpu.memory_space<vmem>>, vector<16x32xf32>
    tpu.vector_store %arg8[%c0_7, %c0_8], %8 {strides = array<i32>} : memref<16x32xf32, #tpu.memory_space<vmem>>, vector<16x32xf32>,
    %c0_i32_9 = arith.constant 0 : i32
    %10 = arith.cmpi eq, %arg3, %c0_i32_9 : i32
    %11 = arith.extui %10 : i1 to i32
    %c0_i32_10 = arith.constant 0 : i32
    %12 = arith.cmpi ne, %11, %c0_i32_10 : i32
    scf.if %12 {
      %c0_11 = arith.constant 0 : index
      %c0_12 = arith.constant 0 : index
      %13 = vector.load %arg8[%c0_11, %c0_12] : memref<16x32xf32, #tpu.memory_space<vmem>>, vector<16x32xf32>
      %c0_13 = arith.constant 0 : index
      %c0_14 = arith.constant 0 : index
      %c0_15 = arith.constant 0 : index
      %14 = vector.load %arg6[%c0_13, %c0_14, %c0_15] : memref<1x1x32xbf16, #tpu.memory_space<vmem>>, vector<1x1x32xbf16>
      %15 = vector.shape_cast %14 : vector<1x1x32xbf16> to vector<1x32xbf16>
      %16 = arith.extf %15 : vector<1x32xbf16> to vector<1x32xf32>
      %17 = vector.broadcast %16 : vector<1x32xf32> to vector<16x32xf32>
      %18 = arith.addf %13, %17 : vector<16x32xf32>
      %19 = arith.truncf %18 : vector<16x32xf32> to vector<16x32xbf16>
      %c0_16 = arith.constant 0 : index
      %c0_17 = arith.constant 0 : index
      %c0_18 = arith.constant 0 : index
      %20 = vector.load %arg7[%c0_16, %c0_17, %c0_18] : memref<1x16x32xbf16, #tpu.memory_space<vmem>>, vector<1x16x32xbf16>
      %21 = vector.shape_cast %20 : vector<1x16x32xbf16> to vector<16x32xbf16>
      %22 = vector.shape_cast %19 : vector<16x32xbf16> to vector<1x16x32xbf16>
      tpu.vector_store %arg7[%c0_16, %c0_17, %c0_18], %22 {strides = array<i32>} : memref<1x16x32xbf16, #tpu.memory_space<vmem>>, vector<1x16x32xbf16>,
    } else {
    }
    return
  }
  func.func @transform_0(%arg0: i32, %arg1: i32, %arg2: i32, %arg3: i32) -> (i32, i32) {
    %c0_i32 = arith.constant 0 : i32
    return %arg1, %arg3 : i32, i32
  }
  func.func @transform_1(%arg0: i32, %arg1: i32, %arg2: i32, %arg3: i32) -> (i32, i32, i32) {
    %c0_i32 = arith.constant 0 : i32
    return %arg0, %arg3, %arg2 : i32, i32, i32
  }
  func.func @transform_2(%arg0: i32, %arg1: i32, %arg2: i32, %arg3: i32) -> (i32, i32, i32) {
    %c0_i32 = arith.constant 0 : i32
    %c0_i32_0 = arith.constant 0 : i32
    return %arg0, %c0_i32, %arg2 : i32, i32, i32
  }
  func.func @transform_3(%arg0: i32, %arg1: i32, %arg2: i32, %arg3: i32) -> (i32, i32, i32) {
    %c0_i32 = arith.constant 0 : i32
    return %arg0, %arg1, %arg2 : i32, i32, i32
  }
}

module attributes {stable_mosaic.version = 11 : i64} {
  func.func @_matmul_ln_kernel(%arg0: i32, %arg1: i32, %arg2: memref<16x32xbf16, #tpu.memory_space<vmem>>, %arg3: memref<32x32xbf16, #tpu.memory_space<vmem>>, %arg4: memref<1x32xbf16, #tpu.memory_space<vmem>>, %arg5: memref<16x32xbf16, #tpu.memory_space<vmem>>, %arg6: memref<1x32xbf16, #tpu.memory_space<vmem>>, %arg7: memref<1x32xbf16, #tpu.memory_space<vmem>>, %arg8: memref<16x32xbf16, #tpu.memory_space<vmem>>, %arg9: memref<16x32xf32, #tpu.memory_space<vmem>>) attributes {dimension_semantics = [#tpu.dimension_semantics<parallel>, #tpu.dimension_semantics<arbitrary>], iteration_bounds = array<i64: 1, 1>, scalar_prefetch = 0 : i64, scratch_operands = 1 : i64, tpu.core_type = #tpu.core_type<tc>, window_params = [{transform_indices = @transform_0, window_bounds = array<i64: 16, 32>}, {transform_indices = @transform_1, window_bounds = array<i64: 32, 32>}, {pipeline_mode = #tpu.pipeline_mode<synchronous>, transform_indices = @transform_2, window_bounds = array<i64: 1, 32>}, {transform_indices = @transform_3, window_bounds = array<i64: 16, 32>}, {pipeline_mode = #tpu.pipeline_mode<synchronous>, transform_indices = @transform_4, window_bounds = array<i64: 1, 32>}, {pipeline_mode = #tpu.pipeline_mode<synchronous>, transform_indices = @transform_5, window_bounds = array<i64: 1, 32>}, {transform_indices = @transform_6, window_bounds = array<i64: 16, 32>}]} {
    %c0_i32 = arith.constant 0 : i32
    %0 = arith.cmpi eq, %arg1, %c0_i32 : i32
    %1 = arith.extui %0 : i1 to i32
    %c0_i32_0 = arith.constant 0 : i32
    %2 = arith.cmpi ne, %1, %c0_i32_0 : i32
    scf.if %2 {
      %cst_10 = arith.constant 0.000000e+00 : f32
      %12 = vector.broadcast %cst_10 : f32 to vector<16x32xf32>
      %c0_11 = arith.constant 0 : index
      %c0_12 = arith.constant 0 : index
      %13 = vector.load %arg9[%c0_11, %c0_12] : memref<16x32xf32, #tpu.memory_space<vmem>>, vector<16x32xf32>
      tpu.vector_store %arg9[%c0_11, %c0_12], %12 {strides = array<i32>} : memref<16x32xf32, #tpu.memory_space<vmem>>, vector<16x32xf32>,
    } else {
    }
    %c0 = arith.constant 0 : index
    %c0_1 = arith.constant 0 : index
    %3 = vector.load %arg9[%c0, %c0_1] : memref<16x32xf32, #tpu.memory_space<vmem>>, vector<16x32xf32>
    %c0_2 = arith.constant 0 : index
    %c0_3 = arith.constant 0 : index
    %4 = vector.load %arg2[%c0_2, %c0_3] : memref<16x32xbf16, #tpu.memory_space<vmem>>, vector<16x32xbf16>
    %c0_4 = arith.constant 0 : index
    %c0_5 = arith.constant 0 : index
    %5 = vector.load %arg3[%c0_4, %c0_5] : memref<32x32xbf16, #tpu.memory_space<vmem>>, vector<32x32xbf16>
    %cst = arith.constant dense<0.000000e+00> : vector<16x32xf32>
    %6 = tpu.matmul %4, %5, %cst {dimension_numbers = #tpu.dot_dimension_numbers<[1], [0], [0], [1], [0, 0, 1, 1], [], []>} : vector<16x32xbf16>, vector<32x32xbf16>, vector<16x32xf32> -> vector<16x32xf32>
    %7 = arith.addf %3, %6 : vector<16x32xf32>
    %c0_6 = arith.constant 0 : index
    %c0_7 = arith.constant 0 : index
    %8 = vector.load %arg9[%c0_6, %c0_7] : memref<16x32xf32, #tpu.memory_space<vmem>>, vector<16x32xf32>
    tpu.vector_store %arg9[%c0_6, %c0_7], %7 {strides = array<i32>} : memref<16x32xf32, #tpu.memory_space<vmem>>, vector<16x32xf32>,
    %c0_i32_8 = arith.constant 0 : i32
    %9 = arith.cmpi eq, %arg1, %c0_i32_8 : i32
    %10 = arith.extui %9 : i1 to i32
    %c0_i32_9 = arith.constant 0 : i32
    %11 = arith.cmpi ne, %10, %c0_i32_9 : i32
    scf.if %11 {
      %c0_10 = arith.constant 0 : index
      %c0_11 = arith.constant 0 : index
      %12 = vector.load %arg9[%c0_10, %c0_11] : memref<16x32xf32, #tpu.memory_space<vmem>>, vector<16x32xf32>
      %c0_12 = arith.constant 0 : index
      %c0_13 = arith.constant 0 : index
      %13 = vector.load %arg4[%c0_12, %c0_13] : memref<1x32xbf16, #tpu.memory_space<vmem>>, vector<1x32xbf16>
      %14 = arith.extf %13 : vector<1x32xbf16> to vector<1x32xf32>
      %15 = vector.broadcast %14 : vector<1x32xf32> to vector<16x32xf32>
      %16 = arith.addf %12, %15 : vector<16x32xf32>
      %c0_14 = arith.constant 0 : index
      %c0_15 = arith.constant 0 : index
      %17 = vector.load %arg5[%c0_14, %c0_15] : memref<16x32xbf16, #tpu.memory_space<vmem>>, vector<16x32xbf16>
      %18 = arith.extf %17 : vector<16x32xbf16> to vector<16x32xf32>
      %19 = arith.addf %16, %18 : vector<16x32xf32>
      %cst_16 = arith.constant dense<0.000000e+00> : vector<16xf32>
      %20 = vector.multi_reduction <add>, %19, %cst_16 [1] : vector<16x32xf32> to vector<16xf32>
      %21 = vector.shape_cast %20 : vector<16xf32> to vector<16x1xf32>
      %cst_17 = arith.constant 3.200000e+01 : f32
      %22 = vector.broadcast %cst_17 : f32 to vector<16x1xf32>
      %23 = arith.divf %21, %22 : vector<16x1xf32>
      %24 = vector.broadcast %23 : vector<16x1xf32> to vector<16x32xf32>
      %25 = arith.subf %19, %24 : vector<16x32xf32>
      %26 = arith.mulf %25, %25 : vector<16x32xf32>
      %cst_18 = arith.constant dense<0.000000e+00> : vector<16xf32>
      %27 = vector.multi_reduction <add>, %26, %cst_18 [1] : vector<16x32xf32> to vector<16xf32>
      %28 = vector.shape_cast %27 : vector<16xf32> to vector<16x1xf32>
      %cst_19 = arith.constant 3.200000e+01 : f32
      %29 = vector.broadcast %cst_19 : f32 to vector<16x1xf32>
      %30 = arith.divf %28, %29 : vector<16x1xf32>
      %cst_20 = arith.constant 9.99999974E-6 : f32
      %31 = vector.broadcast %cst_20 : f32 to vector<16x1xf32>
      %32 = arith.addf %30, %31 : vector<16x1xf32>
      %33 = math.rsqrt %32 : vector<16x1xf32>
      %34 = vector.broadcast %33 : vector<16x1xf32> to vector<16x32xf32>
      %35 = arith.mulf %25, %34 : vector<16x32xf32>
      %c0_21 = arith.constant 0 : index
      %c0_22 = arith.constant 0 : index
      %36 = vector.load %arg6[%c0_21, %c0_22] : memref<1x32xbf16, #tpu.memory_space<vmem>>, vector<1x32xbf16>
      %37 = arith.extf %36 : vector<1x32xbf16> to vector<1x32xf32>
      %38 = vector.broadcast %37 : vector<1x32xf32> to vector<16x32xf32>
      %39 = arith.mulf %35, %38 : vector<16x32xf32>
      %c0_23 = arith.constant 0 : index
      %c0_24 = arith.constant 0 : index
      %40 = vector.load %arg7[%c0_23, %c0_24] : memref<1x32xbf16, #tpu.memory_space<vmem>>, vector<1x32xbf16>
      %41 = arith.extf %40 : vector<1x32xbf16> to vector<1x32xf32>
      %42 = vector.broadcast %41 : vector<1x32xf32> to vector<16x32xf32>
      %43 = arith.addf %39, %42 : vector<16x32xf32>
      %44 = arith.truncf %43 : vector<16x32xf32> to vector<16x32xbf16>
      %c0_25 = arith.constant 0 : index
      %c0_26 = arith.constant 0 : index
      %45 = vector.load %arg8[%c0_25, %c0_26] : memref<16x32xbf16, #tpu.memory_space<vmem>>, vector<16x32xbf16>
      tpu.vector_store %arg8[%c0_25, %c0_26], %44 {strides = array<i32>} : memref<16x32xbf16, #tpu.memory_space<vmem>>, vector<16x32xbf16>,
    } else {
    }
    return
  }
  func.func @transform_0(%arg0: i32, %arg1: i32) -> (i32, i32) {
    %c0_i32 = arith.constant 0 : i32
    return %arg0, %arg1 : i32, i32
  }
  func.func @transform_1(%arg0: i32, %arg1: i32) -> (i32, i32) {
    %c0_i32 = arith.constant 0 : i32
    %c0_i32_0 = arith.constant 0 : i32
    return %arg1, %c0_i32 : i32, i32
  }
  func.func @transform_2(%arg0: i32, %arg1: i32) -> (i32, i32) {
    %c0_i32 = arith.constant 0 : i32
    %c0_i32_0 = arith.constant 0 : i32
    %c0_i32_1 = arith.constant 0 : i32
    return %c0_i32, %c0_i32_0 : i32, i32
  }
  func.func @transform_3(%arg0: i32, %arg1: i32) -> (i32, i32) {
    %c0_i32 = arith.constant 0 : i32
    %c0_i32_0 = arith.constant 0 : i32
    return %arg0, %c0_i32 : i32, i32
  }
  func.func @transform_4(%arg0: i32, %arg1: i32) -> (i32, i32) {
    %c0_i32 = arith.constant 0 : i32
    %c0_i32_0 = arith.constant 0 : i32
    %c0_i32_1 = arith.constant 0 : i32
    return %c0_i32, %c0_i32_0 : i32, i32
  }
  func.func @transform_5(%arg0: i32, %arg1: i32) -> (i32, i32) {
    %c0_i32 = arith.constant 0 : i32
    %c0_i32_0 = arith.constant 0 : i32
    %c0_i32_1 = arith.constant 0 : i32
    return %c0_i32, %c0_i32_0 : i32, i32
  }
  func.func @transform_6(%arg0: i32, %arg1: i32) -> (i32, i32) {
    %c0_i32 = arith.constant 0 : i32
    %c0_i32_0 = arith.constant 0 : i32
    return %arg0, %c0_i32 : i32, i32
  }
}

module attributes {stable_mosaic.version = 11 : i64} {
  func.func @_matmul_kernel(%arg0: i32, %arg1: i32, %arg2: i32, %arg3: i32, %arg4: memref<16x32xbf16, #tpu.memory_space<vmem>>, %arg5: memref<1x32x64xbf16, #tpu.memory_space<vmem>>, %arg6: memref<1x1x64xbf16, #tpu.memory_space<vmem>>, %arg7: memref<1x16x64xbf16, #tpu.memory_space<vmem>>, %arg8: memref<16x64xf32, #tpu.memory_space<vmem>>) attributes {dimension_semantics = [#tpu.dimension_semantics<parallel>, #tpu.dimension_semantics<parallel>, #tpu.dimension_semantics<parallel>, #tpu.dimension_semantics<arbitrary>], iteration_bounds = array<i64: 1, 1, 1, 1>, scalar_prefetch = 0 : i64, scratch_operands = 1 : i64, tpu.core_type = #tpu.core_type<tc>, window_params = [{transform_indices = @transform_0, window_bounds = array<i64: 16, 32>}, {transform_indices = @transform_1, window_bounds = array<i64: 1, 32, 64>}, {transform_indices = @transform_2, window_bounds = array<i64: 1, 1, 64>}, {transform_indices = @transform_3, window_bounds = array<i64: 1, 16, 64>}]} {
    %c0_i32 = arith.constant 0 : i32
    %0 = arith.cmpi eq, %arg3, %c0_i32 : i32
    %1 = arith.extui %0 : i1 to i32
    %c0_i32_0 = arith.constant 0 : i32
    %2 = arith.cmpi ne, %1, %c0_i32_0 : i32
    scf.if %2 {
      %cst_11 = arith.constant 0.000000e+00 : f32
      %13 = vector.broadcast %cst_11 : f32 to vector<16x64xf32>
      %c0_12 = arith.constant 0 : index
      %c0_13 = arith.constant 0 : index
      %14 = vector.load %arg8[%c0_12, %c0_13] : memref<16x64xf32, #tpu.memory_space<vmem>>, vector<16x64xf32>
      tpu.vector_store %arg8[%c0_12, %c0_13], %13 {strides = array<i32>} : memref<16x64xf32, #tpu.memory_space<vmem>>, vector<16x64xf32>,
    } else {
    }
    %c0 = arith.constant 0 : index
    %c0_1 = arith.constant 0 : index
    %3 = vector.load %arg8[%c0, %c0_1] : memref<16x64xf32, #tpu.memory_space<vmem>>, vector<16x64xf32>
    %c0_2 = arith.constant 0 : index
    %c0_3 = arith.constant 0 : index
    %4 = vector.load %arg4[%c0_2, %c0_3] : memref<16x32xbf16, #tpu.memory_space<vmem>>, vector<16x32xbf16>
    %c0_4 = arith.constant 0 : index
    %c0_5 = arith.constant 0 : index
    %c0_6 = arith.constant 0 : index
    %5 = vector.load %arg5[%c0_4, %c0_5, %c0_6] : memref<1x32x64xbf16, #tpu.memory_space<vmem>>, vector<1x32x64xbf16>
    %6 = vector.shape_cast %5 : vector<1x32x64xbf16> to vector<32x64xbf16>
    %cst = arith.constant dense<0.000000e+00> : vector<16x64xf32>
    %7 = tpu.matmul %4, %6, %cst {dimension_numbers = #tpu.dot_dimension_numbers<[1], [0], [0], [1], [0, 0, 1, 1], [], []>} : vector<16x32xbf16>, vector<32x64xbf16>, vector<16x64xf32> -> vector<16x64xf32>
    %8 = arith.addf %3, %7 : vector<16x64xf32>
    %c0_7 = arith.constant 0 : index
    %c0_8 = arith.constant 0 : index
    %9 = vector.load %arg8[%c0_7, %c0_8] : memref<16x64xf32, #tpu.memory_space<vmem>>, vector<16x64xf32>
    tpu.vector_store %arg8[%c0_7, %c0_8], %8 {strides = array<i32>} : memref<16x64xf32, #tpu.memory_space<vmem>>, vector<16x64xf32>,
    %c0_i32_9 = arith.constant 0 : i32
    %10 = arith.cmpi eq, %arg3, %c0_i32_9 : i32
    %11 = arith.extui %10 : i1 to i32
    %c0_i32_10 = arith.constant 0 : i32
    %12 = arith.cmpi ne, %11, %c0_i32_10 : i32
    scf.if %12 {
      %c0_11 = arith.constant 0 : index
      %c0_12 = arith.constant 0 : index
      %13 = vector.load %arg8[%c0_11, %c0_12] : memref<16x64xf32, #tpu.memory_space<vmem>>, vector<16x64xf32>
      %c0_13 = arith.constant 0 : index
      %c0_14 = arith.constant 0 : index
      %c0_15 = arith.constant 0 : index
      %14 = vector.load %arg6[%c0_13, %c0_14, %c0_15] : memref<1x1x64xbf16, #tpu.memory_space<vmem>>, vector<1x1x64xbf16>
      %15 = vector.shape_cast %14 : vector<1x1x64xbf16> to vector<1x64xbf16>
      %16 = arith.extf %15 : vector<1x64xbf16> to vector<1x64xf32>
      %17 = vector.broadcast %16 : vector<1x64xf32> to vector<16x64xf32>
      %18 = arith.addf %13, %17 : vector<16x64xf32>
      %cst_16 = arith.constant 0.000000e+00 : f32
      %19 = vector.broadcast %cst_16 : f32 to vector<16x64xf32>
      %20 = arith.maximumf %18, %19 : vector<16x64xf32>
      %21 = arith.truncf %20 : vector<16x64xf32> to vector<16x64xbf16>
      %c0_17 = arith.constant 0 : index
      %c0_18 = arith.constant 0 : index
      %c0_19 = arith.constant 0 : index
      %22 = vector.load %arg7[%c0_17, %c0_18, %c0_19] : memref<1x16x64xbf16, #tpu.memory_space<vmem>>, vector<1x16x64xbf16>
      %23 = vector.shape_cast %22 : vector<1x16x64xbf16> to vector<16x64xbf16>
      %24 = vector.shape_cast %21 : vector<16x64xbf16> to vector<1x16x64xbf16>
      tpu.vector_store %arg7[%c0_17, %c0_18, %c0_19], %24 {strides = array<i32>} : memref<1x16x64xbf16, #tpu.memory_space<vmem>>, vector<1x16x64xbf16>,
    } else {
    }
    return
  }
  func.func @transform_0(%arg0: i32, %arg1: i32, %arg2: i32, %arg3: i32) -> (i32, i32) {
    %c0_i32 = arith.constant 0 : i32
    return %arg1, %arg3 : i32, i32
  }
  func.func @transform_1(%arg0: i32, %arg1: i32, %arg2: i32, %arg3: i32) -> (i32, i32, i32) {
    %c0_i32 = arith.constant 0 : i32
    return %arg0, %arg3, %arg2 : i32, i32, i32
  }
  func.func @transform_2(%arg0: i32, %arg1: i32, %arg2: i32, %arg3: i32) -> (i32, i32, i32) {
    %c0_i32 = arith.constant 0 : i32
    %c0_i32_0 = arith.constant 0 : i32
    return %arg0, %c0_i32, %arg2 : i32, i32, i32
  }
  func.func @transform_3(%arg0: i32, %arg1: i32, %arg2: i32, %arg3: i32) -> (i32, i32, i32) {
    %c0_i32 = arith.constant 0 : i32
    return %arg0, %arg1, %arg2 : i32, i32, i32
  }
}

module attributes {stable_mosaic.version = 11 : i64} {
  func.func @_flash_attn_kernel(%arg0: i32, %arg1: i32, %arg2: i32, %arg3: memref<1x1x8x32xbf16, #tpu.memory_space<vmem>>, %arg4: memref<1x1x8x32xbf16, #tpu.memory_space<vmem>>, %arg5: memref<1x1x8x32xbf16, #tpu.memory_space<vmem>>, %arg6: memref<1x8x32xbf16, #tpu.memory_space<vmem>>, %arg7: memref<4x8x1xf32, #tpu.memory_space<vmem>>, %arg8: memref<4x8x1xf32, #tpu.memory_space<vmem>>, %arg9: memref<4x8x8xf32, #tpu.memory_space<vmem>>) attributes {dimension_semantics = [#tpu.dimension_semantics<parallel>, #tpu.dimension_semantics<parallel>, #tpu.dimension_semantics<arbitrary>], iteration_bounds = array<i64: 2, 1, 1>, scalar_prefetch = 0 : i64, scratch_operands = 3 : i64, tpu.core_type = #tpu.core_type<tc>, window_params = [{transform_indices = @transform_0, window_bounds = array<i64: 1, 1, 8, 32>}, {transform_indices = @transform_1, window_bounds = array<i64: 1, 1, 8, 32>}, {transform_indices = @transform_2, window_bounds = array<i64: 1, 1, 8, 32>}, {transform_indices = @transform_3, window_bounds = array<i64: 1, 8, 32>}]} {
    %c0_i32 = arith.constant 0 : i32
    %0 = arith.cmpi eq, %arg2, %c0_i32 : i32
    %1 = arith.extui %0 : i1 to i32
    %c0_i32_0 = arith.constant 0 : i32
    %2 = arith.cmpi ne, %1, %c0_i32_0 : i32
    scf.if %2 {
      %cst_131 = arith.constant 0xFF800000 : f32
      %162 = vector.broadcast %cst_131 : f32 to vector<4x8x1xf32>
      %c0_132 = arith.constant 0 : index
      %c0_133 = arith.constant 0 : index
      %c0_134 = arith.constant 0 : index
      %163 = vector.load %arg7[%c0_132, %c0_133, %c0_134] : memref<4x8x1xf32, #tpu.memory_space<vmem>>, vector<4x8x1xf32>
      tpu.vector_store %arg7[%c0_132, %c0_133, %c0_134], %162 {strides = array<i32>} : memref<4x8x1xf32, #tpu.memory_space<vmem>>, vector<4x8x1xf32>,
      %cst_135 = arith.constant 0.000000e+00 : f32
      %164 = vector.broadcast %cst_135 : f32 to vector<4x8x1xf32>
      %c0_136 = arith.constant 0 : index
      %c0_137 = arith.constant 0 : index
      %c0_138 = arith.constant 0 : index
      %165 = vector.load %arg8[%c0_136, %c0_137, %c0_138] : memref<4x8x1xf32, #tpu.memory_space<vmem>>, vector<4x8x1xf32>
      tpu.vector_store %arg8[%c0_136, %c0_137, %c0_138], %164 {strides = array<i32>} : memref<4x8x1xf32, #tpu.memory_space<vmem>>, vector<4x8x1xf32>,
      %cst_139 = arith.constant 0.000000e+00 : f32
      %166 = vector.broadcast %cst_139 : f32 to vector<4x8x8xf32>
      %c0_140 = arith.constant 0 : index
      %c0_141 = arith.constant 0 : index
      %c0_142 = arith.constant 0 : index
      %167 = vector.load %arg9[%c0_140, %c0_141, %c0_142] : memref<4x8x8xf32, #tpu.memory_space<vmem>>, vector<4x8x8xf32>
      tpu.vector_store %arg9[%c0_140, %c0_141, %c0_142], %166 {strides = array<i32>} : memref<4x8x8xf32, #tpu.memory_space<vmem>>, vector<4x8x8xf32>,
    } else {
    }
    %c0 = arith.constant 0 : index
    %c0_1 = arith.constant 0 : index
    %c0_2 = arith.constant 0 : index
    %c0_3 = arith.constant 0 : index
    %3 = vector.load %arg3[%c0, %c0_1, %c0_2, %c0_3] : memref<1x1x8x32xbf16, #tpu.memory_space<vmem>>, vector<1x1x8x8xbf16>
    %4 = vector.shape_cast %3 : vector<1x1x8x8xbf16> to vector<8x8xbf16>
    %c0_4 = arith.constant 0 : index
    %c0_5 = arith.constant 0 : index
    %c0_6 = arith.constant 0 : index
    %c0_7 = arith.constant 0 : index
    %5 = vector.load %arg4[%c0_4, %c0_5, %c0_6, %c0_7] : memref<1x1x8x32xbf16, #tpu.memory_space<vmem>>, vector<1x1x8x8xbf16>
    %6 = vector.shape_cast %5 : vector<1x1x8x8xbf16> to vector<8x8xbf16>
    %c0_8 = arith.constant 0 : index
    %c0_9 = arith.constant 0 : index
    %c0_10 = arith.constant 0 : index
    %c0_11 = arith.constant 0 : index
    %7 = vector.load %arg5[%c0_8, %c0_9, %c0_10, %c0_11] : memref<1x1x8x32xbf16, #tpu.memory_space<vmem>>, vector<1x1x8x8xbf16>
    %8 = vector.shape_cast %7 : vector<1x1x8x8xbf16> to vector<8x8xbf16>
    %cst = arith.constant dense<0.000000e+00> : vector<8x8xf32>
    %9 = tpu.matmul %4, %6, %cst {dimension_numbers = #tpu.dot_dimension_numbers<[1], [1], [0], [0], [0, 0, 1, 0], [], []>} : vector<8x8xbf16>, vector<8x8xbf16>, vector<8x8xf32> -> vector<8x8xf32>
    %c0_12 = arith.constant 0 : index
    %c0_13 = arith.constant 0 : index
    %c0_14 = arith.constant 0 : index
    %10 = vector.load %arg7[%c0_12, %c0_13, %c0_14] : memref<4x8x1xf32, #tpu.memory_space<vmem>>, vector<1x8x1xf32>
    %11 = vector.shape_cast %10 : vector<1x8x1xf32> to vector<8x1xf32>
    %cst_15 = arith.constant dense<0xFF800000> : vector<8xf32>
    %12 = vector.multi_reduction <maximumf>, %9, %cst_15 [1] : vector<8x8xf32> to vector<8xf32>
    %13 = vector.shape_cast %12 : vector<8xf32> to vector<8x1xf32>
    %14 = arith.maximumf %11, %13 : vector<8x1xf32>
    %15 = arith.subf %11, %14 : vector<8x1xf32>
    %16 = math.exp %15 : vector<8x1xf32>
    %17 = vector.broadcast %14 : vector<8x1xf32> to vector<8x8xf32>
    %18 = arith.subf %9, %17 : vector<8x8xf32>
    %19 = math.exp %18 : vector<8x8xf32>
    %c0_16 = arith.constant 0 : index
    %c0_17 = arith.constant 0 : index
    %c0_18 = arith.constant 0 : index
    %20 = vector.load %arg8[%c0_16, %c0_17, %c0_18] : memref<4x8x1xf32, #tpu.memory_space<vmem>>, vector<1x8x1xf32>
    %21 = vector.shape_cast %20 : vector<1x8x1xf32> to vector<8x1xf32>
    %22 = arith.mulf %16, %21 : vector<8x1xf32>
    %cst_19 = arith.constant dense<0.000000e+00> : vector<8xf32>
    %23 = vector.multi_reduction <add>, %19, %cst_19 [1] : vector<8x8xf32> to vector<8xf32>
    %24 = vector.shape_cast %23 : vector<8xf32> to vector<8x1xf32>
    %25 = arith.addf %22, %24 : vector<8x1xf32>
    %c0_20 = arith.constant 0 : index
    %c0_21 = arith.constant 0 : index
    %c0_22 = arith.constant 0 : index
    %26 = vector.load %arg8[%c0_20, %c0_21, %c0_22] : memref<4x8x1xf32, #tpu.memory_space<vmem>>, vector<1x8x1xf32>
    %27 = vector.shape_cast %26 : vector<1x8x1xf32> to vector<8x1xf32>
    %28 = vector.shape_cast %25 : vector<8x1xf32> to vector<1x8x1xf32>
    tpu.vector_store %arg8[%c0_20, %c0_21, %c0_22], %28 {strides = array<i32>} : memref<4x8x1xf32, #tpu.memory_space<vmem>>, vector<1x8x1xf32>,
    %c0_23 = arith.constant 0 : index
    %c0_24 = arith.constant 0 : index
    %c0_25 = arith.constant 0 : index
    %29 = vector.load %arg9[%c0_23, %c0_24, %c0_25] : memref<4x8x8xf32, #tpu.memory_space<vmem>>, vector<1x8x8xf32>
    %30 = vector.shape_cast %29 : vector<1x8x8xf32> to vector<8x8xf32>
    %31 = vector.broadcast %16 : vector<8x1xf32> to vector<8x8xf32>
    %32 = arith.mulf %31, %30 : vector<8x8xf32>
    %33 = arith.truncf %19 : vector<8x8xf32> to vector<8x8xbf16>
    %cst_26 = arith.constant dense<0.000000e+00> : vector<8x8xf32>
    %34 = tpu.matmul %33, %8, %cst_26 {dimension_numbers = #tpu.dot_dimension_numbers<[1], [0], [0], [1], [0, 0, 1, 1], [], []>} : vector<8x8xbf16>, vector<8x8xbf16>, vector<8x8xf32> -> vector<8x8xf32>
    %35 = arith.addf %32, %34 : vector<8x8xf32>
    %c0_27 = arith.constant 0 : index
    %c0_28 = arith.constant 0 : index
    %c0_29 = arith.constant 0 : index
    %36 = vector.load %arg9[%c0_27, %c0_28, %c0_29] : memref<4x8x8xf32, #tpu.memory_space<vmem>>, vector<1x8x8xf32>
    %37 = vector.shape_cast %36 : vector<1x8x8xf32> to vector<8x8xf32>
    %38 = vector.shape_cast %35 : vector<8x8xf32> to vector<1x8x8xf32>
    tpu.vector_store %arg9[%c0_27, %c0_28, %c0_29], %38 {strides = array<i32>} : memref<4x8x8xf32, #tpu.memory_space<vmem>>, vector<1x8x8xf32>,
    %c0_30 = arith.constant 0 : index
    %c0_31 = arith.constant 0 : index
    %c0_32 = arith.constant 0 : index
    %39 = vector.load %arg7[%c0_30, %c0_31, %c0_32] : memref<4x8x1xf32, #tpu.memory_space<vmem>>, vector<1x8x1xf32>
    %40 = vector.shape_cast %39 : vector<1x8x1xf32> to vector<8x1xf32>
    %41 = vector.shape_cast %14 : vector<8x1xf32> to vector<1x8x1xf32>
    tpu.vector_store %arg7[%c0_30, %c0_31, %c0_32], %41 {strides = array<i32>} : memref<4x8x1xf32, #tpu.memory_space<vmem>>, vector<1x8x1xf32>,
    %c0_33 = arith.constant 0 : index
    %c0_34 = arith.constant 0 : index
    %c0_35 = arith.constant 0 : index
    %c8 = arith.constant 8 : index
    %42 = vector.load %arg3[%c0_33, %c0_34, %c0_35, %c8] : memref<1x1x8x32xbf16, #tpu.memory_space<vmem>>, vector<1x1x8x8xbf16>
    %43 = vector.shape_cast %42 : vector<1x1x8x8xbf16> to vector<8x8xbf16>
    %c0_36 = arith.constant 0 : index
    %c0_37 = arith.constant 0 : index
    %c0_38 = arith.constant 0 : index
    %c8_39 = arith.constant 8 : index
    %44 = vector.load %arg4[%c0_36, %c0_37, %c0_38, %c8_39] : memref<1x1x8x32xbf16, #tpu.memory_space<vmem>>, vector<1x1x8x8xbf16>
    %45 = vector.shape_cast %44 : vector<1x1x8x8xbf16> to vector<8x8xbf16>
    %c0_40 = arith.constant 0 : index
    %c0_41 = arith.constant 0 : index
    %c0_42 = arith.constant 0 : index
    %c8_43 = arith.constant 8 : index
    %46 = vector.load %arg5[%c0_40, %c0_41, %c0_42, %c8_43] : memref<1x1x8x32xbf16, #tpu.memory_space<vmem>>, vector<1x1x8x8xbf16>
    %47 = vector.shape_cast %46 : vector<1x1x8x8xbf16> to vector<8x8xbf16>
    %cst_44 = arith.constant dense<0.000000e+00> : vector<8x8xf32>
    %48 = tpu.matmul %43, %45, %cst_44 {dimension_numbers = #tpu.dot_dimension_numbers<[1], [1], [0], [0], [0, 0, 1, 0], [], []>} : vector<8x8xbf16>, vector<8x8xbf16>, vector<8x8xf32> -> vector<8x8xf32>
    %c1 = arith.constant 1 : index
    %c0_45 = arith.constant 0 : index
    %c0_46 = arith.constant 0 : index
    %49 = vector.load %arg7[%c1, %c0_45, %c0_46] : memref<4x8x1xf32, #tpu.memory_space<vmem>>, vector<1x8x1xf32>
    %50 = vector.shape_cast %49 : vector<1x8x1xf32> to vector<8x1xf32>
    %cst_47 = arith.constant dense<0xFF800000> : vector<8xf32>
    %51 = vector.multi_reduction <maximumf>, %48, %cst_47 [1] : vector<8x8xf32> to vector<8xf32>
    %52 = vector.shape_cast %51 : vector<8xf32> to vector<8x1xf32>
    %53 = arith.maximumf %50, %52 : vector<8x1xf32>
    %54 = arith.subf %50, %53 : vector<8x1xf32>
    %55 = math.exp %54 : vector<8x1xf32>
    %56 = vector.broadcast %53 : vector<8x1xf32> to vector<8x8xf32>
    %57 = arith.subf %48, %56 : vector<8x8xf32>
    %58 = math.exp %57 : vector<8x8xf32>
    %c1_48 = arith.constant 1 : index
    %c0_49 = arith.constant 0 : index
    %c0_50 = arith.constant 0 : index
    %59 = vector.load %arg8[%c1_48, %c0_49, %c0_50] : memref<4x8x1xf32, #tpu.memory_space<vmem>>, vector<1x8x1xf32>
    %60 = vector.shape_cast %59 : vector<1x8x1xf32> to vector<8x1xf32>
    %61 = arith.mulf %55, %60 : vector<8x1xf32>
    %cst_51 = arith.constant dense<0.000000e+00> : vector<8xf32>
    %62 = vector.multi_reduction <add>, %58, %cst_51 [1] : vector<8x8xf32> to vector<8xf32>
    %63 = vector.shape_cast %62 : vector<8xf32> to vector<8x1xf32>
    %64 = arith.addf %61, %63 : vector<8x1xf32>
    %c1_52 = arith.constant 1 : index
    %c0_53 = arith.constant 0 : index
    %c0_54 = arith.constant 0 : index
    %65 = vector.load %arg8[%c1_52, %c0_53, %c0_54] : memref<4x8x1xf32, #tpu.memory_space<vmem>>, vector<1x8x1xf32>
    %66 = vector.shape_cast %65 : vector<1x8x1xf32> to vector<8x1xf32>
    %67 = vector.shape_cast %64 : vector<8x1xf32> to vector<1x8x1xf32>
    tpu.vector_store %arg8[%c1_52, %c0_53, %c0_54], %67 {strides = array<i32>} : memref<4x8x1xf32, #tpu.memory_space<vmem>>, vector<1x8x1xf32>,
    %c1_55 = arith.constant 1 : index
    %c0_56 = arith.constant 0 : index
    %c0_57 = arith.constant 0 : index
    %68 = vector.load %arg9[%c1_55, %c0_56, %c0_57] : memref<4x8x8xf32, #tpu.memory_space<vmem>>, vector<1x8x8xf32>
    %69 = vector.shape_cast %68 : vector<1x8x8xf32> to vector<8x8xf32>
    %70 = vector.broadcast %55 : vector<8x1xf32> to vector<8x8xf32>
    %71 = arith.mulf %70, %69 : vector<8x8xf32>
    %72 = arith.truncf %58 : vector<8x8xf32> to vector<8x8xbf16>
    %cst_58 = arith.constant dense<0.000000e+00> : vector<8x8xf32>
    %73 = tpu.matmul %72, %47, %cst_58 {dimension_numbers = #tpu.dot_dimension_numbers<[1], [0], [0], [1], [0, 0, 1, 1], [], []>} : vector<8x8xbf16>, vector<8x8xbf16>, vector<8x8xf32> -> vector<8x8xf32>
    %74 = arith.addf %71, %73 : vector<8x8xf32>
    %c1_59 = arith.constant 1 : index
    %c0_60 = arith.constant 0 : index
    %c0_61 = arith.constant 0 : index
    %75 = vector.load %arg9[%c1_59, %c0_60, %c0_61] : memref<4x8x8xf32, #tpu.memory_space<vmem>>, vector<1x8x8xf32>
    %76 = vector.shape_cast %75 : vector<1x8x8xf32> to vector<8x8xf32>
    %77 = vector.shape_cast %74 : vector<8x8xf32> to vector<1x8x8xf32>
    tpu.vector_store %arg9[%c1_59, %c0_60, %c0_61], %77 {strides = array<i32>} : memref<4x8x8xf32, #tpu.memory_space<vmem>>, vector<1x8x8xf32>,
    %c1_62 = arith.constant 1 : index
    %c0_63 = arith.constant 0 : index
    %c0_64 = arith.constant 0 : index
    %78 = vector.load %arg7[%c1_62, %c0_63, %c0_64] : memref<4x8x1xf32, #tpu.memory_space<vmem>>, vector<1x8x1xf32>
    %79 = vector.shape_cast %78 : vector<1x8x1xf32> to vector<8x1xf32>
    %80 = vector.shape_cast %53 : vector<8x1xf32> to vector<1x8x1xf32>
    tpu.vector_store %arg7[%c1_62, %c0_63, %c0_64], %80 {strides = array<i32>} : memref<4x8x1xf32, #tpu.memory_space<vmem>>, vector<1x8x1xf32>,
    %c0_65 = arith.constant 0 : index
    %c0_66 = arith.constant 0 : index
    %c0_67 = arith.constant 0 : index
    %c16 = arith.constant 16 : index
    %81 = vector.load %arg3[%c0_65, %c0_66, %c0_67, %c16] : memref<1x1x8x32xbf16, #tpu.memory_space<vmem>>, vector<1x1x8x8xbf16>
    %82 = vector.shape_cast %81 : vector<1x1x8x8xbf16> to vector<8x8xbf16>
    %c0_68 = arith.constant 0 : index
    %c0_69 = arith.constant 0 : index
    %c0_70 = arith.constant 0 : index
    %c16_71 = arith.constant 16 : index
    %83 = vector.load %arg4[%c0_68, %c0_69, %c0_70, %c16_71] : memref<1x1x8x32xbf16, #tpu.memory_space<vmem>>, vector<1x1x8x8xbf16>
    %84 = vector.shape_cast %83 : vector<1x1x8x8xbf16> to vector<8x8xbf16>
    %c0_72 = arith.constant 0 : index
    %c0_73 = arith.constant 0 : index
    %c0_74 = arith.constant 0 : index
    %c16_75 = arith.constant 16 : index
    %85 = vector.load %arg5[%c0_72, %c0_73, %c0_74, %c16_75] : memref<1x1x8x32xbf16, #tpu.memory_space<vmem>>, vector<1x1x8x8xbf16>
    %86 = vector.shape_cast %85 : vector<1x1x8x8xbf16> to vector<8x8xbf16>
    %cst_76 = arith.constant dense<0.000000e+00> : vector<8x8xf32>
    %87 = tpu.matmul %82, %84, %cst_76 {dimension_numbers = #tpu.dot_dimension_numbers<[1], [1], [0], [0], [0, 0, 1, 0], [], []>} : vector<8x8xbf16>, vector<8x8xbf16>, vector<8x8xf32> -> vector<8x8xf32>
    %c2 = arith.constant 2 : index
    %c0_77 = arith.constant 0 : index
    %c0_78 = arith.constant 0 : index
    %88 = vector.load %arg7[%c2, %c0_77, %c0_78] : memref<4x8x1xf32, #tpu.memory_space<vmem>>, vector<1x8x1xf32>
    %89 = vector.shape_cast %88 : vector<1x8x1xf32> to vector<8x1xf32>
    %cst_79 = arith.constant dense<0xFF800000> : vector<8xf32>
    %90 = vector.multi_reduction <maximumf>, %87, %cst_79 [1] : vector<8x8xf32> to vector<8xf32>
    %91 = vector.shape_cast %90 : vector<8xf32> to vector<8x1xf32>
    %92 = arith.maximumf %89, %91 : vector<8x1xf32>
    %93 = arith.subf %89, %92 : vector<8x1xf32>
    %94 = math.exp %93 : vector<8x1xf32>
    %95 = vector.broadcast %92 : vector<8x1xf32> to vector<8x8xf32>
    %96 = arith.subf %87, %95 : vector<8x8xf32>
    %97 = math.exp %96 : vector<8x8xf32>
    %c2_80 = arith.constant 2 : index
    %c0_81 = arith.constant 0 : index
    %c0_82 = arith.constant 0 : index
    %98 = vector.load %arg8[%c2_80, %c0_81, %c0_82] : memref<4x8x1xf32, #tpu.memory_space<vmem>>, vector<1x8x1xf32>
    %99 = vector.shape_cast %98 : vector<1x8x1xf32> to vector<8x1xf32>
    %100 = arith.mulf %94, %99 : vector<8x1xf32>
    %cst_83 = arith.constant dense<0.000000e+00> : vector<8xf32>
    %101 = vector.multi_reduction <add>, %97, %cst_83 [1] : vector<8x8xf32> to vector<8xf32>
    %102 = vector.shape_cast %101 : vector<8xf32> to vector<8x1xf32>
    %103 = arith.addf %100, %102 : vector<8x1xf32>
    %c2_84 = arith.constant 2 : index
    %c0_85 = arith.constant 0 : index
    %c0_86 = arith.constant 0 : index
    %104 = vector.load %arg8[%c2_84, %c0_85, %c0_86] : memref<4x8x1xf32, #tpu.memory_space<vmem>>, vector<1x8x1xf32>
    %105 = vector.shape_cast %104 : vector<1x8x1xf32> to vector<8x1xf32>
    %106 = vector.shape_cast %103 : vector<8x1xf32> to vector<1x8x1xf32>
    tpu.vector_store %arg8[%c2_84, %c0_85, %c0_86], %106 {strides = array<i32>} : memref<4x8x1xf32, #tpu.memory_space<vmem>>, vector<1x8x1xf32>,
    %c2_87 = arith.constant 2 : index
    %c0_88 = arith.constant 0 : index
    %c0_89 = arith.constant 0 : index
    %107 = vector.load %arg9[%c2_87, %c0_88, %c0_89] : memref<4x8x8xf32, #tpu.memory_space<vmem>>, vector<1x8x8xf32>
    %108 = vector.shape_cast %107 : vector<1x8x8xf32> to vector<8x8xf32>
    %109 = vector.broadcast %94 : vector<8x1xf32> to vector<8x8xf32>
    %110 = arith.mulf %109, %108 : vector<8x8xf32>
    %111 = arith.truncf %97 : vector<8x8xf32> to vector<8x8xbf16>
    %cst_90 = arith.constant dense<0.000000e+00> : vector<8x8xf32>
    %112 = tpu.matmul %111, %86, %cst_90 {dimension_numbers = #tpu.dot_dimension_numbers<[1], [0], [0], [1], [0, 0, 1, 1], [], []>} : vector<8x8xbf16>, vector<8x8xbf16>, vector<8x8xf32> -> vector<8x8xf32>
    %113 = arith.addf %110, %112 : vector<8x8xf32>
    %c2_91 = arith.constant 2 : index
    %c0_92 = arith.constant 0 : index
    %c0_93 = arith.constant 0 : index
    %114 = vector.load %arg9[%c2_91, %c0_92, %c0_93] : memref<4x8x8xf32, #tpu.memory_space<vmem>>, vector<1x8x8xf32>
    %115 = vector.shape_cast %114 : vector<1x8x8xf32> to vector<8x8xf32>
    %116 = vector.shape_cast %113 : vector<8x8xf32> to vector<1x8x8xf32>
    tpu.vector_store %arg9[%c2_91, %c0_92, %c0_93], %116 {strides = array<i32>} : memref<4x8x8xf32, #tpu.memory_space<vmem>>, vector<1x8x8xf32>,
    %c2_94 = arith.constant 2 : index
    %c0_95 = arith.constant 0 : index
    %c0_96 = arith.constant 0 : index
    %117 = vector.load %arg7[%c2_94, %c0_95, %c0_96] : memref<4x8x1xf32, #tpu.memory_space<vmem>>, vector<1x8x1xf32>
    %118 = vector.shape_cast %117 : vector<1x8x1xf32> to vector<8x1xf32>
    %119 = vector.shape_cast %92 : vector<8x1xf32> to vector<1x8x1xf32>
    tpu.vector_store %arg7[%c2_94, %c0_95, %c0_96], %119 {strides = array<i32>} : memref<4x8x1xf32, #tpu.memory_space<vmem>>, vector<1x8x1xf32>,
    %c0_97 = arith.constant 0 : index
    %c0_98 = arith.constant 0 : index
    %c0_99 = arith.constant 0 : index
    %c24 = arith.constant 24 : index
    %120 = vector.load %arg3[%c0_97, %c0_98, %c0_99, %c24] : memref<1x1x8x32xbf16, #tpu.memory_space<vmem>>, vector<1x1x8x8xbf16>
    %121 = vector.shape_cast %120 : vector<1x1x8x8xbf16> to vector<8x8xbf16>
    %c0_100 = arith.constant 0 : index
    %c0_101 = arith.constant 0 : index
    %c0_102 = arith.constant 0 : index
    %c24_103 = arith.constant 24 : index
    %122 = vector.load %arg4[%c0_100, %c0_101, %c0_102, %c24_103] : memref<1x1x8x32xbf16, #tpu.memory_space<vmem>>, vector<1x1x8x8xbf16>
    %123 = vector.shape_cast %122 : vector<1x1x8x8xbf16> to vector<8x8xbf16>
    %c0_104 = arith.constant 0 : index
    %c0_105 = arith.constant 0 : index
    %c0_106 = arith.constant 0 : index
    %c24_107 = arith.constant 24 : index
    %124 = vector.load %arg5[%c0_104, %c0_105, %c0_106, %c24_107] : memref<1x1x8x32xbf16, #tpu.memory_space<vmem>>, vector<1x1x8x8xbf16>
    %125 = vector.shape_cast %124 : vector<1x1x8x8xbf16> to vector<8x8xbf16>
    %cst_108 = arith.constant dense<0.000000e+00> : vector<8x8xf32>
    %126 = tpu.matmul %121, %123, %cst_108 {dimension_numbers = #tpu.dot_dimension_numbers<[1], [1], [0], [0], [0, 0, 1, 0], [], []>} : vector<8x8xbf16>, vector<8x8xbf16>, vector<8x8xf32> -> vector<8x8xf32>
    %c3 = arith.constant 3 : index
    %c0_109 = arith.constant 0 : index
    %c0_110 = arith.constant 0 : index
    %127 = vector.load %arg7[%c3, %c0_109, %c0_110] : memref<4x8x1xf32, #tpu.memory_space<vmem>>, vector<1x8x1xf32>
    %128 = vector.shape_cast %127 : vector<1x8x1xf32> to vector<8x1xf32>
    %cst_111 = arith.constant dense<0xFF800000> : vector<8xf32>
    %129 = vector.multi_reduction <maximumf>, %126, %cst_111 [1] : vector<8x8xf32> to vector<8xf32>
    %130 = vector.shape_cast %129 : vector<8xf32> to vector<8x1xf32>
    %131 = arith.maximumf %128, %130 : vector<8x1xf32>
    %132 = arith.subf %128, %131 : vector<8x1xf32>
    %133 = math.exp %132 : vector<8x1xf32>
    %134 = vector.broadcast %131 : vector<8x1xf32> to vector<8x8xf32>
    %135 = arith.subf %126, %134 : vector<8x8xf32>
    %136 = math.exp %135 : vector<8x8xf32>
    %c3_112 = arith.constant 3 : index
    %c0_113 = arith.constant 0 : index
    %c0_114 = arith.constant 0 : index
    %137 = vector.load %arg8[%c3_112, %c0_113, %c0_114] : memref<4x8x1xf32, #tpu.memory_space<vmem>>, vector<1x8x1xf32>
    %138 = vector.shape_cast %137 : vector<1x8x1xf32> to vector<8x1xf32>
    %139 = arith.mulf %133, %138 : vector<8x1xf32>
    %cst_115 = arith.constant dense<0.000000e+00> : vector<8xf32>
    %140 = vector.multi_reduction <add>, %136, %cst_115 [1] : vector<8x8xf32> to vector<8xf32>
    %141 = vector.shape_cast %140 : vector<8xf32> to vector<8x1xf32>
    %142 = arith.addf %139, %141 : vector<8x1xf32>
    %c3_116 = arith.constant 3 : index
    %c0_117 = arith.constant 0 : index
    %c0_118 = arith.constant 0 : index
    %143 = vector.load %arg8[%c3_116, %c0_117, %c0_118] : memref<4x8x1xf32, #tpu.memory_space<vmem>>, vector<1x8x1xf32>
    %144 = vector.shape_cast %143 : vector<1x8x1xf32> to vector<8x1xf32>
    %145 = vector.shape_cast %142 : vector<8x1xf32> to vector<1x8x1xf32>
    tpu.vector_store %arg8[%c3_116, %c0_117, %c0_118], %145 {strides = array<i32>} : memref<4x8x1xf32, #tpu.memory_space<vmem>>, vector<1x8x1xf32>,
    %c3_119 = arith.constant 3 : index
    %c0_120 = arith.constant 0 : index
    %c0_121 = arith.constant 0 : index
    %146 = vector.load %arg9[%c3_119, %c0_120, %c0_121] : memref<4x8x8xf32, #tpu.memory_space<vmem>>, vector<1x8x8xf32>
    %147 = vector.shape_cast %146 : vector<1x8x8xf32> to vector<8x8xf32>
    %148 = vector.broadcast %133 : vector<8x1xf32> to vector<8x8xf32>
    %149 = arith.mulf %148, %147 : vector<8x8xf32>
    %150 = arith.truncf %136 : vector<8x8xf32> to vector<8x8xbf16>
    %cst_122 = arith.constant dense<0.000000e+00> : vector<8x8xf32>
    %151 = tpu.matmul %150, %125, %cst_122 {dimension_numbers = #tpu.dot_dimension_numbers<[1], [0], [0], [1], [0, 0, 1, 1], [], []>} : vector<8x8xbf16>, vector<8x8xbf16>, vector<8x8xf32> -> vector<8x8xf32>
    %152 = arith.addf %149, %151 : vector<8x8xf32>
    %c3_123 = arith.constant 3 : index
    %c0_124 = arith.constant 0 : index
    %c0_125 = arith.constant 0 : index
    %153 = vector.load %arg9[%c3_123, %c0_124, %c0_125] : memref<4x8x8xf32, #tpu.memory_space<vmem>>, vector<1x8x8xf32>
    %154 = vector.shape_cast %153 : vector<1x8x8xf32> to vector<8x8xf32>
    %155 = vector.shape_cast %152 : vector<8x8xf32> to vector<1x8x8xf32>
    tpu.vector_store %arg9[%c3_123, %c0_124, %c0_125], %155 {strides = array<i32>} : memref<4x8x8xf32, #tpu.memory_space<vmem>>, vector<1x8x8xf32>,
    %c3_126 = arith.constant 3 : index
    %c0_127 = arith.constant 0 : index
    %c0_128 = arith.constant 0 : index
    %156 = vector.load %arg7[%c3_126, %c0_127, %c0_128] : memref<4x8x1xf32, #tpu.memory_space<vmem>>, vector<1x8x1xf32>
    %157 = vector.shape_cast %156 : vector<1x8x1xf32> to vector<8x1xf32>
    %158 = vector.shape_cast %131 : vector<8x1xf32> to vector<1x8x1xf32>
    tpu.vector_store %arg7[%c3_126, %c0_127, %c0_128], %158 {strides = array<i32>} : memref<4x8x1xf32, #tpu.memory_space<vmem>>, vector<1x8x1xf32>,
    %c0_i32_129 = arith.constant 0 : i32
    %159 = arith.cmpi eq, %arg2, %c0_i32_129 : i32
    %160 = arith.extui %159 : i1 to i32
    %c0_i32_130 = arith.constant 0 : i32
    %161 = arith.cmpi ne, %160, %c0_i32_130 : i32
    scf.if %161 {
      %c0_131 = arith.constant 0 : index
      %c0_132 = arith.constant 0 : index
      %c0_133 = arith.constant 0 : index
      %162 = vector.load %arg8[%c0_131, %c0_132, %c0_133] : memref<4x8x1xf32, #tpu.memory_space<vmem>>, vector<1x8x1xf32>
      %163 = vector.shape_cast %162 : vector<1x8x1xf32> to vector<8x1xf32>
      %164 = tpu.reciprocal %163 {approx = true} : vector<8x1xf32> -> vector<8x1xf32>
      %c0_134 = arith.constant 0 : index
      %c0_135 = arith.constant 0 : index
      %c0_136 = arith.constant 0 : index
      %165 = vector.load %arg9[%c0_134, %c0_135, %c0_136] : memref<4x8x8xf32, #tpu.memory_space<vmem>>, vector<1x8x8xf32>
      %166 = vector.shape_cast %165 : vector<1x8x8xf32> to vector<8x8xf32>
      %167 = vector.broadcast %164 : vector<8x1xf32> to vector<8x8xf32>
      %168 = arith.mulf %166, %167 : vector<8x8xf32>
      %169 = arith.truncf %168 : vector<8x8xf32> to vector<8x8xbf16>
      %c0_137 = arith.constant 0 : index
      %c0_138 = arith.constant 0 : index
      %c0_139 = arith.constant 0 : index
      %170 = vector.load %arg6[%c0_137, %c0_138, %c0_139] : memref<1x8x32xbf16, #tpu.memory_space<vmem>>, vector<1x8x8xbf16>
      %171 = vector.shape_cast %170 : vector<1x8x8xbf16> to vector<8x8xbf16>
      %172 = vector.shape_cast %169 : vector<8x8xbf16> to vector<1x8x8xbf16>
      tpu.vector_store %arg6[%c0_137, %c0_138, %c0_139], %172 {strides = array<i32>} : memref<1x8x32xbf16, #tpu.memory_space<vmem>>, vector<1x8x8xbf16>,
      %c1_140 = arith.constant 1 : index
      %c0_141 = arith.constant 0 : index
      %c0_142 = arith.constant 0 : index
      %173 = vector.load %arg8[%c1_140, %c0_141, %c0_142] : memref<4x8x1xf32, #tpu.memory_space<vmem>>, vector<1x8x1xf32>
      %174 = vector.shape_cast %173 : vector<1x8x1xf32> to vector<8x1xf32>
      %175 = tpu.reciprocal %174 {approx = true} : vector<8x1xf32> -> vector<8x1xf32>
      %c1_143 = arith.constant 1 : index
      %c0_144 = arith.constant 0 : index
      %c0_145 = arith.constant 0 : index
      %176 = vector.load %arg9[%c1_143, %c0_144, %c0_145] : memref<4x8x8xf32, #tpu.memory_space<vmem>>, vector<1x8x8xf32>
      %177 = vector.shape_cast %176 : vector<1x8x8xf32> to vector<8x8xf32>
      %178 = vector.broadcast %175 : vector<8x1xf32> to vector<8x8xf32>
      %179 = arith.mulf %177, %178 : vector<8x8xf32>
      %180 = arith.truncf %179 : vector<8x8xf32> to vector<8x8xbf16>
      %c0_146 = arith.constant 0 : index
      %c0_147 = arith.constant 0 : index
      %c8_148 = arith.constant 8 : index
      %181 = vector.load %arg6[%c0_146, %c0_147, %c8_148] : memref<1x8x32xbf16, #tpu.memory_space<vmem>>, vector<1x8x8xbf16>
      %182 = vector.shape_cast %181 : vector<1x8x8xbf16> to vector<8x8xbf16>
      %183 = vector.shape_cast %180 : vector<8x8xbf16> to vector<1x8x8xbf16>
      tpu.vector_store %arg6[%c0_146, %c0_147, %c8_148], %183 {strides = array<i32>} : memref<1x8x32xbf16, #tpu.memory_space<vmem>>, vector<1x8x8xbf16>,
      %c2_149 = arith.constant 2 : index
      %c0_150 = arith.constant 0 : index
      %c0_151 = arith.constant 0 : index
      %184 = vector.load %arg8[%c2_149, %c0_150, %c0_151] : memref<4x8x1xf32, #tpu.memory_space<vmem>>, vector<1x8x1xf32>
      %185 = vector.shape_cast %184 : vector<1x8x1xf32> to vector<8x1xf32>
      %186 = tpu.reciprocal %185 {approx = true} : vector<8x1xf32> -> vector<8x1xf32>
      %c2_152 = arith.constant 2 : index
      %c0_153 = arith.constant 0 : index
      %c0_154 = arith.constant 0 : index
      %187 = vector.load %arg9[%c2_152, %c0_153, %c0_154] : memref<4x8x8xf32, #tpu.memory_space<vmem>>, vector<1x8x8xf32>
      %188 = vector.shape_cast %187 : vector<1x8x8xf32> to vector<8x8xf32>
      %189 = vector.broadcast %186 : vector<8x1xf32> to vector<8x8xf32>
      %190 = arith.mulf %188, %189 : vector<8x8xf32>
      %191 = arith.truncf %190 : vector<8x8xf32> to vector<8x8xbf16>
      %c0_155 = arith.constant 0 : index
      %c0_156 = arith.constant 0 : index
      %c16_157 = arith.constant 16 : index
      %192 = vector.load %arg6[%c0_155, %c0_156, %c16_157] : memref<1x8x32xbf16, #tpu.memory_space<vmem>>, vector<1x8x8xbf16>
      %193 = vector.shape_cast %192 : vector<1x8x8xbf16> to vector<8x8xbf16>
      %194 = vector.shape_cast %191 : vector<8x8xbf16> to vector<1x8x8xbf16>
      tpu.vector_store %arg6[%c0_155, %c0_156, %c16_157], %194 {strides = array<i32>} : memref<1x8x32xbf16, #tpu.memory_space<vmem>>, vector<1x8x8xbf16>,
      %c3_158 = arith.constant 3 : index
      %c0_159 = arith.constant 0 : index
      %c0_160 = arith.constant 0 : index
      %195 = vector.load %arg8[%c3_158, %c0_159, %c0_160] : memref<4x8x1xf32, #tpu.memory_space<vmem>>, vector<1x8x1xf32>
      %196 = vector.shape_cast %195 : vector<1x8x1xf32> to vector<8x1xf32>
      %197 = tpu.reciprocal %196 {approx = true} : vector<8x1xf32> -> vector<8x1xf32>
      %c3_161 = arith.constant 3 : index
      %c0_162 = arith.constant 0 : index
      %c0_163 = arith.constant 0 : index
      %198 = vector.load %arg9[%c3_161, %c0_162, %c0_163] : memref<4x8x8xf32, #tpu.memory_space<vmem>>, vector<1x8x8xf32>
      %199 = vector.shape_cast %198 : vector<1x8x8xf32> to vector<8x8xf32>
      %200 = vector.broadcast %197 : vector<8x1xf32> to vector<8x8xf32>
      %201 = arith.mulf %199, %200 : vector<8x8xf32>
      %202 = arith.truncf %201 : vector<8x8xf32> to vector<8x8xbf16>
      %c0_164 = arith.constant 0 : index
      %c0_165 = arith.constant 0 : index
      %c24_166 = arith.constant 24 : index
      %203 = vector.load %arg6[%c0_164, %c0_165, %c24_166] : memref<1x8x32xbf16, #tpu.memory_space<vmem>>, vector<1x8x8xbf16>
      %204 = vector.shape_cast %203 : vector<1x8x8xbf16> to vector<8x8xbf16>
      %205 = vector.shape_cast %202 : vector<8x8xbf16> to vector<1x8x8xbf16>
      tpu.vector_store %arg6[%c0_164, %c0_165, %c24_166], %205 {strides = array<i32>} : memref<1x8x32xbf16, #tpu.memory_space<vmem>>, vector<1x8x8xbf16>,
    } else {
    }
    return
  }
  func.func @transform_0(%arg0: i32, %arg1: i32, %arg2: i32) -> (i32, i32, i32, i32) {
    %c0_i32 = arith.constant 0 : i32
    %c0_i32_0 = arith.constant 0 : i32
    %c0_i32_1 = arith.constant 0 : i32
    return %c0_i32, %arg0, %arg1, %c0_i32_0 : i32, i32, i32, i32
  }
  func.func @transform_1(%arg0: i32, %arg1: i32, %arg2: i32) -> (i32, i32, i32, i32) {
    %c1_i32 = arith.constant 1 : i32
    %c0_i32 = arith.constant 0 : i32
    %c0_i32_0 = arith.constant 0 : i32
    return %c1_i32, %arg0, %arg2, %c0_i32 : i32, i32, i32, i32
  }
  func.func @transform_2(%arg0: i32, %arg1: i32, %arg2: i32) -> (i32, i32, i32, i32) {
    %c2_i32 = arith.constant 2 : i32
    %c0_i32 = arith.constant 0 : i32
    %c0_i32_0 = arith.constant 0 : i32
    return %c2_i32, %arg0, %arg2, %c0_i32 : i32, i32, i32, i32
  }
  func.func @transform_3(%arg0: i32, %arg1: i32, %arg2: i32) -> (i32, i32, i32) {
    %c0_i32 = arith.constant 0 : i32
    %c0_i32_0 = arith.constant 0 : i32
    return %arg0, %arg1, %c0_i32 : i32, i32, i32
  }
}

module attributes {stable_mosaic.version = 11 : i64} {
  func.func @_matmul_ln_kernel(%arg0: i32, %arg1: i32, %arg2: memref<16x64xbf16, #tpu.memory_space<vmem>>, %arg3: memref<64x32xbf16, #tpu.memory_space<vmem>>, %arg4: memref<1x32xbf16, #tpu.memory_space<vmem>>, %arg5: memref<16x32xbf16, #tpu.memory_space<vmem>>, %arg6: memref<1x32xbf16, #tpu.memory_space<vmem>>, %arg7: memref<1x32xbf16, #tpu.memory_space<vmem>>, %arg8: memref<16x32xbf16, #tpu.memory_space<vmem>>, %arg9: memref<16x32xf32, #tpu.memory_space<vmem>>) attributes {dimension_semantics = [#tpu.dimension_semantics<parallel>, #tpu.dimension_semantics<arbitrary>], iteration_bounds = array<i64: 1, 1>, scalar_prefetch = 0 : i64, scratch_operands = 1 : i64, tpu.core_type = #tpu.core_type<tc>, window_params = [{transform_indices = @transform_0, window_bounds = array<i64: 16, 64>}, {transform_indices = @transform_1, window_bounds = array<i64: 64, 32>}, {pipeline_mode = #tpu.pipeline_mode<synchronous>, transform_indices = @transform_2, window_bounds = array<i64: 1, 32>}, {transform_indices = @transform_3, window_bounds = array<i64: 16, 32>}, {pipeline_mode = #tpu.pipeline_mode<synchronous>, transform_indices = @transform_4, window_bounds = array<i64: 1, 32>}, {pipeline_mode = #tpu.pipeline_mode<synchronous>, transform_indices = @transform_5, window_bounds = array<i64: 1, 32>}, {transform_indices = @transform_6, window_bounds = array<i64: 16, 32>}]} {
    %c0_i32 = arith.constant 0 : i32
    %0 = arith.cmpi eq, %arg1, %c0_i32 : i32
    %1 = arith.extui %0 : i1 to i32
    %c0_i32_0 = arith.constant 0 : i32
    %2 = arith.cmpi ne, %1, %c0_i32_0 : i32
    scf.if %2 {
      %cst_10 = arith.constant 0.000000e+00 : f32
      %12 = vector.broadcast %cst_10 : f32 to vector<16x32xf32>
      %c0_11 = arith.constant 0 : index
      %c0_12 = arith.constant 0 : index
      %13 = vector.load %arg9[%c0_11, %c0_12] : memref<16x32xf32, #tpu.memory_space<vmem>>, vector<16x32xf32>
      tpu.vector_store %arg9[%c0_11, %c0_12], %12 {strides = array<i32>} : memref<16x32xf32, #tpu.memory_space<vmem>>, vector<16x32xf32>,
    } else {
    }
    %c0 = arith.constant 0 : index
    %c0_1 = arith.constant 0 : index
    %3 = vector.load %arg9[%c0, %c0_1] : memref<16x32xf32, #tpu.memory_space<vmem>>, vector<16x32xf32>
    %c0_2 = arith.constant 0 : index
    %c0_3 = arith.constant 0 : index
    %4 = vector.load %arg2[%c0_2, %c0_3] : memref<16x64xbf16, #tpu.memory_space<vmem>>, vector<16x64xbf16>
    %c0_4 = arith.constant 0 : index
    %c0_5 = arith.constant 0 : index
    %5 = vector.load %arg3[%c0_4, %c0_5] : memref<64x32xbf16, #tpu.memory_space<vmem>>, vector<64x32xbf16>
    %cst = arith.constant dense<0.000000e+00> : vector<16x32xf32>
    %6 = tpu.matmul %4, %5, %cst {dimension_numbers = #tpu.dot_dimension_numbers<[1], [0], [0], [1], [0, 0, 1, 1], [], []>} : vector<16x64xbf16>, vector<64x32xbf16>, vector<16x32xf32> -> vector<16x32xf32>
    %7 = arith.addf %3, %6 : vector<16x32xf32>
    %c0_6 = arith.constant 0 : index
    %c0_7 = arith.constant 0 : index
    %8 = vector.load %arg9[%c0_6, %c0_7] : memref<16x32xf32, #tpu.memory_space<vmem>>, vector<16x32xf32>
    tpu.vector_store %arg9[%c0_6, %c0_7], %7 {strides = array<i32>} : memref<16x32xf32, #tpu.memory_space<vmem>>, vector<16x32xf32>,
    %c0_i32_8 = arith.constant 0 : i32
    %9 = arith.cmpi eq, %arg1, %c0_i32_8 : i32
    %10 = arith.extui %9 : i1 to i32
    %c0_i32_9 = arith.constant 0 : i32
    %11 = arith.cmpi ne, %10, %c0_i32_9 : i32
    scf.if %11 {
      %c0_10 = arith.constant 0 : index
      %c0_11 = arith.constant 0 : index
      %12 = vector.load %arg9[%c0_10, %c0_11] : memref<16x32xf32, #tpu.memory_space<vmem>>, vector<16x32xf32>
      %c0_12 = arith.constant 0 : index
      %c0_13 = arith.constant 0 : index
      %13 = vector.load %arg4[%c0_12, %c0_13] : memref<1x32xbf16, #tpu.memory_space<vmem>>, vector<1x32xbf16>
      %14 = arith.extf %13 : vector<1x32xbf16> to vector<1x32xf32>
      %15 = vector.broadcast %14 : vector<1x32xf32> to vector<16x32xf32>
      %16 = arith.addf %12, %15 : vector<16x32xf32>
      %c0_14 = arith.constant 0 : index
      %c0_15 = arith.constant 0 : index
      %17 = vector.load %arg5[%c0_14, %c0_15] : memref<16x32xbf16, #tpu.memory_space<vmem>>, vector<16x32xbf16>
      %18 = arith.extf %17 : vector<16x32xbf16> to vector<16x32xf32>
      %19 = arith.addf %16, %18 : vector<16x32xf32>
      %cst_16 = arith.constant dense<0.000000e+00> : vector<16xf32>
      %20 = vector.multi_reduction <add>, %19, %cst_16 [1] : vector<16x32xf32> to vector<16xf32>
      %21 = vector.shape_cast %20 : vector<16xf32> to vector<16x1xf32>
      %cst_17 = arith.constant 3.200000e+01 : f32
      %22 = vector.broadcast %cst_17 : f32 to vector<16x1xf32>
      %23 = arith.divf %21, %22 : vector<16x1xf32>
      %24 = vector.broadcast %23 : vector<16x1xf32> to vector<16x32xf32>
      %25 = arith.subf %19, %24 : vector<16x32xf32>
      %26 = arith.mulf %25, %25 : vector<16x32xf32>
      %cst_18 = arith.constant dense<0.000000e+00> : vector<16xf32>
      %27 = vector.multi_reduction <add>, %26, %cst_18 [1] : vector<16x32xf32> to vector<16xf32>
      %28 = vector.shape_cast %27 : vector<16xf32> to vector<16x1xf32>
      %cst_19 = arith.constant 3.200000e+01 : f32
      %29 = vector.broadcast %cst_19 : f32 to vector<16x1xf32>
      %30 = arith.divf %28, %29 : vector<16x1xf32>
      %cst_20 = arith.constant 9.99999974E-6 : f32
      %31 = vector.broadcast %cst_20 : f32 to vector<16x1xf32>
      %32 = arith.addf %30, %31 : vector<16x1xf32>
      %33 = math.rsqrt %32 : vector<16x1xf32>
      %34 = vector.broadcast %33 : vector<16x1xf32> to vector<16x32xf32>
      %35 = arith.mulf %25, %34 : vector<16x32xf32>
      %c0_21 = arith.constant 0 : index
      %c0_22 = arith.constant 0 : index
      %36 = vector.load %arg6[%c0_21, %c0_22] : memref<1x32xbf16, #tpu.memory_space<vmem>>, vector<1x32xbf16>
      %37 = arith.extf %36 : vector<1x32xbf16> to vector<1x32xf32>
      %38 = vector.broadcast %37 : vector<1x32xf32> to vector<16x32xf32>
      %39 = arith.mulf %35, %38 : vector<16x32xf32>
      %c0_23 = arith.constant 0 : index
      %c0_24 = arith.constant 0 : index
      %40 = vector.load %arg7[%c0_23, %c0_24] : memref<1x32xbf16, #tpu.memory_space<vmem>>, vector<1x32xbf16>
      %41 = arith.extf %40 : vector<1x32xbf16> to vector<1x32xf32>
      %42 = vector.broadcast %41 : vector<1x32xf32> to vector<16x32xf32>
      %43 = arith.addf %39, %42 : vector<16x32xf32>
      %44 = arith.truncf %43 : vector<16x32xf32> to vector<16x32xbf16>
      %c0_25 = arith.constant 0 : index
      %c0_26 = arith.constant 0 : index
      %45 = vector.load %arg8[%c0_25, %c0_26] : memref<16x32xbf16, #tpu.memory_space<vmem>>, vector<16x32xbf16>
      tpu.vector_store %arg8[%c0_25, %c0_26], %44 {strides = array<i32>} : memref<16x32xbf16, #tpu.memory_space<vmem>>, vector<16x32xbf16>,
    } else {
    }
    return
  }
  func.func @transform_0(%arg0: i32, %arg1: i32) -> (i32, i32) {
    %c0_i32 = arith.constant 0 : i32
    return %arg0, %arg1 : i32, i32
  }
  func.func @transform_1(%arg0: i32, %arg1: i32) -> (i32, i32) {
    %c0_i32 = arith.constant 0 : i32
    %c0_i32_0 = arith.constant 0 : i32
    return %arg1, %c0_i32 : i32, i32
  }
  func.func @transform_2(%arg0: i32, %arg1: i32) -> (i32, i32) {
    %c0_i32 = arith.constant 0 : i32
    %c0_i32_0 = arith.constant 0 : i32
    %c0_i32_1 = arith.constant 0 : i32
    return %c0_i32, %c0_i32_0 : i32, i32
  }
  func.func @transform_3(%arg0: i32, %arg1: i32) -> (i32, i32) {
    %c0_i32 = arith.constant 0 : i32
    %c0_i32_0 = arith.constant 0 : i32
    return %arg0, %c0_i32 : i32, i32
  }
  func.func @transform_4(%arg0: i32, %arg1: i32) -> (i32, i32) {
    %c0_i32 = arith.constant 0 : i32
    %c0_i32_0 = arith.constant 0 : i32
    %c0_i32_1 = arith.constant 0 : i32
    return %c0_i32, %c0_i32_0 : i32, i32
  }
  func.func @transform_5(%arg0: i32, %arg1: i32) -> (i32, i32) {
    %c0_i32 = arith.constant 0 : i32
    %c0_i32_0 = arith.constant 0 : i32
    %c0_i32_1 = arith.constant 0 : i32
    return %c0_i32, %c0_i32_0 : i32, i32
  }
  func.func @transform_6(%arg0: i32, %arg1: i32) -> (i32, i32) {
    %c0_i32 = arith.constant 0 : i32
    %c0_i32_0 = arith.constant 0 : i32
    return %arg0, %c0_i32 : i32, i32
  }
}

module attributes {stable_mosaic.version = 11 : i64} {
  func.func @_matmul_kernel(%arg0: i32, %arg1: i32, %arg2: i32, %arg3: i32, %arg4: memref<16x32xbf16, #tpu.memory_space<vmem>>, %arg5: memref<1x32x32xbf16, #tpu.memory_space<vmem>>, %arg6: memref<1x1x32xbf16, #tpu.memory_space<vmem>>, %arg7: memref<1x16x32xbf16, #tpu.memory_space<vmem>>, %arg8: memref<16x32xf32, #tpu.memory_space<vmem>>) attributes {dimension_semantics = [#tpu.dimension_semantics<parallel>, #tpu.dimension_semantics<parallel>, #tpu.dimension_semantics<parallel>, #tpu.dimension_semantics<arbitrary>], iteration_bounds = array<i64: 2, 1, 1, 1>, scalar_prefetch = 0 : i64, scratch_operands = 1 : i64, tpu.core_type = #tpu.core_type<tc>, window_params = [{transform_indices = @transform_0, window_bounds = array<i64: 16, 32>}, {transform_indices = @transform_1, window_bounds = array<i64: 1, 32, 32>}, {transform_indices = @transform_2, window_bounds = array<i64: 1, 1, 32>}, {transform_indices = @transform_3, window_bounds = array<i64: 1, 16, 32>}]} {
    %c0_i32 = arith.constant 0 : i32
    %0 = arith.cmpi eq, %arg3, %c0_i32 : i32
    %1 = arith.extui %0 : i1 to i32
    %c0_i32_0 = arith.constant 0 : i32
    %2 = arith.cmpi ne, %1, %c0_i32_0 : i32
    scf.if %2 {
      %cst_11 = arith.constant 0.000000e+00 : f32
      %13 = vector.broadcast %cst_11 : f32 to vector<16x32xf32>
      %c0_12 = arith.constant 0 : index
      %c0_13 = arith.constant 0 : index
      %14 = vector.load %arg8[%c0_12, %c0_13] : memref<16x32xf32, #tpu.memory_space<vmem>>, vector<16x32xf32>
      tpu.vector_store %arg8[%c0_12, %c0_13], %13 {strides = array<i32>} : memref<16x32xf32, #tpu.memory_space<vmem>>, vector<16x32xf32>,
    } else {
    }
    %c0 = arith.constant 0 : index
    %c0_1 = arith.constant 0 : index
    %3 = vector.load %arg8[%c0, %c0_1] : memref<16x32xf32, #tpu.memory_space<vmem>>, vector<16x32xf32>
    %c0_2 = arith.constant 0 : index
    %c0_3 = arith.constant 0 : index
    %4 = vector.load %arg4[%c0_2, %c0_3] : memref<16x32xbf16, #tpu.memory_space<vmem>>, vector<16x32xbf16>
    %c0_4 = arith.constant 0 : index
    %c0_5 = arith.constant 0 : index
    %c0_6 = arith.constant 0 : index
    %5 = vector.load %arg5[%c0_4, %c0_5, %c0_6] : memref<1x32x32xbf16, #tpu.memory_space<vmem>>, vector<1x32x32xbf16>
    %6 = vector.shape_cast %5 : vector<1x32x32xbf16> to vector<32x32xbf16>
    %cst = arith.constant dense<0.000000e+00> : vector<16x32xf32>
    %7 = tpu.matmul %4, %6, %cst {dimension_numbers = #tpu.dot_dimension_numbers<[1], [0], [0], [1], [0, 0, 1, 1], [], []>} : vector<16x32xbf16>, vector<32x32xbf16>, vector<16x32xf32> -> vector<16x32xf32>
    %8 = arith.addf %3, %7 : vector<16x32xf32>
    %c0_7 = arith.constant 0 : index
    %c0_8 = arith.constant 0 : index
    %9 = vector.load %arg8[%c0_7, %c0_8] : memref<16x32xf32, #tpu.memory_space<vmem>>, vector<16x32xf32>
    tpu.vector_store %arg8[%c0_7, %c0_8], %8 {strides = array<i32>} : memref<16x32xf32, #tpu.memory_space<vmem>>, vector<16x32xf32>,
    %c0_i32_9 = arith.constant 0 : i32
    %10 = arith.cmpi eq, %arg3, %c0_i32_9 : i32
    %11 = arith.extui %10 : i1 to i32
    %c0_i32_10 = arith.constant 0 : i32
    %12 = arith.cmpi ne, %11, %c0_i32_10 : i32
    scf.if %12 {
      %c0_11 = arith.constant 0 : index
      %c0_12 = arith.constant 0 : index
      %13 = vector.load %arg8[%c0_11, %c0_12] : memref<16x32xf32, #tpu.memory_space<vmem>>, vector<16x32xf32>
      %c0_13 = arith.constant 0 : index
      %c0_14 = arith.constant 0 : index
      %c0_15 = arith.constant 0 : index
      %14 = vector.load %arg6[%c0_13, %c0_14, %c0_15] : memref<1x1x32xbf16, #tpu.memory_space<vmem>>, vector<1x1x32xbf16>
      %15 = vector.shape_cast %14 : vector<1x1x32xbf16> to vector<1x32xbf16>
      %16 = arith.extf %15 : vector<1x32xbf16> to vector<1x32xf32>
      %17 = vector.broadcast %16 : vector<1x32xf32> to vector<16x32xf32>
      %18 = arith.addf %13, %17 : vector<16x32xf32>
      %19 = arith.truncf %18 : vector<16x32xf32> to vector<16x32xbf16>
      %c0_16 = arith.constant 0 : index
      %c0_17 = arith.constant 0 : index
      %c0_18 = arith.constant 0 : index
      %20 = vector.load %arg7[%c0_16, %c0_17, %c0_18] : memref<1x16x32xbf16, #tpu.memory_space<vmem>>, vector<1x16x32xbf16>
      %21 = vector.shape_cast %20 : vector<1x16x32xbf16> to vector<16x32xbf16>
      %22 = vector.shape_cast %19 : vector<16x32xbf16> to vector<1x16x32xbf16>
      tpu.vector_store %arg7[%c0_16, %c0_17, %c0_18], %22 {strides = array<i32>} : memref<1x16x32xbf16, #tpu.memory_space<vmem>>, vector<1x16x32xbf16>,
    } else {
    }
    return
  }
  func.func @transform_0(%arg0: i32, %arg1: i32, %arg2: i32, %arg3: i32) -> (i32, i32) {
    %c0_i32 = arith.constant 0 : i32
    return %arg1, %arg3 : i32, i32
  }
  func.func @transform_1(%arg0: i32, %arg1: i32, %arg2: i32, %arg3: i32) -> (i32, i32, i32) {
    %c0_i32 = arith.constant 0 : i32
    return %arg0, %arg3, %arg2 : i32, i32, i32
  }
  func.func @transform_2(%arg0: i32, %arg1: i32, %arg2: i32, %arg3: i32) -> (i32, i32, i32) {
    %c0_i32 = arith.constant 0 : i32
    %c0_i32_0 = arith.constant 0 : i32
    return %arg0, %c0_i32, %arg2 : i32, i32, i32
  }
  func.func @transform_3(%arg0: i32, %arg1: i32, %arg2: i32, %arg3: i32) -> (i32, i32, i32) {
    %c0_i32 = arith.constant 0 : i32
    return %arg0, %arg1, %arg2 : i32, i32, i32
  }
}

module attributes {stable_mosaic.version = 11 : i64} {
  func.func @_matmul_kernel(%arg0: i32, %arg1: i32, %arg2: i32, %arg3: i32, %arg4: memref<16x32xbf16, #tpu.memory_space<vmem>>, %arg5: memref<1x32x32xbf16, #tpu.memory_space<vmem>>, %arg6: memref<1x1x32xbf16, #tpu.memory_space<vmem>>, %arg7: memref<1x16x32xbf16, #tpu.memory_space<vmem>>, %arg8: memref<16x32xf32, #tpu.memory_space<vmem>>) attributes {dimension_semantics = [#tpu.dimension_semantics<parallel>, #tpu.dimension_semantics<parallel>, #tpu.dimension_semantics<parallel>, #tpu.dimension_semantics<arbitrary>], iteration_bounds = array<i64: 1, 1, 1, 1>, scalar_prefetch = 0 : i64, scratch_operands = 1 : i64, tpu.core_type = #tpu.core_type<tc>, window_params = [{transform_indices = @transform_0, window_bounds = array<i64: 16, 32>}, {transform_indices = @transform_1, window_bounds = array<i64: 1, 32, 32>}, {transform_indices = @transform_2, window_bounds = array<i64: 1, 1, 32>}, {transform_indices = @transform_3, window_bounds = array<i64: 1, 16, 32>}]} {
    %c0_i32 = arith.constant 0 : i32
    %0 = arith.cmpi eq, %arg3, %c0_i32 : i32
    %1 = arith.extui %0 : i1 to i32
    %c0_i32_0 = arith.constant 0 : i32
    %2 = arith.cmpi ne, %1, %c0_i32_0 : i32
    scf.if %2 {
      %cst_11 = arith.constant 0.000000e+00 : f32
      %13 = vector.broadcast %cst_11 : f32 to vector<16x32xf32>
      %c0_12 = arith.constant 0 : index
      %c0_13 = arith.constant 0 : index
      %14 = vector.load %arg8[%c0_12, %c0_13] : memref<16x32xf32, #tpu.memory_space<vmem>>, vector<16x32xf32>
      tpu.vector_store %arg8[%c0_12, %c0_13], %13 {strides = array<i32>} : memref<16x32xf32, #tpu.memory_space<vmem>>, vector<16x32xf32>,
    } else {
    }
    %c0 = arith.constant 0 : index
    %c0_1 = arith.constant 0 : index
    %3 = vector.load %arg8[%c0, %c0_1] : memref<16x32xf32, #tpu.memory_space<vmem>>, vector<16x32xf32>
    %c0_2 = arith.constant 0 : index
    %c0_3 = arith.constant 0 : index
    %4 = vector.load %arg4[%c0_2, %c0_3] : memref<16x32xbf16, #tpu.memory_space<vmem>>, vector<16x32xbf16>
    %c0_4 = arith.constant 0 : index
    %c0_5 = arith.constant 0 : index
    %c0_6 = arith.constant 0 : index
    %5 = vector.load %arg5[%c0_4, %c0_5, %c0_6] : memref<1x32x32xbf16, #tpu.memory_space<vmem>>, vector<1x32x32xbf16>
    %6 = vector.shape_cast %5 : vector<1x32x32xbf16> to vector<32x32xbf16>
    %cst = arith.constant dense<0.000000e+00> : vector<16x32xf32>
    %7 = tpu.matmul %4, %6, %cst {dimension_numbers = #tpu.dot_dimension_numbers<[1], [0], [0], [1], [0, 0, 1, 1], [], []>} : vector<16x32xbf16>, vector<32x32xbf16>, vector<16x32xf32> -> vector<16x32xf32>
    %8 = arith.addf %3, %7 : vector<16x32xf32>
    %c0_7 = arith.constant 0 : index
    %c0_8 = arith.constant 0 : index
    %9 = vector.load %arg8[%c0_7, %c0_8] : memref<16x32xf32, #tpu.memory_space<vmem>>, vector<16x32xf32>
    tpu.vector_store %arg8[%c0_7, %c0_8], %8 {strides = array<i32>} : memref<16x32xf32, #tpu.memory_space<vmem>>, vector<16x32xf32>,
    %c0_i32_9 = arith.constant 0 : i32
    %10 = arith.cmpi eq, %arg3, %c0_i32_9 : i32
    %11 = arith.extui %10 : i1 to i32
    %c0_i32_10 = arith.constant 0 : i32
    %12 = arith.cmpi ne, %11, %c0_i32_10 : i32
    scf.if %12 {
      %c0_11 = arith.constant 0 : index
      %c0_12 = arith.constant 0 : index
      %13 = vector.load %arg8[%c0_11, %c0_12] : memref<16x32xf32, #tpu.memory_space<vmem>>, vector<16x32xf32>
      %c0_13 = arith.constant 0 : index
      %c0_14 = arith.constant 0 : index
      %c0_15 = arith.constant 0 : index
      %14 = vector.load %arg6[%c0_13, %c0_14, %c0_15] : memref<1x1x32xbf16, #tpu.memory_space<vmem>>, vector<1x1x32xbf16>
      %15 = vector.shape_cast %14 : vector<1x1x32xbf16> to vector<1x32xbf16>
      %16 = arith.extf %15 : vector<1x32xbf16> to vector<1x32xf32>
      %17 = vector.broadcast %16 : vector<1x32xf32> to vector<16x32xf32>
      %18 = arith.addf %13, %17 : vector<16x32xf32>
      %19 = arith.truncf %18 : vector<16x32xf32> to vector<16x32xbf16>
      %c0_16 = arith.constant 0 : index
      %c0_17 = arith.constant 0 : index
      %c0_18 = arith.constant 0 : index
      %20 = vector.load %arg7[%c0_16, %c0_17, %c0_18] : memref<1x16x32xbf16, #tpu.memory_space<vmem>>, vector<1x16x32xbf16>
      %21 = vector.shape_cast %20 : vector<1x16x32xbf16> to vector<16x32xbf16>
      %22 = vector.shape_cast %19 : vector<16x32xbf16> to vector<1x16x32xbf16>
      tpu.vector_store %arg7[%c0_16, %c0_17, %c0_18], %22 {strides = array<i32>} : memref<1x16x32xbf16, #tpu.memory_space<vmem>>, vector<1x16x32xbf16>,
    } else {
    }
    return
  }
  func.func @transform_0(%arg0: i32, %arg1: i32, %arg2: i32, %arg3: i32) -> (i32, i32) {
    %c0_i32 = arith.constant 0 : i32
    return %arg1, %arg3 : i32, i32
  }
  func.func @transform_1(%arg0: i32, %arg1: i32, %arg2: i32, %arg3: i32) -> (i32, i32, i32) {
    %c0_i32 = arith.constant 0 : i32
    return %arg0, %arg3, %arg2 : i32, i32, i32
  }
  func.func @transform_2(%arg0: i32, %arg1: i32, %arg2: i32, %arg3: i32) -> (i32, i32, i32) {
    %c0_i32 = arith.constant 0 : i32
    %c0_i32_0 = arith.constant 0 : i32
    return %arg0, %c0_i32, %arg2 : i32, i32, i32
  }
  func.func @transform_3(%arg0: i32, %arg1: i32, %arg2: i32, %arg3: i32) -> (i32, i32, i32) {
    %c0_i32 = arith.constant 0 : i32
    return %arg0, %arg1, %arg2 : i32, i32, i32
  }
}

module attributes {stable_mosaic.version = 11 : i64} {
  func.func @_flash_attn_kernel(%arg0: i32, %arg1: i32, %arg2: i32, %arg3: memref<1x1x8x32xbf16, #tpu.memory_space<vmem>>, %arg4: memref<1x1x8x32xbf16, #tpu.memory_space<vmem>>, %arg5: memref<1x1x8x32xbf16, #tpu.memory_space<vmem>>, %arg6: memref<1x8x32xbf16, #tpu.memory_space<vmem>>, %arg7: memref<4x8x1xf32, #tpu.memory_space<vmem>>, %arg8: memref<4x8x1xf32, #tpu.memory_space<vmem>>, %arg9: memref<4x8x8xf32, #tpu.memory_space<vmem>>) attributes {dimension_semantics = [#tpu.dimension_semantics<parallel>, #tpu.dimension_semantics<parallel>, #tpu.dimension_semantics<arbitrary>], iteration_bounds = array<i64: 2, 1, 1>, scalar_prefetch = 0 : i64, scratch_operands = 3 : i64, tpu.core_type = #tpu.core_type<tc>, window_params = [{transform_indices = @transform_0, window_bounds = array<i64: 1, 1, 8, 32>}, {transform_indices = @transform_1, window_bounds = array<i64: 1, 1, 8, 32>}, {transform_indices = @transform_2, window_bounds = array<i64: 1, 1, 8, 32>}, {transform_indices = @transform_3, window_bounds = array<i64: 1, 8, 32>}]} {
    %c0_i32 = arith.constant 0 : i32
    %0 = arith.cmpi eq, %arg2, %c0_i32 : i32
    %1 = arith.extui %0 : i1 to i32
    %c0_i32_0 = arith.constant 0 : i32
    %2 = arith.cmpi ne, %1, %c0_i32_0 : i32
    scf.if %2 {
      %cst_131 = arith.constant 0xFF800000 : f32
      %162 = vector.broadcast %cst_131 : f32 to vector<4x8x1xf32>
      %c0_132 = arith.constant 0 : index
      %c0_133 = arith.constant 0 : index
      %c0_134 = arith.constant 0 : index
      %163 = vector.load %arg7[%c0_132, %c0_133, %c0_134] : memref<4x8x1xf32, #tpu.memory_space<vmem>>, vector<4x8x1xf32>
      tpu.vector_store %arg7[%c0_132, %c0_133, %c0_134], %162 {strides = array<i32>} : memref<4x8x1xf32, #tpu.memory_space<vmem>>, vector<4x8x1xf32>,
      %cst_135 = arith.constant 0.000000e+00 : f32
      %164 = vector.broadcast %cst_135 : f32 to vector<4x8x1xf32>
      %c0_136 = arith.constant 0 : index
      %c0_137 = arith.constant 0 : index
      %c0_138 = arith.constant 0 : index
      %165 = vector.load %arg8[%c0_136, %c0_137, %c0_138] : memref<4x8x1xf32, #tpu.memory_space<vmem>>, vector<4x8x1xf32>
      tpu.vector_store %arg8[%c0_136, %c0_137, %c0_138], %164 {strides = array<i32>} : memref<4x8x1xf32, #tpu.memory_space<vmem>>, vector<4x8x1xf32>,
      %cst_139 = arith.constant 0.000000e+00 : f32
      %166 = vector.broadcast %cst_139 : f32 to vector<4x8x8xf32>
      %c0_140 = arith.constant 0 : index
      %c0_141 = arith.constant 0 : index
      %c0_142 = arith.constant 0 : index
      %167 = vector.load %arg9[%c0_140, %c0_141, %c0_142] : memref<4x8x8xf32, #tpu.memory_space<vmem>>, vector<4x8x8xf32>
      tpu.vector_store %arg9[%c0_140, %c0_141, %c0_142], %166 {strides = array<i32>} : memref<4x8x8xf32, #tpu.memory_space<vmem>>, vector<4x8x8xf32>,
    } else {
    }
    %c0 = arith.constant 0 : index
    %c0_1 = arith.constant 0 : index
    %c0_2 = arith.constant 0 : index
    %c0_3 = arith.constant 0 : index
    %3 = vector.load %arg3[%c0, %c0_1, %c0_2, %c0_3] : memref<1x1x8x32xbf16, #tpu.memory_space<vmem>>, vector<1x1x8x8xbf16>
    %4 = vector.shape_cast %3 : vector<1x1x8x8xbf16> to vector<8x8xbf16>
    %c0_4 = arith.constant 0 : index
    %c0_5 = arith.constant 0 : index
    %c0_6 = arith.constant 0 : index
    %c0_7 = arith.constant 0 : index
    %5 = vector.load %arg4[%c0_4, %c0_5, %c0_6, %c0_7] : memref<1x1x8x32xbf16, #tpu.memory_space<vmem>>, vector<1x1x8x8xbf16>
    %6 = vector.shape_cast %5 : vector<1x1x8x8xbf16> to vector<8x8xbf16>
    %c0_8 = arith.constant 0 : index
    %c0_9 = arith.constant 0 : index
    %c0_10 = arith.constant 0 : index
    %c0_11 = arith.constant 0 : index
    %7 = vector.load %arg5[%c0_8, %c0_9, %c0_10, %c0_11] : memref<1x1x8x32xbf16, #tpu.memory_space<vmem>>, vector<1x1x8x8xbf16>
    %8 = vector.shape_cast %7 : vector<1x1x8x8xbf16> to vector<8x8xbf16>
    %cst = arith.constant dense<0.000000e+00> : vector<8x8xf32>
    %9 = tpu.matmul %4, %6, %cst {dimension_numbers = #tpu.dot_dimension_numbers<[1], [1], [0], [0], [0, 0, 1, 0], [], []>} : vector<8x8xbf16>, vector<8x8xbf16>, vector<8x8xf32> -> vector<8x8xf32>
    %c0_12 = arith.constant 0 : index
    %c0_13 = arith.constant 0 : index
    %c0_14 = arith.constant 0 : index
    %10 = vector.load %arg7[%c0_12, %c0_13, %c0_14] : memref<4x8x1xf32, #tpu.memory_space<vmem>>, vector<1x8x1xf32>
    %11 = vector.shape_cast %10 : vector<1x8x1xf32> to vector<8x1xf32>
    %cst_15 = arith.constant dense<0xFF800000> : vector<8xf32>
    %12 = vector.multi_reduction <maximumf>, %9, %cst_15 [1] : vector<8x8xf32> to vector<8xf32>
    %13 = vector.shape_cast %12 : vector<8xf32> to vector<8x1xf32>
    %14 = arith.maximumf %11, %13 : vector<8x1xf32>
    %15 = arith.subf %11, %14 : vector<8x1xf32>
    %16 = math.exp %15 : vector<8x1xf32>
    %17 = vector.broadcast %14 : vector<8x1xf32> to vector<8x8xf32>
    %18 = arith.subf %9, %17 : vector<8x8xf32>
    %19 = math.exp %18 : vector<8x8xf32>
    %c0_16 = arith.constant 0 : index
    %c0_17 = arith.constant 0 : index
    %c0_18 = arith.constant 0 : index
    %20 = vector.load %arg8[%c0_16, %c0_17, %c0_18] : memref<4x8x1xf32, #tpu.memory_space<vmem>>, vector<1x8x1xf32>
    %21 = vector.shape_cast %20 : vector<1x8x1xf32> to vector<8x1xf32>
    %22 = arith.mulf %16, %21 : vector<8x1xf32>
    %cst_19 = arith.constant dense<0.000000e+00> : vector<8xf32>
    %23 = vector.multi_reduction <add>, %19, %cst_19 [1] : vector<8x8xf32> to vector<8xf32>
    %24 = vector.shape_cast %23 : vector<8xf32> to vector<8x1xf32>
    %25 = arith.addf %22, %24 : vector<8x1xf32>
    %c0_20 = arith.constant 0 : index
    %c0_21 = arith.constant 0 : index
    %c0_22 = arith.constant 0 : index
    %26 = vector.load %arg8[%c0_20, %c0_21, %c0_22] : memref<4x8x1xf32, #tpu.memory_space<vmem>>, vector<1x8x1xf32>
    %27 = vector.shape_cast %26 : vector<1x8x1xf32> to vector<8x1xf32>
    %28 = vector.shape_cast %25 : vector<8x1xf32> to vector<1x8x1xf32>
    tpu.vector_store %arg8[%c0_20, %c0_21, %c0_22], %28 {strides = array<i32>} : memref<4x8x1xf32, #tpu.memory_space<vmem>>, vector<1x8x1xf32>,
    %c0_23 = arith.constant 0 : index
    %c0_24 = arith.constant 0 : index
    %c0_25 = arith.constant 0 : index
    %29 = vector.load %arg9[%c0_23, %c0_24, %c0_25] : memref<4x8x8xf32, #tpu.memory_space<vmem>>, vector<1x8x8xf32>
    %30 = vector.shape_cast %29 : vector<1x8x8xf32> to vector<8x8xf32>
    %31 = vector.broadcast %16 : vector<8x1xf32> to vector<8x8xf32>
    %32 = arith.mulf %31, %30 : vector<8x8xf32>
    %33 = arith.truncf %19 : vector<8x8xf32> to vector<8x8xbf16>
    %cst_26 = arith.constant dense<0.000000e+00> : vector<8x8xf32>
    %34 = tpu.matmul %33, %8, %cst_26 {dimension_numbers = #tpu.dot_dimension_numbers<[1], [0], [0], [1], [0, 0, 1, 1], [], []>} : vector<8x8xbf16>, vector<8x8xbf16>, vector<8x8xf32> -> vector<8x8xf32>
    %35 = arith.addf %32, %34 : vector<8x8xf32>
    %c0_27 = arith.constant 0 : index
    %c0_28 = arith.constant 0 : index
    %c0_29 = arith.constant 0 : index
    %36 = vector.load %arg9[%c0_27, %c0_28, %c0_29] : memref<4x8x8xf32, #tpu.memory_space<vmem>>, vector<1x8x8xf32>
    %37 = vector.shape_cast %36 : vector<1x8x8xf32> to vector<8x8xf32>
    %38 = vector.shape_cast %35 : vector<8x8xf32> to vector<1x8x8xf32>
    tpu.vector_store %arg9[%c0_27, %c0_28, %c0_29], %38 {strides = array<i32>} : memref<4x8x8xf32, #tpu.memory_space<vmem>>, vector<1x8x8xf32>,
    %c0_30 = arith.constant 0 : index
    %c0_31 = arith.constant 0 : index
    %c0_32 = arith.constant 0 : index
    %39 = vector.load %arg7[%c0_30, %c0_31, %c0_32] : memref<4x8x1xf32, #tpu.memory_space<vmem>>, vector<1x8x1xf32>
    %40 = vector.shape_cast %39 : vector<1x8x1xf32> to vector<8x1xf32>
    %41 = vector.shape_cast %14 : vector<8x1xf32> to vector<1x8x1xf32>
    tpu.vector_store %arg7[%c0_30, %c0_31, %c0_32], %41 {strides = array<i32>} : memref<4x8x1xf32, #tpu.memory_space<vmem>>, vector<1x8x1xf32>,
    %c0_33 = arith.constant 0 : index
    %c0_34 = arith.constant 0 : index
    %c0_35 = arith.constant 0 : index
    %c8 = arith.constant 8 : index
    %42 = vector.load %arg3[%c0_33, %c0_34, %c0_35, %c8] : memref<1x1x8x32xbf16, #tpu.memory_space<vmem>>, vector<1x1x8x8xbf16>
    %43 = vector.shape_cast %42 : vector<1x1x8x8xbf16> to vector<8x8xbf16>
    %c0_36 = arith.constant 0 : index
    %c0_37 = arith.constant 0 : index
    %c0_38 = arith.constant 0 : index
    %c8_39 = arith.constant 8 : index
    %44 = vector.load %arg4[%c0_36, %c0_37, %c0_38, %c8_39] : memref<1x1x8x32xbf16, #tpu.memory_space<vmem>>, vector<1x1x8x8xbf16>
    %45 = vector.shape_cast %44 : vector<1x1x8x8xbf16> to vector<8x8xbf16>
    %c0_40 = arith.constant 0 : index
    %c0_41 = arith.constant 0 : index
    %c0_42 = arith.constant 0 : index
    %c8_43 = arith.constant 8 : index
    %46 = vector.load %arg5[%c0_40, %c0_41, %c0_42, %c8_43] : memref<1x1x8x32xbf16, #tpu.memory_space<vmem>>, vector<1x1x8x8xbf16>
    %47 = vector.shape_cast %46 : vector<1x1x8x8xbf16> to vector<8x8xbf16>
    %cst_44 = arith.constant dense<0.000000e+00> : vector<8x8xf32>
    %48 = tpu.matmul %43, %45, %cst_44 {dimension_numbers = #tpu.dot_dimension_numbers<[1], [1], [0], [0], [0, 0, 1, 0], [], []>} : vector<8x8xbf16>, vector<8x8xbf16>, vector<8x8xf32> -> vector<8x8xf32>
    %c1 = arith.constant 1 : index
    %c0_45 = arith.constant 0 : index
    %c0_46 = arith.constant 0 : index
    %49 = vector.load %arg7[%c1, %c0_45, %c0_46] : memref<4x8x1xf32, #tpu.memory_space<vmem>>, vector<1x8x1xf32>
    %50 = vector.shape_cast %49 : vector<1x8x1xf32> to vector<8x1xf32>
    %cst_47 = arith.constant dense<0xFF800000> : vector<8xf32>
    %51 = vector.multi_reduction <maximumf>, %48, %cst_47 [1] : vector<8x8xf32> to vector<8xf32>
    %52 = vector.shape_cast %51 : vector<8xf32> to vector<8x1xf32>
    %53 = arith.maximumf %50, %52 : vector<8x1xf32>
    %54 = arith.subf %50, %53 : vector<8x1xf32>
    %55 = math.exp %54 : vector<8x1xf32>
    %56 = vector.broadcast %53 : vector<8x1xf32> to vector<8x8xf32>
    %57 = arith.subf %48, %56 : vector<8x8xf32>
    %58 = math.exp %57 : vector<8x8xf32>
    %c1_48 = arith.constant 1 : index
    %c0_49 = arith.constant 0 : index
    %c0_50 = arith.constant 0 : index
    %59 = vector.load %arg8[%c1_48, %c0_49, %c0_50] : memref<4x8x1xf32, #tpu.memory_space<vmem>>, vector<1x8x1xf32>
    %60 = vector.shape_cast %59 : vector<1x8x1xf32> to vector<8x1xf32>
    %61 = arith.mulf %55, %60 : vector<8x1xf32>
    %cst_51 = arith.constant dense<0.000000e+00> : vector<8xf32>
    %62 = vector.multi_reduction <add>, %58, %cst_51 [1] : vector<8x8xf32> to vector<8xf32>
    %63 = vector.shape_cast %62 : vector<8xf32> to vector<8x1xf32>
    %64 = arith.addf %61, %63 : vector<8x1xf32>
    %c1_52 = arith.constant 1 : index
    %c0_53 = arith.constant 0 : index
    %c0_54 = arith.constant 0 : index
    %65 = vector.load %arg8[%c1_52, %c0_53, %c0_54] : memref<4x8x1xf32, #tpu.memory_space<vmem>>, vector<1x8x1xf32>
    %66 = vector.shape_cast %65 : vector<1x8x1xf32> to vector<8x1xf32>
    %67 = vector.shape_cast %64 : vector<8x1xf32> to vector<1x8x1xf32>
    tpu.vector_store %arg8[%c1_52, %c0_53, %c0_54], %67 {strides = array<i32>} : memref<4x8x1xf32, #tpu.memory_space<vmem>>, vector<1x8x1xf32>,
    %c1_55 = arith.constant 1 : index
    %c0_56 = arith.constant 0 : index
    %c0_57 = arith.constant 0 : index
    %68 = vector.load %arg9[%c1_55, %c0_56, %c0_57] : memref<4x8x8xf32, #tpu.memory_space<vmem>>, vector<1x8x8xf32>
    %69 = vector.shape_cast %68 : vector<1x8x8xf32> to vector<8x8xf32>
    %70 = vector.broadcast %55 : vector<8x1xf32> to vector<8x8xf32>
    %71 = arith.mulf %70, %69 : vector<8x8xf32>
    %72 = arith.truncf %58 : vector<8x8xf32> to vector<8x8xbf16>
    %cst_58 = arith.constant dense<0.000000e+00> : vector<8x8xf32>
    %73 = tpu.matmul %72, %47, %cst_58 {dimension_numbers = #tpu.dot_dimension_numbers<[1], [0], [0], [1], [0, 0, 1, 1], [], []>} : vector<8x8xbf16>, vector<8x8xbf16>, vector<8x8xf32> -> vector<8x8xf32>
    %74 = arith.addf %71, %73 : vector<8x8xf32>
    %c1_59 = arith.constant 1 : index
    %c0_60 = arith.constant 0 : index
    %c0_61 = arith.constant 0 : index
    %75 = vector.load %arg9[%c1_59, %c0_60, %c0_61] : memref<4x8x8xf32, #tpu.memory_space<vmem>>, vector<1x8x8xf32>
    %76 = vector.shape_cast %75 : vector<1x8x8xf32> to vector<8x8xf32>
    %77 = vector.shape_cast %74 : vector<8x8xf32> to vector<1x8x8xf32>
    tpu.vector_store %arg9[%c1_59, %c0_60, %c0_61], %77 {strides = array<i32>} : memref<4x8x8xf32, #tpu.memory_space<vmem>>, vector<1x8x8xf32>,
    %c1_62 = arith.constant 1 : index
    %c0_63 = arith.constant 0 : index
    %c0_64 = arith.constant 0 : index
    %78 = vector.load %arg7[%c1_62, %c0_63, %c0_64] : memref<4x8x1xf32, #tpu.memory_space<vmem>>, vector<1x8x1xf32>
    %79 = vector.shape_cast %78 : vector<1x8x1xf32> to vector<8x1xf32>
    %80 = vector.shape_cast %53 : vector<8x1xf32> to vector<1x8x1xf32>
    tpu.vector_store %arg7[%c1_62, %c0_63, %c0_64], %80 {strides = array<i32>} : memref<4x8x1xf32, #tpu.memory_space<vmem>>, vector<1x8x1xf32>,
    %c0_65 = arith.constant 0 : index
    %c0_66 = arith.constant 0 : index
    %c0_67 = arith.constant 0 : index
    %c16 = arith.constant 16 : index
    %81 = vector.load %arg3[%c0_65, %c0_66, %c0_67, %c16] : memref<1x1x8x32xbf16, #tpu.memory_space<vmem>>, vector<1x1x8x8xbf16>
    %82 = vector.shape_cast %81 : vector<1x1x8x8xbf16> to vector<8x8xbf16>
    %c0_68 = arith.constant 0 : index
    %c0_69 = arith.constant 0 : index
    %c0_70 = arith.constant 0 : index
    %c16_71 = arith.constant 16 : index
    %83 = vector.load %arg4[%c0_68, %c0_69, %c0_70, %c16_71] : memref<1x1x8x32xbf16, #tpu.memory_space<vmem>>, vector<1x1x8x8xbf16>
    %84 = vector.shape_cast %83 : vector<1x1x8x8xbf16> to vector<8x8xbf16>
    %c0_72 = arith.constant 0 : index
    %c0_73 = arith.constant 0 : index
    %c0_74 = arith.constant 0 : index
    %c16_75 = arith.constant 16 : index
    %85 = vector.load %arg5[%c0_72, %c0_73, %c0_74, %c16_75] : memref<1x1x8x32xbf16, #tpu.memory_space<vmem>>, vector<1x1x8x8xbf16>
    %86 = vector.shape_cast %85 : vector<1x1x8x8xbf16> to vector<8x8xbf16>
    %cst_76 = arith.constant dense<0.000000e+00> : vector<8x8xf32>
    %87 = tpu.matmul %82, %84, %cst_76 {dimension_numbers = #tpu.dot_dimension_numbers<[1], [1], [0], [0], [0, 0, 1, 0], [], []>} : vector<8x8xbf16>, vector<8x8xbf16>, vector<8x8xf32> -> vector<8x8xf32>
    %c2 = arith.constant 2 : index
    %c0_77 = arith.constant 0 : index
    %c0_78 = arith.constant 0 : index
    %88 = vector.load %arg7[%c2, %c0_77, %c0_78] : memref<4x8x1xf32, #tpu.memory_space<vmem>>, vector<1x8x1xf32>
    %89 = vector.shape_cast %88 : vector<1x8x1xf32> to vector<8x1xf32>
    %cst_79 = arith.constant dense<0xFF800000> : vector<8xf32>
    %90 = vector.multi_reduction <maximumf>, %87, %cst_79 [1] : vector<8x8xf32> to vector<8xf32>
    %91 = vector.shape_cast %90 : vector<8xf32> to vector<8x1xf32>
    %92 = arith.maximumf %89, %91 : vector<8x1xf32>
    %93 = arith.subf %89, %92 : vector<8x1xf32>
    %94 = math.exp %93 : vector<8x1xf32>
    %95 = vector.broadcast %92 : vector<8x1xf32> to vector<8x8xf32>
    %96 = arith.subf %87, %95 : vector<8x8xf32>
    %97 = math.exp %96 : vector<8x8xf32>
    %c2_80 = arith.constant 2 : index
    %c0_81 = arith.constant 0 : index
    %c0_82 = arith.constant 0 : index
    %98 = vector.load %arg8[%c2_80, %c0_81, %c0_82] : memref<4x8x1xf32, #tpu.memory_space<vmem>>, vector<1x8x1xf32>
    %99 = vector.shape_cast %98 : vector<1x8x1xf32> to vector<8x1xf32>
    %100 = arith.mulf %94, %99 : vector<8x1xf32>
    %cst_83 = arith.constant dense<0.000000e+00> : vector<8xf32>
    %101 = vector.multi_reduction <add>, %97, %cst_83 [1] : vector<8x8xf32> to vector<8xf32>
    %102 = vector.shape_cast %101 : vector<8xf32> to vector<8x1xf32>
    %103 = arith.addf %100, %102 : vector<8x1xf32>
    %c2_84 = arith.constant 2 : index
    %c0_85 = arith.constant 0 : index
    %c0_86 = arith.constant 0 : index
    %104 = vector.load %arg8[%c2_84, %c0_85, %c0_86] : memref<4x8x1xf32, #tpu.memory_space<vmem>>, vector<1x8x1xf32>
    %105 = vector.shape_cast %104 : vector<1x8x1xf32> to vector<8x1xf32>
    %106 = vector.shape_cast %103 : vector<8x1xf32> to vector<1x8x1xf32>
    tpu.vector_store %arg8[%c2_84, %c0_85, %c0_86], %106 {strides = array<i32>} : memref<4x8x1xf32, #tpu.memory_space<vmem>>, vector<1x8x1xf32>,
    %c2_87 = arith.constant 2 : index
    %c0_88 = arith.constant 0 : index
    %c0_89 = arith.constant 0 : index
    %107 = vector.load %arg9[%c2_87, %c0_88, %c0_89] : memref<4x8x8xf32, #tpu.memory_space<vmem>>, vector<1x8x8xf32>
    %108 = vector.shape_cast %107 : vector<1x8x8xf32> to vector<8x8xf32>
    %109 = vector.broadcast %94 : vector<8x1xf32> to vector<8x8xf32>
    %110 = arith.mulf %109, %108 : vector<8x8xf32>
    %111 = arith.truncf %97 : vector<8x8xf32> to vector<8x8xbf16>
    %cst_90 = arith.constant dense<0.000000e+00> : vector<8x8xf32>
    %112 = tpu.matmul %111, %86, %cst_90 {dimension_numbers = #tpu.dot_dimension_numbers<[1], [0], [0], [1], [0, 0, 1, 1], [], []>} : vector<8x8xbf16>, vector<8x8xbf16>, vector<8x8xf32> -> vector<8x8xf32>
    %113 = arith.addf %110, %112 : vector<8x8xf32>
    %c2_91 = arith.constant 2 : index
    %c0_92 = arith.constant 0 : index
    %c0_93 = arith.constant 0 : index
    %114 = vector.load %arg9[%c2_91, %c0_92, %c0_93] : memref<4x8x8xf32, #tpu.memory_space<vmem>>, vector<1x8x8xf32>
    %115 = vector.shape_cast %114 : vector<1x8x8xf32> to vector<8x8xf32>
    %116 = vector.shape_cast %113 : vector<8x8xf32> to vector<1x8x8xf32>
    tpu.vector_store %arg9[%c2_91, %c0_92, %c0_93], %116 {strides = array<i32>} : memref<4x8x8xf32, #tpu.memory_space<vmem>>, vector<1x8x8xf32>,
    %c2_94 = arith.constant 2 : index
    %c0_95 = arith.constant 0 : index
    %c0_96 = arith.constant 0 : index
    %117 = vector.load %arg7[%c2_94, %c0_95, %c0_96] : memref<4x8x1xf32, #tpu.memory_space<vmem>>, vector<1x8x1xf32>
    %118 = vector.shape_cast %117 : vector<1x8x1xf32> to vector<8x1xf32>
    %119 = vector.shape_cast %92 : vector<8x1xf32> to vector<1x8x1xf32>
    tpu.vector_store %arg7[%c2_94, %c0_95, %c0_96], %119 {strides = array<i32>} : memref<4x8x1xf32, #tpu.memory_space<vmem>>, vector<1x8x1xf32>,
    %c0_97 = arith.constant 0 : index
    %c0_98 = arith.constant 0 : index
    %c0_99 = arith.constant 0 : index
    %c24 = arith.constant 24 : index
    %120 = vector.load %arg3[%c0_97, %c0_98, %c0_99, %c24] : memref<1x1x8x32xbf16, #tpu.memory_space<vmem>>, vector<1x1x8x8xbf16>
    %121 = vector.shape_cast %120 : vector<1x1x8x8xbf16> to vector<8x8xbf16>
    %c0_100 = arith.constant 0 : index
    %c0_101 = arith.constant 0 : index
    %c0_102 = arith.constant 0 : index
    %c24_103 = arith.constant 24 : index
    %122 = vector.load %arg4[%c0_100, %c0_101, %c0_102, %c24_103] : memref<1x1x8x32xbf16, #tpu.memory_space<vmem>>, vector<1x1x8x8xbf16>
    %123 = vector.shape_cast %122 : vector<1x1x8x8xbf16> to vector<8x8xbf16>
    %c0_104 = arith.constant 0 : index
    %c0_105 = arith.constant 0 : index
    %c0_106 = arith.constant 0 : index
    %c24_107 = arith.constant 24 : index
    %124 = vector.load %arg5[%c0_104, %c0_105, %c0_106, %c24_107] : memref<1x1x8x32xbf16, #tpu.memory_space<vmem>>, vector<1x1x8x8xbf16>
    %125 = vector.shape_cast %124 : vector<1x1x8x8xbf16> to vector<8x8xbf16>
    %cst_108 = arith.constant dense<0.000000e+00> : vector<8x8xf32>
    %126 = tpu.matmul %121, %123, %cst_108 {dimension_numbers = #tpu.dot_dimension_numbers<[1], [1], [0], [0], [0, 0, 1, 0], [], []>} : vector<8x8xbf16>, vector<8x8xbf16>, vector<8x8xf32> -> vector<8x8xf32>
    %c3 = arith.constant 3 : index
    %c0_109 = arith.constant 0 : index
    %c0_110 = arith.constant 0 : index
    %127 = vector.load %arg7[%c3, %c0_109, %c0_110] : memref<4x8x1xf32, #tpu.memory_space<vmem>>, vector<1x8x1xf32>
    %128 = vector.shape_cast %127 : vector<1x8x1xf32> to vector<8x1xf32>
    %cst_111 = arith.constant dense<0xFF800000> : vector<8xf32>
    %129 = vector.multi_reduction <maximumf>, %126, %cst_111 [1] : vector<8x8xf32> to vector<8xf32>
    %130 = vector.shape_cast %129 : vector<8xf32> to vector<8x1xf32>
    %131 = arith.maximumf %128, %130 : vector<8x1xf32>
    %132 = arith.subf %128, %131 : vector<8x1xf32>
    %133 = math.exp %132 : vector<8x1xf32>
    %134 = vector.broadcast %131 : vector<8x1xf32> to vector<8x8xf32>
    %135 = arith.subf %126, %134 : vector<8x8xf32>
    %136 = math.exp %135 : vector<8x8xf32>
    %c3_112 = arith.constant 3 : index
    %c0_113 = arith.constant 0 : index
    %c0_114 = arith.constant 0 : index
    %137 = vector.load %arg8[%c3_112, %c0_113, %c0_114] : memref<4x8x1xf32, #tpu.memory_space<vmem>>, vector<1x8x1xf32>
    %138 = vector.shape_cast %137 : vector<1x8x1xf32> to vector<8x1xf32>
    %139 = arith.mulf %133, %138 : vector<8x1xf32>
    %cst_115 = arith.constant dense<0.000000e+00> : vector<8xf32>
    %140 = vector.multi_reduction <add>, %136, %cst_115 [1] : vector<8x8xf32> to vector<8xf32>
    %141 = vector.shape_cast %140 : vector<8xf32> to vector<8x1xf32>
    %142 = arith.addf %139, %141 : vector<8x1xf32>
    %c3_116 = arith.constant 3 : index
    %c0_117 = arith.constant 0 : index
    %c0_118 = arith.constant 0 : index
    %143 = vector.load %arg8[%c3_116, %c0_117, %c0_118] : memref<4x8x1xf32, #tpu.memory_space<vmem>>, vector<1x8x1xf32>
    %144 = vector.shape_cast %143 : vector<1x8x1xf32> to vector<8x1xf32>
    %145 = vector.shape_cast %142 : vector<8x1xf32> to vector<1x8x1xf32>
    tpu.vector_store %arg8[%c3_116, %c0_117, %c0_118], %145 {strides = array<i32>} : memref<4x8x1xf32, #tpu.memory_space<vmem>>, vector<1x8x1xf32>,
    %c3_119 = arith.constant 3 : index
    %c0_120 = arith.constant 0 : index
    %c0_121 = arith.constant 0 : index
    %146 = vector.load %arg9[%c3_119, %c0_120, %c0_121] : memref<4x8x8xf32, #tpu.memory_space<vmem>>, vector<1x8x8xf32>
    %147 = vector.shape_cast %146 : vector<1x8x8xf32> to vector<8x8xf32>
    %148 = vector.broadcast %133 : vector<8x1xf32> to vector<8x8xf32>
    %149 = arith.mulf %148, %147 : vector<8x8xf32>
    %150 = arith.truncf %136 : vector<8x8xf32> to vector<8x8xbf16>
    %cst_122 = arith.constant dense<0.000000e+00> : vector<8x8xf32>
    %151 = tpu.matmul %150, %125, %cst_122 {dimension_numbers = #tpu.dot_dimension_numbers<[1], [0], [0], [1], [0, 0, 1, 1], [], []>} : vector<8x8xbf16>, vector<8x8xbf16>, vector<8x8xf32> -> vector<8x8xf32>
    %152 = arith.addf %149, %151 : vector<8x8xf32>
    %c3_123 = arith.constant 3 : index
    %c0_124 = arith.constant 0 : index
    %c0_125 = arith.constant 0 : index
    %153 = vector.load %arg9[%c3_123, %c0_124, %c0_125] : memref<4x8x8xf32, #tpu.memory_space<vmem>>, vector<1x8x8xf32>
    %154 = vector.shape_cast %153 : vector<1x8x8xf32> to vector<8x8xf32>
    %155 = vector.shape_cast %152 : vector<8x8xf32> to vector<1x8x8xf32>
    tpu.vector_store %arg9[%c3_123, %c0_124, %c0_125], %155 {strides = array<i32>} : memref<4x8x8xf32, #tpu.memory_space<vmem>>, vector<1x8x8xf32>,
    %c3_126 = arith.constant 3 : index
    %c0_127 = arith.constant 0 : index
    %c0_128 = arith.constant 0 : index
    %156 = vector.load %arg7[%c3_126, %c0_127, %c0_128] : memref<4x8x1xf32, #tpu.memory_space<vmem>>, vector<1x8x1xf32>
    %157 = vector.shape_cast %156 : vector<1x8x1xf32> to vector<8x1xf32>
    %158 = vector.shape_cast %131 : vector<8x1xf32> to vector<1x8x1xf32>
    tpu.vector_store %arg7[%c3_126, %c0_127, %c0_128], %158 {strides = array<i32>} : memref<4x8x1xf32, #tpu.memory_space<vmem>>, vector<1x8x1xf32>,
    %c0_i32_129 = arith.constant 0 : i32
    %159 = arith.cmpi eq, %arg2, %c0_i32_129 : i32
    %160 = arith.extui %159 : i1 to i32
    %c0_i32_130 = arith.constant 0 : i32
    %161 = arith.cmpi ne, %160, %c0_i32_130 : i32
    scf.if %161 {
      %c0_131 = arith.constant 0 : index
      %c0_132 = arith.constant 0 : index
      %c0_133 = arith.constant 0 : index
      %162 = vector.load %arg8[%c0_131, %c0_132, %c0_133] : memref<4x8x1xf32, #tpu.memory_space<vmem>>, vector<1x8x1xf32>
      %163 = vector.shape_cast %162 : vector<1x8x1xf32> to vector<8x1xf32>
      %164 = tpu.reciprocal %163 {approx = true} : vector<8x1xf32> -> vector<8x1xf32>
      %c0_134 = arith.constant 0 : index
      %c0_135 = arith.constant 0 : index
      %c0_136 = arith.constant 0 : index
      %165 = vector.load %arg9[%c0_134, %c0_135, %c0_136] : memref<4x8x8xf32, #tpu.memory_space<vmem>>, vector<1x8x8xf32>
      %166 = vector.shape_cast %165 : vector<1x8x8xf32> to vector<8x8xf32>
      %167 = vector.broadcast %164 : vector<8x1xf32> to vector<8x8xf32>
      %168 = arith.mulf %166, %167 : vector<8x8xf32>
      %169 = arith.truncf %168 : vector<8x8xf32> to vector<8x8xbf16>
      %c0_137 = arith.constant 0 : index
      %c0_138 = arith.constant 0 : index
      %c0_139 = arith.constant 0 : index
      %170 = vector.load %arg6[%c0_137, %c0_138, %c0_139] : memref<1x8x32xbf16, #tpu.memory_space<vmem>>, vector<1x8x8xbf16>
      %171 = vector.shape_cast %170 : vector<1x8x8xbf16> to vector<8x8xbf16>
      %172 = vector.shape_cast %169 : vector<8x8xbf16> to vector<1x8x8xbf16>
      tpu.vector_store %arg6[%c0_137, %c0_138, %c0_139], %172 {strides = array<i32>} : memref<1x8x32xbf16, #tpu.memory_space<vmem>>, vector<1x8x8xbf16>,
      %c1_140 = arith.constant 1 : index
      %c0_141 = arith.constant 0 : index
      %c0_142 = arith.constant 0 : index
      %173 = vector.load %arg8[%c1_140, %c0_141, %c0_142] : memref<4x8x1xf32, #tpu.memory_space<vmem>>, vector<1x8x1xf32>
      %174 = vector.shape_cast %173 : vector<1x8x1xf32> to vector<8x1xf32>
      %175 = tpu.reciprocal %174 {approx = true} : vector<8x1xf32> -> vector<8x1xf32>
      %c1_143 = arith.constant 1 : index
      %c0_144 = arith.constant 0 : index
      %c0_145 = arith.constant 0 : index
      %176 = vector.load %arg9[%c1_143, %c0_144, %c0_145] : memref<4x8x8xf32, #tpu.memory_space<vmem>>, vector<1x8x8xf32>
      %177 = vector.shape_cast %176 : vector<1x8x8xf32> to vector<8x8xf32>
      %178 = vector.broadcast %175 : vector<8x1xf32> to vector<8x8xf32>
      %179 = arith.mulf %177, %178 : vector<8x8xf32>
      %180 = arith.truncf %179 : vector<8x8xf32> to vector<8x8xbf16>
      %c0_146 = arith.constant 0 : index
      %c0_147 = arith.constant 0 : index
      %c8_148 = arith.constant 8 : index
      %181 = vector.load %arg6[%c0_146, %c0_147, %c8_148] : memref<1x8x32xbf16, #tpu.memory_space<vmem>>, vector<1x8x8xbf16>
      %182 = vector.shape_cast %181 : vector<1x8x8xbf16> to vector<8x8xbf16>
      %183 = vector.shape_cast %180 : vector<8x8xbf16> to vector<1x8x8xbf16>
      tpu.vector_store %arg6[%c0_146, %c0_147, %c8_148], %183 {strides = array<i32>} : memref<1x8x32xbf16, #tpu.memory_space<vmem>>, vector<1x8x8xbf16>,
      %c2_149 = arith.constant 2 : index
      %c0_150 = arith.constant 0 : index
      %c0_151 = arith.constant 0 : index
      %184 = vector.load %arg8[%c2_149, %c0_150, %c0_151] : memref<4x8x1xf32, #tpu.memory_space<vmem>>, vector<1x8x1xf32>
      %185 = vector.shape_cast %184 : vector<1x8x1xf32> to vector<8x1xf32>
      %186 = tpu.reciprocal %185 {approx = true} : vector<8x1xf32> -> vector<8x1xf32>
      %c2_152 = arith.constant 2 : index
      %c0_153 = arith.constant 0 : index
      %c0_154 = arith.constant 0 : index
      %187 = vector.load %arg9[%c2_152, %c0_153, %c0_154] : memref<4x8x8xf32, #tpu.memory_space<vmem>>, vector<1x8x8xf32>
      %188 = vector.shape_cast %187 : vector<1x8x8xf32> to vector<8x8xf32>
      %189 = vector.broadcast %186 : vector<8x1xf32> to vector<8x8xf32>
      %190 = arith.mulf %188, %189 : vector<8x8xf32>
      %191 = arith.truncf %190 : vector<8x8xf32> to vector<8x8xbf16>
      %c0_155 = arith.constant 0 : index
      %c0_156 = arith.constant 0 : index
      %c16_157 = arith.constant 16 : index
      %192 = vector.load %arg6[%c0_155, %c0_156, %c16_157] : memref<1x8x32xbf16, #tpu.memory_space<vmem>>, vector<1x8x8xbf16>
      %193 = vector.shape_cast %192 : vector<1x8x8xbf16> to vector<8x8xbf16>
      %194 = vector.shape_cast %191 : vector<8x8xbf16> to vector<1x8x8xbf16>
      tpu.vector_store %arg6[%c0_155, %c0_156, %c16_157], %194 {strides = array<i32>} : memref<1x8x32xbf16, #tpu.memory_space<vmem>>, vector<1x8x8xbf16>,
      %c3_158 = arith.constant 3 : index
      %c0_159 = arith.constant 0 : index
      %c0_160 = arith.constant 0 : index
      %195 = vector.load %arg8[%c3_158, %c0_159, %c0_160] : memref<4x8x1xf32, #tpu.memory_space<vmem>>, vector<1x8x1xf32>
      %196 = vector.shape_cast %195 : vector<1x8x1xf32> to vector<8x1xf32>
      %197 = tpu.reciprocal %196 {approx = true} : vector<8x1xf32> -> vector<8x1xf32>
      %c3_161 = arith.constant 3 : index
      %c0_162 = arith.constant 0 : index
      %c0_163 = arith.constant 0 : index
      %198 = vector.load %arg9[%c3_161, %c0_162, %c0_163] : memref<4x8x8xf32, #tpu.memory_space<vmem>>, vector<1x8x8xf32>
      %199 = vector.shape_cast %198 : vector<1x8x8xf32> to vector<8x8xf32>
      %200 = vector.broadcast %197 : vector<8x1xf32> to vector<8x8xf32>
      %201 = arith.mulf %199, %200 : vector<8x8xf32>
      %202 = arith.truncf %201 : vector<8x8xf32> to vector<8x8xbf16>
      %c0_164 = arith.constant 0 : index
      %c0_165 = arith.constant 0 : index
      %c24_166 = arith.constant 24 : index
      %203 = vector.load %arg6[%c0_164, %c0_165, %c24_166] : memref<1x8x32xbf16, #tpu.memory_space<vmem>>, vector<1x8x8xbf16>
      %204 = vector.shape_cast %203 : vector<1x8x8xbf16> to vector<8x8xbf16>
      %205 = vector.shape_cast %202 : vector<8x8xbf16> to vector<1x8x8xbf16>
      tpu.vector_store %arg6[%c0_164, %c0_165, %c24_166], %205 {strides = array<i32>} : memref<1x8x32xbf16, #tpu.memory_space<vmem>>, vector<1x8x8xbf16>,
    } else {
    }
    return
  }
  func.func @transform_0(%arg0: i32, %arg1: i32, %arg2: i32) -> (i32, i32, i32, i32) {
    %c0_i32 = arith.constant 0 : i32
    %c0_i32_0 = arith.constant 0 : i32
    %c0_i32_1 = arith.constant 0 : i32
    return %c0_i32, %arg0, %arg1, %c0_i32_0 : i32, i32, i32, i32
  }
  func.func @transform_1(%arg0: i32, %arg1: i32, %arg2: i32) -> (i32, i32, i32, i32) {
    %c0_i32 = arith.constant 0 : i32
    %c0_i32_0 = arith.constant 0 : i32
    %c0_i32_1 = arith.constant 0 : i32
    return %c0_i32, %arg0, %arg2, %c0_i32_0 : i32, i32, i32, i32
  }
  func.func @transform_2(%arg0: i32, %arg1: i32, %arg2: i32) -> (i32, i32, i32, i32) {
    %c1_i32 = arith.constant 1 : i32
    %c0_i32 = arith.constant 0 : i32
    %c0_i32_0 = arith.constant 0 : i32
    return %c1_i32, %arg0, %arg2, %c0_i32 : i32, i32, i32, i32
  }
  func.func @transform_3(%arg0: i32, %arg1: i32, %arg2: i32) -> (i32, i32, i32) {
    %c0_i32 = arith.constant 0 : i32
    %c0_i32_0 = arith.constant 0 : i32
    return %arg0, %arg1, %c0_i32 : i32, i32, i32
  }
}

module attributes {stable_mosaic.version = 11 : i64} {
  func.func @_matmul_kernel(%arg0: i32, %arg1: i32, %arg2: i32, %arg3: i32, %arg4: memref<16x32xbf16, #tpu.memory_space<vmem>>, %arg5: memref<1x32x64xbf16, #tpu.memory_space<vmem>>, %arg6: memref<1x1x64xbf16, #tpu.memory_space<vmem>>, %arg7: memref<1x16x64xbf16, #tpu.memory_space<vmem>>, %arg8: memref<16x64xf32, #tpu.memory_space<vmem>>) attributes {dimension_semantics = [#tpu.dimension_semantics<parallel>, #tpu.dimension_semantics<parallel>, #tpu.dimension_semantics<parallel>, #tpu.dimension_semantics<arbitrary>], iteration_bounds = array<i64: 1, 1, 1, 1>, scalar_prefetch = 0 : i64, scratch_operands = 1 : i64, tpu.core_type = #tpu.core_type<tc>, window_params = [{transform_indices = @transform_0, window_bounds = array<i64: 16, 32>}, {transform_indices = @transform_1, window_bounds = array<i64: 1, 32, 64>}, {transform_indices = @transform_2, window_bounds = array<i64: 1, 1, 64>}, {transform_indices = @transform_3, window_bounds = array<i64: 1, 16, 64>}]} {
    %c0_i32 = arith.constant 0 : i32
    %0 = arith.cmpi eq, %arg3, %c0_i32 : i32
    %1 = arith.extui %0 : i1 to i32
    %c0_i32_0 = arith.constant 0 : i32
    %2 = arith.cmpi ne, %1, %c0_i32_0 : i32
    scf.if %2 {
      %cst_11 = arith.constant 0.000000e+00 : f32
      %13 = vector.broadcast %cst_11 : f32 to vector<16x64xf32>
      %c0_12 = arith.constant 0 : index
      %c0_13 = arith.constant 0 : index
      %14 = vector.load %arg8[%c0_12, %c0_13] : memref<16x64xf32, #tpu.memory_space<vmem>>, vector<16x64xf32>
      tpu.vector_store %arg8[%c0_12, %c0_13], %13 {strides = array<i32>} : memref<16x64xf32, #tpu.memory_space<vmem>>, vector<16x64xf32>,
    } else {
    }
    %c0 = arith.constant 0 : index
    %c0_1 = arith.constant 0 : index
    %3 = vector.load %arg8[%c0, %c0_1] : memref<16x64xf32, #tpu.memory_space<vmem>>, vector<16x64xf32>
    %c0_2 = arith.constant 0 : index
    %c0_3 = arith.constant 0 : index
    %4 = vector.load %arg4[%c0_2, %c0_3] : memref<16x32xbf16, #tpu.memory_space<vmem>>, vector<16x32xbf16>
    %c0_4 = arith.constant 0 : index
    %c0_5 = arith.constant 0 : index
    %c0_6 = arith.constant 0 : index
    %5 = vector.load %arg5[%c0_4, %c0_5, %c0_6] : memref<1x32x64xbf16, #tpu.memory_space<vmem>>, vector<1x32x64xbf16>
    %6 = vector.shape_cast %5 : vector<1x32x64xbf16> to vector<32x64xbf16>
    %cst = arith.constant dense<0.000000e+00> : vector<16x64xf32>
    %7 = tpu.matmul %4, %6, %cst {dimension_numbers = #tpu.dot_dimension_numbers<[1], [0], [0], [1], [0, 0, 1, 1], [], []>} : vector<16x32xbf16>, vector<32x64xbf16>, vector<16x64xf32> -> vector<16x64xf32>
    %8 = arith.addf %3, %7 : vector<16x64xf32>
    %c0_7 = arith.constant 0 : index
    %c0_8 = arith.constant 0 : index
    %9 = vector.load %arg8[%c0_7, %c0_8] : memref<16x64xf32, #tpu.memory_space<vmem>>, vector<16x64xf32>
    tpu.vector_store %arg8[%c0_7, %c0_8], %8 {strides = array<i32>} : memref<16x64xf32, #tpu.memory_space<vmem>>, vector<16x64xf32>,
    %c0_i32_9 = arith.constant 0 : i32
    %10 = arith.cmpi eq, %arg3, %c0_i32_9 : i32
    %11 = arith.extui %10 : i1 to i32
    %c0_i32_10 = arith.constant 0 : i32
    %12 = arith.cmpi ne, %11, %c0_i32_10 : i32
    scf.if %12 {
      %c0_11 = arith.constant 0 : index
      %c0_12 = arith.constant 0 : index
      %13 = vector.load %arg8[%c0_11, %c0_12] : memref<16x64xf32, #tpu.memory_space<vmem>>, vector<16x64xf32>
      %c0_13 = arith.constant 0 : index
      %c0_14 = arith.constant 0 : index
      %c0_15 = arith.constant 0 : index
      %14 = vector.load %arg6[%c0_13, %c0_14, %c0_15] : memref<1x1x64xbf16, #tpu.memory_space<vmem>>, vector<1x1x64xbf16>
      %15 = vector.shape_cast %14 : vector<1x1x64xbf16> to vector<1x64xbf16>
      %16 = arith.extf %15 : vector<1x64xbf16> to vector<1x64xf32>
      %17 = vector.broadcast %16 : vector<1x64xf32> to vector<16x64xf32>
      %18 = arith.addf %13, %17 : vector<16x64xf32>
      %19 = arith.truncf %18 : vector<16x64xf32> to vector<16x64xbf16>
      %c0_16 = arith.constant 0 : index
      %c0_17 = arith.constant 0 : index
      %c0_18 = arith.constant 0 : index
      %20 = vector.load %arg7[%c0_16, %c0_17, %c0_18] : memref<1x16x64xbf16, #tpu.memory_space<vmem>>, vector<1x16x64xbf16>
      %21 = vector.shape_cast %20 : vector<1x16x64xbf16> to vector<16x64xbf16>
      %22 = vector.shape_cast %19 : vector<16x64xbf16> to vector<1x16x64xbf16>
      tpu.vector_store %arg7[%c0_16, %c0_17, %c0_18], %22 {strides = array<i32>} : memref<1x16x64xbf16, #tpu.memory_space<vmem>>, vector<1x16x64xbf16>,
    } else {
    }
    return
  }
  func.func @transform_0(%arg0: i32, %arg1: i32, %arg2: i32, %arg3: i32) -> (i32, i32) {
    %c0_i32 = arith.constant 0 : i32
    return %arg1, %arg3 : i32, i32
  }
  func.func @transform_1(%arg0: i32, %arg1: i32, %arg2: i32, %arg3: i32) -> (i32, i32, i32) {
    %c0_i32 = arith.constant 0 : i32
    return %arg0, %arg3, %arg2 : i32, i32, i32
  }
  func.func @transform_2(%arg0: i32, %arg1: i32, %arg2: i32, %arg3: i32) -> (i32, i32, i32) {
    %c0_i32 = arith.constant 0 : i32
    %c0_i32_0 = arith.constant 0 : i32
    return %arg0, %c0_i32, %arg2 : i32, i32, i32
  }
  func.func @transform_3(%arg0: i32, %arg1: i32, %arg2: i32, %arg3: i32) -> (i32, i32, i32) {
    %c0_i32 = arith.constant 0 : i32
    return %arg0, %arg1, %arg2 : i32, i32, i32
  }
}

</mosaic_0001>

<llo_original>
// kernel: transformer_forward.32
$region0: #{transformer_forward.32}
  #allocation0 [shape = 'u32[]', space=smem, size = 0x4, offset = 0x4, fixed_abs, tag = 'smem constant byte address 0x4 - core index']
  #allocation1 [shape = 'u32[144,128]{1,0:T(1,128)}', space=vmem, size = 0x12000, scoped, tag = 'internal scratch']
  #allocation2 [shape = 'f32[16,64]{1,0:T(8,128)}', space=vmem, size = 0x2000, scoped, tag = 'scratch operand']
  %s0 = inlined_call_operand.vmem [shape: bf16[16,32], index: 0, kind: input, shape index: {}]
  %s1 = inlined_call_operand.vmem [shape: bf16[1,32,64], index: 1, kind: input, shape index: {}]
  %s2 = inlined_call_operand.vmem [shape: bf16[1,1,64], index: 2, kind: input, shape index: {}]
  %s3 = inlined_call_operand.vmem [shape: bf16[1,16,64], index: 3, kind: output, shape index: {}]
  %s4 = sld [smem:[#allocation0]]
  $region30: #{transformer_forward.32} parent=0
    _
  %s6 = ssub.s32 1, %s4
  %s7 = scalar_select 0, %s6, %s4
  // Predicated region
  $region2: #{transformer_forward.32} parent=0 // pred_check
    _
  $region3: #{transformer_forward.32} parent=0 // pred_check_branch
    %9 = sbr.rel (0) target = $region5
  $region4: #{transformer_forward.32} parent=0 // pred_region
    _
  $region5: #{transformer_forward.32} parent=0 // pred_fallthru
    _
  // Predicated region
  $region6: #{transformer_forward.32} parent=0 // pred_check
    _
  $region7: #{transformer_forward.32} parent=0 // pred_check_branch
    %11 = sbr.rel (0) target = $region9
  $region8: #{transformer_forward.32} parent=0 // pred_region
    _
  $region9: #{transformer_forward.32} parent=0 // pred_fallthru
    _
  // Predicated region
  $region10: #{transformer_forward.32} parent=0 // pred_check
    _
  $region11: #{transformer_forward.32} parent=0 // pred_check_branch
    %13 = sbr.rel (0) target = $region13
  $region12: #{transformer_forward.32} parent=0 // pred_region
    _
  $region13: #{transformer_forward.32} parent=0 // pred_fallthru
    _
  %p15 = scmp.eq.s32.totalorder 0, 0
  // Predicated region
  $region14: #{transformer_forward.32} parent=0 // pred_check
    %p16 = pneg %p15
  $region15: #{transformer_forward.32} parent=0 // pred_check_branch
    %18 = sbr.rel (%p16) target = $region17
  $region16: #{transformer_forward.32} parent=0 // pred_region
    %vm19 = vcmask 523264
    %20 = vst.msk [vmem:[#allocation2] sm:$0xff] %vm19, 0.0
    %21 = vst.msk [vmem:[#allocation2 + $0x8] sm:$0xff] %vm19, 0.0
  $region17: #{transformer_forward.32} parent=0 // pred_fallthru
    _
  %v22 = vld [vmem:[#allocation2] sm:$0xff]
  %v23 = vld [vmem:[#allocation2 + $0x8] sm:$0xff]
  %v24 = vld [vmem:[%s0] sm:$0xf]
  %v25 = vld [vmem:[%s0 + $0x4] sm:$0xf]
  %v26 = vld [vmem:[%s1] sm:$0xf]
  %v27 = vld [vmem:[%s1 + $0x4] sm:$0xf]
  %v28 = vld [vmem:[%s1 + $0x8] sm:$0xf]
  %v29 = vld [vmem:[%s1 + $0xc] sm:$0xf]
  %v32 = vunpack.c.l.b16 %v24
  %v33 = vunpack.c.l.b16 %v25
  %v34 = vpack.c.b16 %v33, %v32
  %v39 = vunpack.c.l.b16 %v26
  %v40 = vunpack.c.l.b16 %v27
  %v41 = vunpack.c.l.b16 %v28
  %v42 = vunpack.c.l.b16 %v29
  %v43 = vpack.c.b16 %v40, %v39
  %v44 = vpack.c.b16 %v42, %v41
  %vm47 = vcmask 261120
  %v49 = vsel %vm47, %v34, 0
  %51 = vmatprep.subr.bf16.mxu0 0
  %52 = vmatpush1.bf16.msra.mxu0 %v43
  %53 = vmatprep.subr.bf16.mxu0 0
  %54 = vmatpush1.bf16.msra.mxu0 %v44
  %55 = vmatprep.subr.bf16.mxu0 0
  %56 = vmatpush1.bf16.msra.mxu0 0
  %57 = vmatprep.subr.bf16.mxu0 0
  %58 = vmatpush1.bf16.msra.mxu0 0
  %59 = vmatprep.subr.bf16.mxu0 0
  %60 = vmatpush1.bf16.msra.mxu0 0
  %61 = vmatprep.subr.bf16.mxu0 0
  %62 = vmatpush1.bf16.msra.mxu0 0
  %63 = vmatprep.subr.bf16.mxu0 0
  %64 = vmatpush1.bf16.msra.mxu0 0
  %65 = vmatprep.subr.bf16.mxu0 0
  %66 = vmatpush1.bf16.msra.mxu0 0
  %67 = vmatprep.subr.bf16.mxu0 0
  %68 = vmatpush1.bf16.msra.mxu0 0
  %69 = vmatprep.subr.bf16.mxu0 0
  %70 = vmatpush1.bf16.msra.mxu0 0
  %71 = vmatprep.subr.bf16.mxu0 0
  %72 = vmatpush1.bf16.msra.mxu0 0
  %73 = vmatprep.subr.bf16.mxu0 0
  %74 = vmatpush1.bf16.msra.mxu0 0
  %75 = vmatprep.subr.bf16.mxu0 0
  %76 = vmatpush1.bf16.msra.mxu0 0
  %77 = vmatprep.subr.bf16.mxu0 0
  %78 = vmatpush1.bf16.msra.mxu0 0
  %79 = vmatprep.subr.bf16.mxu0 0
  %80 = vmatpush1.bf16.msra.mxu0 0
  %81 = vmatprep.subr.bf16.mxu0 0
  %82 = vmatpush1.bf16.msra.mxu0 0
  %83 = vmatprep.mubr.bf16.mxu0 0
  %84 = vmatmul.mubr.bf16.gmra.mrb[0].mxu0 %v49
  %v85 = vpop.f32.mrb[0].mxu0
  %v86 = vadd.f32 0.0, %v85
  %v87 = vpop.f32.mrb[0].mxu0
  %v88 = vpop.f32.mrb[0].mxu0
  %v89 = vadd.f32 0.0, %v88
  %v90 = vpop.f32.mrb[0].mxu0
  %91 = vdwg.mxu0
  %v92 = vadd.f32 %v22, %v86
  %v93 = vadd.f32 %v23, %v89
  %vm94 = vcmask 523264
  %95 = vst.msk [vmem:[#allocation2] sm:$0xff] %vm94, %v92
  %96 = vst.msk [vmem:[#allocation2 + $0x8] sm:$0xff] %vm94, %v93
  // Predicated region
  $region18: #{transformer_forward.32} parent=0 // pred_check
    %p97 = pneg %p15
  $region19: #{transformer_forward.32} parent=0 // pred_check_branch
    %99 = sbr.rel (%p97) target = $region21
  $region20: #{transformer_forward.32} parent=0 // pred_region
    %v100 = vld [vmem:[#allocation2] sm:$0xff]
    %v101 = vld [vmem:[#allocation2 + $0x8] sm:$0xff]
    %v102 = vld [vmem:[%s2] sm:$0x1]
    %v103 = vunpack.c.l.bf16 %v102
    %v104 = vlaneseq
    %v105 = vshrl.u32 %v104, 7
    %v106 = vsub.s32 0, %v105
    %v107 = vrot.slane %v103, %v106
    %v108 = vadd.f32 %v100, %v107
    %v109 = vadd.f32 %v101, %v107
    %v110 = vmax.f32 %v108, 0.0
    %v111 = vmax.f32 %v109, 0.0
    %v112 = vpack.c.bf16 %v111, %v110
    %v114 = vunpack.c.l.b16 %v112
    %v115 = vunpack.c.h.b16 %v112
    %v116 = vpack.c.b16 %v114, %v114
    %v117 = vpack.c.b16 %v115, %v115
    %vm120 = vcmask 519168
    %121 = vst.msk [vmem:[%s3] sm:$0xf] %vm120, %v116
    %122 = vst.msk [vmem:[%s3 + $0x4] sm:$0xf] %vm120, %v117
  $region21: #{transformer_forward.32} parent=0 // pred_fallthru
    _
  // Predicated region
  $region22: #{transformer_forward.32} parent=0 // pred_check
    _
  $region23: #{transformer_forward.32} parent=0 // pred_check_branch
    %124 = sbr.rel (0) target = $region25
  $region24: #{transformer_forward.32} parent=0 // pred_region
    _
  $region25: #{transformer_forward.32} parent=0 // pred_fallthru
    _
  // Predicated region
  $region26: #{transformer_forward.32} parent=0 // pred_check
    _
  $region27: #{transformer_forward.32} parent=0 // pred_check_branch
    %126 = sbr.rel (0) target = $region29
  $region28: #{transformer_forward.32} parent=0 // pred_region
    _
  $region29: #{transformer_forward.32} parent=0 // pred_fallthru
    _

// kernel: transformer_forward.31
$region0: #{transformer_forward.31}
  #allocation0 [shape = 'u32[]', space=smem, size = 0x4, offset = 0x4, fixed_abs, tag = 'smem constant byte address 0x4 - core index']
  #allocation1 [shape = 'u32[144,128]{1,0:T(1,128)}', space=vmem, size = 0x12000, scoped, tag = 'internal scratch']
  #allocation2 [shape = 'f32[16,32]{1,0:T(8,128)}', space=vmem, size = 0x2000, scoped, tag = 'scratch operand']
  %s0 = inlined_call_operand.vmem [shape: bf16[16,32], index: 0, kind: input, shape index: {}]
  %s1 = inlined_call_operand.vmem [shape: bf16[32,32], index: 1, kind: input, shape index: {}]
  %s2 = inlined_call_operand.vmem [shape: bf16[1,32], index: 2, kind: input, shape index: {}]
  %s3 = inlined_call_operand.vmem [shape: bf16[16,32], index: 3, kind: input, shape index: {}]
  %s4 = inlined_call_operand.vmem [shape: bf16[1,32], index: 4, kind: input, shape index: {}]
  %s5 = inlined_call_operand.vmem [shape: bf16[1,32], index: 5, kind: input, shape index: {}]
  %s6 = inlined_call_operand.vmem [shape: bf16[16,32], index: 6, kind: output, shape index: {}]
  %s7 = sld [smem:[#allocation0]]
  $region42: #{transformer_forward.31} parent=0
    _
  %s9 = ssub.s32 1, %s7
  %s10 = scalar_select 0, %s9, %s7
  // Predicated region
  $region2: #{transformer_forward.31} parent=0 // pred_check
    _
  $region3: #{transformer_forward.31} parent=0 // pred_check_branch
    %12 = sbr.rel (0) target = $region5
  $region4: #{transformer_forward.31} parent=0 // pred_region
    _
  $region5: #{transformer_forward.31} parent=0 // pred_fallthru
    _
  // Predicated region
  $region6: #{transformer_forward.31} parent=0 // pred_check
    _
  $region7: #{transformer_forward.31} parent=0 // pred_check_branch
    %14 = sbr.rel (0) target = $region9
  $region8: #{transformer_forward.31} parent=0 // pred_region
    _
  $region9: #{transformer_forward.31} parent=0 // pred_fallthru
    _
  // Predicated region
  $region10: #{transformer_forward.31} parent=0 // pred_check
    _
  $region11: #{transformer_forward.31} parent=0 // pred_check_branch
    %16 = sbr.rel (0) target = $region13
  $region12: #{transformer_forward.31} parent=0 // pred_region
    _
  $region13: #{transformer_forward.31} parent=0 // pred_fallthru
    _
  // Predicated region
  $region14: #{transformer_forward.31} parent=0 // pred_check
    _
  $region15: #{transformer_forward.31} parent=0 // pred_check_branch
    %18 = sbr.rel (0) target = $region17
  $region16: #{transformer_forward.31} parent=0 // pred_region
    _
  $region17: #{transformer_forward.31} parent=0 // pred_fallthru
    _
  // Predicated region
  $region18: #{transformer_forward.31} parent=0 // pred_check
    _
  $region19: #{transformer_forward.31} parent=0 // pred_check_branch
    %20 = sbr.rel (0) target = $region21
  $region20: #{transformer_forward.31} parent=0 // pred_region
    _
  $region21: #{transformer_forward.31} parent=0 // pred_fallthru
    _
  // Predicated region
  $region22: #{transformer_forward.31} parent=0 // pred_check
    _
  $region23: #{transformer_forward.31} parent=0 // pred_check_branch
    %22 = sbr.rel (0) target = $region25
  $region24: #{transformer_forward.31} parent=0 // pred_region
    _
  $region25: #{transformer_forward.31} parent=0 // pred_fallthru
    _
  %p24 = scmp.eq.s32.totalorder 0, 0
  // Predicated region
  $region26: #{transformer_forward.31} parent=0 // pred_check
    %p25 = pneg %p24
  $region27: #{transformer_forward.31} parent=0 // pred_check_branch
    %27 = sbr.rel (%p25) target = $region29
  $region28: #{transformer_forward.31} parent=0 // pred_region
    %vm28 = vcmask 261120
    %29 = vst.msk [vmem:[#allocation2] sm:$0xff] %vm28, 0.0
    %30 = vst.msk [vmem:[#allocation2 + $0x8] sm:$0xff] %vm28, 0.0
  $region29: #{transformer_forward.31} parent=0 // pred_fallthru
    _
  %v31 = vld [vmem:[#allocation2] sm:$0xff]
  %v32 = vld [vmem:[#allocation2 + $0x8] sm:$0xff]
  %v33 = vld [vmem:[%s0] sm:$0xf]
  %v34 = vld [vmem:[%s0 + $0x4] sm:$0xf]
  %v35 = vld [vmem:[%s1] sm:$0xf]
  %v36 = vld [vmem:[%s1 + $0x4] sm:$0xf]
  %v37 = vld [vmem:[%s1 + $0x8] sm:$0xf]
  %v38 = vld [vmem:[%s1 + $0xc] sm:$0xf]
  %v41 = vunpack.c.l.b16 %v33
  %v42 = vunpack.c.l.b16 %v34
  %v43 = vpack.c.b16 %v42, %v41
  %v48 = vunpack.c.l.b16 %v35
  %v49 = vunpack.c.l.b16 %v36
  %v50 = vunpack.c.l.b16 %v37
  %v51 = vunpack.c.l.b16 %v38
  %v52 = vpack.c.b16 %v49, %v48
  %v53 = vpack.c.b16 %v51, %v50
  %vm56 = vcmask 261120
  %v58 = vsel %vm56, %v43, 0
  %60 = vmatprep.subr.bf16.mxu0 0
  %61 = vmatpush1.bf16.msra.mxu0 %v52
  %62 = vmatprep.subr.bf16.mxu0 0
  %63 = vmatpush1.bf16.msra.mxu0 %v53
  %64 = vmatprep.subr.bf16.mxu0 0
  %65 = vmatpush1.bf16.msra.mxu0 0
  %66 = vmatprep.subr.bf16.mxu0 0
  %67 = vmatpush1.bf16.msra.mxu0 0
  %68 = vmatprep.subr.bf16.mxu0 0
  %69 = vmatpush1.bf16.msra.mxu0 0
  %70 = vmatprep.subr.bf16.mxu0 0
  %71 = vmatpush1.bf16.msra.mxu0 0
  %72 = vmatprep.subr.bf16.mxu0 0
  %73 = vmatpush1.bf16.msra.mxu0 0
  %74 = vmatprep.subr.bf16.mxu0 0
  %75 = vmatpush1.bf16.msra.mxu0 0
  %76 = vmatprep.subr.bf16.mxu0 0
  %77 = vmatpush1.bf16.msra.mxu0 0
  %78 = vmatprep.subr.bf16.mxu0 0
  %79 = vmatpush1.bf16.msra.mxu0 0
  %80 = vmatprep.subr.bf16.mxu0 0
  %81 = vmatpush1.bf16.msra.mxu0 0
  %82 = vmatprep.subr.bf16.mxu0 0
  %83 = vmatpush1.bf16.msra.mxu0 0
  %84 = vmatprep.subr.bf16.mxu0 0
  %85 = vmatpush1.bf16.msra.mxu0 0
  %86 = vmatprep.subr.bf16.mxu0 0
  %87 = vmatpush1.bf16.msra.mxu0 0
  %88 = vmatprep.subr.bf16.mxu0 0
  %89 = vmatpush1.bf16.msra.mxu0 0
  %90 = vmatprep.subr.bf16.mxu0 0
  %91 = vmatpush1.bf16.msra.mxu0 0
  %92 = vmatprep.mubr.bf16.mxu0 0
  %93 = vmatmul.mubr.bf16.gmra.mrb[0].mxu0 %v58
  %v94 = vpop.f32.mrb[0].mxu0
  %v95 = vadd.f32 0.0, %v94
  %v96 = vpop.f32.mrb[0].mxu0
  %v97 = vpop.f32.mrb[0].mxu0
  %v98 = vadd.f32 0.0, %v97
  %v99 = vpop.f32.mrb[0].mxu0
  %100 = vdwg.mxu0
  %v101 = vadd.f32 %v31, %v95
  %v102 = vadd.f32 %v32, %v98
  %103 = vst.msk [vmem:[#allocation2] sm:$0xff] %vm56, %v101
  %104 = vst.msk [vmem:[#allocation2 + $0x8] sm:$0xff] %vm56, %v102
  // Predicated region
  $region30: #{transformer_forward.31} parent=0 // pred_check
    %p105 = pneg %p24
  $region31: #{transformer_forward.31} parent=0 // pred_check_branch
    %107 = sbr.rel (%p105) target = $region33
  $region32: #{transformer_forward.31} parent=0 // pred_region
    %v108 = vld [vmem:[#allocation2] sm:$0xff]
    %v109 = vld [vmem:[#allocation2 + $0x8] sm:$0xff]
    %v110 = vld [vmem:[%s2] sm:$0x1]
    %v111 = vunpack.c.l.bf16 %v110
    %v112 = vlaneseq
    %v113 = vshrl.u32 %v112, 7
    %v114 = vsub.s32 0, %v113
    %v115 = vrot.slane %v111, %v114
    %v116 = vadd.f32 %v108, %v115
    %v117 = vadd.f32 %v109, %v115
    %v118 = vld [vmem:[%s3] sm:$0xf]
    %v119 = vld [vmem:[%s3 + $0x4] sm:$0xf]
    %v120 = vunpack.c.l.bf16 %v118
    %v121 = vunpack.c.l.bf16 %v119
    %v122 = vadd.f32 %v116, %v120
    %v123 = vadd.f32 %v117, %v121
    %v124 = vsel %vm56, %v122, 0.0
    %125 = vadd.xlane.f32.xlu0 %v124
    %v126 = vpop.xlane.xlu0 %125
    %v127 = vsel %vm56, %v123, 0.0
    %128 = vadd.xlane.f32.xlu0 %v127
    %v129 = vpop.xlane.xlu0 %128
    %v130 = vrcp.pop 32.0
    %v131 = vmul.f32 %v126, %v130
    %v132 = vmul.f32 %v129, %v130
    %v133 = vsub.f32 %v122, %v131
    %v134 = vsub.f32 %v123, %v132
    %v135 = vmul.f32 %v133, %v133
    %v136 = vmul.f32 %v134, %v134
    %v137 = vsel %vm56, %v135, 0.0
    %138 = vadd.xlane.f32.xlu0 %v137
    %v139 = vpop.xlane.xlu0 %138
    %v140 = vsel %vm56, %v136, 0.0
    %141 = vadd.xlane.f32.xlu0 %v140
    %v142 = vpop.xlane.xlu0 %141
    %v143 = vmul.f32 %v139, %v130
    %v144 = vmul.f32 %v142, %v130
    %v145 = vadd.f32 %v143, 1e-05
    %v146 = vadd.f32 %v144, 1e-05
    %v147 = vrsqrt.pop %v145
    %v148 = vrsqrt.pop %v146
    %v149 = vmul.f32 %v133, %v147
    %v150 = vmul.f32 %v134, %v148
    %v151 = vld [vmem:[%s4] sm:$0x1]
    %v152 = vunpack.c.l.bf16 %v151
    %v153 = vlaneseq
    %v154 = vshrl.u32 %v153, 7
    %v155 = vsub.s32 0, %v154
    %v156 = vrot.slane %v152, %v155
    %v157 = vmul.f32 %v149, %v156
    %v158 = vmul.f32 %v150, %v156
    %v159 = vld [vmem:[%s5] sm:$0x1]
    %v160 = vunpack.c.l.bf16 %v159
    %v161 = vlaneseq
    %v162 = vshrl.u32 %v161, 7
    %v163 = vsub.s32 0, %v162
    %v164 = vrot.slane %v160, %v163
    %v165 = vadd.f32 %v157, %v164
    %v166 = vadd.f32 %v158, %v164
    %v167 = vpack.c.bf16 %v166, %v165
    %v169 = vunpack.c.l.b16 %v167
    %v170 = vunpack.c.h.b16 %v167
    %v171 = vpack.c.b16 %v169, %v169
    %v172 = vpack.c.b16 %v170, %v170
    %vm175 = vcmask 257024
    %176 = vst.msk [vmem:[%s6] sm:$0xf] %vm175, %v171
    %177 = vst.msk [vmem:[%s6 + $0x4] sm:$0xf] %vm175, %v172
  $region33: #{transformer_forward.31} parent=0 // pred_fallthru
    _
  // Predicated region
  $region34: #{transformer_forward.31} parent=0 // pred_check
    _
  $region35: #{transformer_forward.31} parent=0 // pred_check_branch
    %179 = sbr.rel (0) target = $region37
  $region36: #{transformer_forward.31} parent=0 // pred_region
    _
  $region37: #{transformer_forward.31} parent=0 // pred_fallthru
    _
  // Predicated region
  $region38: #{transformer_forward.31} parent=0 // pred_check
    _
  $region39: #{transformer_forward.31} parent=0 // pred_check_branch
    %181 = sbr.rel (0) target = $region41
  $region40: #{transformer_forward.31} parent=0 // pred_region
    _
  $region41: #{transformer_forward.31} parent=0 // pred_fallthru
    _

// kernel: transformer_forward.29
$region0: #{transformer_forward.29}
  #allocation0 [shape = 'u32[]', space=smem, size = 0x4, offset = 0x4, fixed_abs, tag = 'smem constant byte address 0x4 - core index']
  #allocation1 [shape = 'u32[144,128]{1,0:T(1,128)}', space=vmem, size = 0x12000, scoped, tag = 'internal scratch']
  #allocation2 [shape = 'f32[16,32]{1,0:T(8,128)}', space=vmem, size = 0x2000, scoped, tag = 'scratch operand']
  %s0 = inlined_call_operand.vmem [shape: bf16[16,32], index: 0, kind: input, shape index: {}]
  %s1 = inlined_call_operand.vmem [shape: bf16[3,32,32], index: 1, kind: input, shape index: {}]
  %s2 = inlined_call_operand.vmem [shape: bf16[3,1,32], index: 2, kind: input, shape index: {}]
  %s3 = inlined_call_operand.vmem [shape: bf16[3,16,32], index: 3, kind: output, shape index: {}]
  %s4 = sld [smem:[#allocation0]]
  $region53: #{transformer_forward.29} parent=0
    _
  %s6 = ssub.s32 1, %s4
  %s7 = scalar_select 0, %s6, %s4
  loop: start=0, step=1, limit=5
  $region2: #{transformer_forward.29} parent=0 // loop_pre_header
    _
  $region3: #{transformer_forward.29} parent=0 // loop_header
    %s9 = sphi 0, %s13
    %p10 = scmp.ge.s32.totalorder %s9, 5
    %s16 = sphi 0, %s42
    %s17 = sphi 0, %s38
    %s18 = sphi 0, %s34
    %s19 = sphi 0, %s30
    %s20 = sphi 0, %s16
    %s21 = sphi 0, %s17
    %s22 = sphi 0, %s18
    %s23 = sphi 0, %s19
    %s24 = sphi 0, %s20
    %s25 = sphi 0, %s21
    %s26 = sphi 0, %s22
    %s27 = sphi 0, %s23
    %s47 = sphi 0, %s49
    %s50 = sphi 0, %s47
    %s51 = sphi 0, %s50
    %s67 = sphi 0, %s51
    %s77 = sphi 0, %s79
    %s80 = sphi 0, %s77
    %s81 = sphi 0, %s80
    %s97 = sphi 0, %s81
    %s105 = sphi 0, %s107
    %s108 = sphi 0, %s105
    %s109 = sphi 0, %s108
    %s125 = sphi 0, %s109
    %s135 = sphi 0, %s137
    %s138 = sphi 0, %s135
    %s139 = sphi 0, %s138
    %s155 = sphi 0, %s139
  $region4: #{transformer_forward.29} parent=0 // loop_header_branch
    %12 = sbr.rel (%p10) target = $region8
  $region5: #{transformer_forward.29} parent=0 // loop_body
    %s14 = ssub.s32 %s9, 1
    %s15 = ssub.s32 %s9, 2
    %s28 = sadd.s32 1, %s19
    %p29 = scmp.ge.s32.totalorder %s28, 1
    %s30 = scalar_select %p29, 0, %s28
    %s31 = sadd.s32 1, %s18
    %s32 = scalar_select %p29, %s31, %s18
    %p33 = scmp.ge.s32.totalorder %s32, 1
    %s34 = scalar_select %p33, 0, %s32
    %s35 = sadd.s32 1, %s17
    %s36 = scalar_select %p33, %s35, %s17
    %p37 = scmp.ge.s32.totalorder %s36, 1
    %s38 = scalar_select %p37, 0, %s36
    %s39 = sadd.s32 1, %s16
    %s40 = scalar_select %p37, %s39, %s16
    %p41 = scmp.ge.s32.totalorder %s40, 3
    %s42 = scalar_select %p41, 0, %s40
    %s43 = ssub.s32 %s17, %s38
    %s44 = ssub.s32 %s19, %s30
    %s45 = sor.u32 %s43, %s44
    %p46 = scmp.eq.s32.totalorder %s45, 0
    %s48 = sadd.s32 %s47, 1
    %s49 = scalar_select %p46, %s47, %s48
    %p52 = pneg %p46
    %p53 = scmp.eq.s32.totalorder %s9, 2
    %p54 = por %p52, %p53
    %p55 = scmp.ne.s32.totalorder %s47, %s50
    %p56 = scmp.eq.s32.totalorder %s9, 0
    %p57 = por %p55, %p56
    %p58 = scmp.ne.s32.totalorder %s47, %s50
    %p59 = scmp.eq.s32.totalorder %s14, 2
    %p60 = por %p58, %p59
    %p61 = scmp.ne.s32.totalorder %s50, %s51
    %p62 = scmp.eq.s32.totalorder %s14, 0
    %p63 = por %p61, %p62
    %p64 = scmp.ne.s32.totalorder %s50, %s51
    %p65 = scmp.eq.s32.totalorder %s15, 2
    %p66 = por %p64, %p65
    %p68 = scmp.ne.s32.totalorder %s51, %s67
    %p69 = scmp.eq.s32.totalorder %s15, 0
    %p70 = por %p68, %p69
    %s71 = ssub.s32 %s16, %s42
    %s72 = ssub.s32 %s19, %s30
    %s73 = sor.u32 %s71, %s72
    %s74 = ssub.s32 %s18, %s34
    %s75 = sor.u32 %s73, %s74
    %p76 = scmp.eq.s32.totalorder %s75, 0
    %s78 = sadd.s32 %s77, 1
    %s79 = scalar_select %p76, %s77, %s78
    %p82 = pneg %p76
    %p83 = scmp.eq.s32.totalorder %s9, 2
    %p84 = por %p82, %p83
    %p85 = scmp.ne.s32.totalorder %s77, %s80
    %p86 = scmp.eq.s32.totalorder %s9, 0
    %p87 = por %p85, %p86
    %p88 = scmp.ne.s32.totalorder %s77, %s80
    %p89 = scmp.eq.s32.totalorder %s14, 2
    %p90 = por %p88, %p89
    %p91 = scmp.ne.s32.totalorder %s80, %s81
    %p92 = scmp.eq.s32.totalorder %s14, 0
    %p93 = por %p91, %p92
    %p94 = scmp.ne.s32.totalorder %s80, %s81
    %p95 = scmp.eq.s32.totalorder %s15, 2
    %p96 = por %p94, %p95
    %p98 = scmp.ne.s32.totalorder %s81, %s97
    %p99 = scmp.eq.s32.totalorder %s15, 0
    %p100 = por %p98, %p99
    %s101 = ssub.s32 %s16, %s42
    %s102 = ssub.s32 %s18, %s34
    %s103 = sor.u32 %s101, %s102
    %p104 = scmp.eq.s32.totalorder %s103, 0
    %s106 = sadd.s32 %s105, 1
    %s107 = scalar_select %p104, %s105, %s106
    %p110 = pneg %p104
    %p111 = scmp.eq.s32.totalorder %s9, 2
    %p112 = por %p110, %p111
    %p113 = scmp.ne.s32.totalorder %s105, %s108
    %p114 = scmp.eq.s32.totalorder %s9, 0
    %p115 = por %p113, %p114
    %p116 = scmp.ne.s32.totalorder %s105, %s108
    %p117 = scmp.eq.s32.totalorder %s14, 2
    %p118 = por %p116, %p117
    %p119 = scmp.ne.s32.totalorder %s108, %s109
    %p120 = scmp.eq.s32.totalorder %s14, 0
    %p121 = por %p119, %p120
    %p122 = scmp.ne.s32.totalorder %s108, %s109
    %p123 = scmp.eq.s32.totalorder %s15, 2
    %p124 = por %p122, %p123
    %p126 = scmp.ne.s32.totalorder %s109, %s125
    %p127 = scmp.eq.s32.totalorder %s15, 0
    %p128 = por %p126, %p127
    %s129 = ssub.s32 %s16, %s42
    %s130 = ssub.s32 %s17, %s38
    %s131 = sor.u32 %s129, %s130
    %s132 = ssub.s32 %s18, %s34
    %s133 = sor.u32 %s131, %s132
    %p134 = scmp.eq.s32.totalorder %s133, 0
    %s136 = sadd.s32 %s135, 1
    %s137 = scalar_select %p134, %s135, %s136
    %p140 = pneg %p134
    %p141 = scmp.eq.s32.totalorder %s9, 2
    %p142 = por %p140, %p141
    %p143 = scmp.ne.s32.totalorder %s135, %s138
    %p144 = scmp.eq.s32.totalorder %s9, 0
    %p145 = por %p143, %p144
    %p146 = scmp.ne.s32.totalorder %s135, %s138
    %p147 = scmp.eq.s32.totalorder %s14, 2
    %p148 = por %p146, %p147
    %p149 = scmp.ne.s32.totalorder %s138, %s139
    %p150 = scmp.eq.s32.totalorder %s14, 0
    %p151 = por %p149, %p150
    %p152 = scmp.ne.s32.totalorder %s138, %s139
    %p153 = scmp.eq.s32.totalorder %s15, 2
    %p154 = por %p152, %p153
    %p156 = scmp.ne.s32.totalorder %s139, %s155
    %p157 = scmp.eq.s32.totalorder %s15, 0
    %p158 = por %p156, %p157
    %p159 = scmp.le.s32.totalorder 1, %s9
    %p160 = scmp.lt.s32.totalorder %s9, 4
    %p161 = pnand %p159, %p160
    %p162 = pneg %p161
    // Predicated region
    $region9: #{transformer_forward.29} parent=5 // pred_check
      _
    $region10: #{transformer_forward.29} parent=5 // pred_check_branch
      %164 = sbr.rel (%p161) target = $region12
    $region11: #{transformer_forward.29} parent=5 // pred_region
      %s165 = ssub.s32 %s9, 1
      // Predicated region
      $region13: #{transformer_forward.29} parent=11 // pred_check
        %p166 = pneg %p63
      $region14: #{transformer_forward.29} parent=11 // pred_check_branch
        %168 = sbr.rel (%p166) target = $region16
      $region15: #{transformer_forward.29} parent=11 // pred_region
        %s169 = smul.u32 2, %s21
        %p170 = scmp.lt.s32.totalorder %s169, 1
        %s171 = scalar_select %p170, %s169, 1
        %p172 = scmp.lt.s32.totalorder %s23, 0
        %s173 = scalar_select %p172, %s23, 0
        %s174 = sadd.s32 %s173, %s171
        %s175 = smul.addr %s174, 4
        %s176 = scalar_lea.vmem %s0, %s175
        %s177 = smul.u32 2, %s21
      $region16: #{transformer_forward.29} parent=11 // pred_fallthru
        _
    $region12: #{transformer_forward.29} parent=5 // pred_fallthru
      _
    %p178 = scmp.lt.s32.totalorder %s9, 3
    // Predicated region
    $region17: #{transformer_forward.29} parent=5 // pred_check
      %p179 = pneg %p178
    $region18: #{transformer_forward.29} parent=5 // pred_check_branch
      %181 = sbr.rel (%p179) target = $region20
    $region19: #{transformer_forward.29} parent=5 // pred_region
      // Predicated region
      $region21: #{transformer_forward.29} parent=19 // pred_check
        %p182 = pneg %p87
      $region22: #{transformer_forward.29} parent=19 // pred_check_branch
        %184 = sbr.rel (%p182) target = $region24
      $region23: #{transformer_forward.29} parent=19 // pred_region
        %s185 = smul.u32 4, %s19
        %p186 = scmp.lt.s32.totalorder %s16, 2
        %s187 = scalar_select %p186, %s16, 2
        %p188 = scmp.lt.s32.totalorder %s185, 3
        %s189 = scalar_select %p188, %s185, 3
        %p190 = scmp.lt.s32.totalorder %s18, 0
        %s191 = scalar_select %p190, %s18, 0
        %s192 = sadd.s32 %s191, %s189
        %s193 = smul.addr %s187, 4
        %s194 = sadd.s32 %s192, %s193
        %s195 = smul.addr %s194, 4
        %s196 = scalar_lea.vmem %s1, %s195
        %s197 = smul.u32 4, %s19
      $region24: #{transformer_forward.29} parent=19 // pred_fallthru
        _
      // Predicated region
      $region25: #{transformer_forward.29} parent=19 // pred_check
        %p198 = pneg %p115
      $region26: #{transformer_forward.29} parent=19 // pred_check_branch
        %200 = sbr.rel (%p198) target = $region28
      $region27: #{transformer_forward.29} parent=19 // pred_region
        %p201 = scmp.lt.s32.totalorder %s16, 2
        %s202 = scalar_select %p201, %s16, 2
        %p203 = scmp.lt.s32.totalorder %s18, 0
        %s204 = scalar_select %p203, %s18, 0
        %s205 = sadd.s32 %s204, %s202
        %s206 = scalar_lea.vmem %s2, %s205
      $region28: #{transformer_forward.29} parent=19 // pred_fallthru
        _
    $region20: #{transformer_forward.29} parent=5 // pred_fallthru
      _
    %p207 = scmp.le.s32.totalorder 1, %s9
    %p208 = scmp.lt.s32.totalorder %s9, 4
    %p209 = pnand %p207, %p208
    %p210 = pneg %p209
    // Predicated region
    $region29: #{transformer_forward.29} parent=5 // pred_check
      _
    $region30: #{transformer_forward.29} parent=5 // pred_check_branch
      %212 = sbr.rel (%p209) target = $region32
    $region31: #{transformer_forward.29} parent=5 // pred_region
      %s213 = ssub.s32 %s9, 1
      %s214 = smul.u32 2, %s21
      %p215 = scmp.lt.s32.totalorder %s214, 1
      %s216 = scalar_select %p215, %s214, 1
      %p217 = scmp.lt.s32.totalorder %s23, 0
      %s218 = scalar_select %p217, %s23, 0
      %s219 = sadd.s32 %s218, %s216
      %s220 = smul.addr %s219, 4
      %s221 = scalar_lea.vmem %s0, %s220
      %p222 = pneg %p63
      %p223 = pneg %p60
      %s224 = smul.u32 4, %s23
      %p225 = scmp.lt.s32.totalorder %s20, 2
      %s226 = scalar_select %p225, %s20, 2
      %p227 = scmp.lt.s32.totalorder %s224, 3
      %s228 = scalar_select %p227, %s224, 3
      %p229 = scmp.lt.s32.totalorder %s22, 0
      %s230 = scalar_select %p229, %s22, 0
      %s231 = sadd.s32 %s230, %s228
      %s232 = smul.addr %s226, 4
      %s233 = sadd.s32 %s231, %s232
      %s234 = smul.addr %s233, 4
      %s235 = scalar_lea.vmem %s1, %s234
      %p236 = pneg %p93
      %p237 = pneg %p90
      %p238 = scmp.lt.s32.totalorder %s20, 2
      %s239 = scalar_select %p238, %s20, 2
      %p240 = scmp.lt.s32.totalorder %s22, 0
      %s241 = scalar_select %p240, %s22, 0
      %s242 = sadd.s32 %s241, %s239
      %s243 = scalar_lea.vmem %s2, %s242
      %p244 = pneg %p121
      %p245 = pneg %p118
      %p246 = pneg %p151
      %p247 = pneg %p148
      %s248 = smul.u32 2, %s21
      %p249 = scmp.lt.s32.totalorder %s20, 2
      %s250 = scalar_select %p249, %s20, 2
      %p251 = scmp.lt.s32.totalorder %s248, 1
      %s252 = scalar_select %p251, %s248, 1
      %p253 = scmp.lt.s32.totalorder %s22, 0
      %s254 = scalar_select %p253, %s22, 0
      %s255 = sadd.s32 %s254, %s252
      %s256 = smul.addr %s250, 2
      %s257 = sadd.s32 %s255, %s256
      %s258 = smul.addr %s257, 4
      %s259 = scalar_lea.vmem %s3, %s258
      %s260 = smul.u32 2, %s21
      %p261 = scmp.lt.s32.totalorder %s260, 1
      %s262 = scalar_select %p261, %s260, 1
      %p263 = scmp.lt.s32.totalorder %s23, 0
      %s264 = scalar_select %p263, %s23, 0
      %s265 = sadd.s32 %s264, %s262
      %s266 = smul.addr %s265, 4
      %s267 = scalar_lea.vmem %s0, %s266
      %s268 = smul.u32 2, %s21
      %s269 = smul.u32 4, %s23
      %p270 = scmp.lt.s32.totalorder %s20, 2
      %s271 = scalar_select %p270, %s20, 2
      %p272 = scmp.lt.s32.totalorder %s269, 3
      %s273 = scalar_select %p272, %s269, 3
      %p274 = scmp.lt.s32.totalorder %s22, 0
      %s275 = scalar_select %p274, %s22, 0
      %s276 = sadd.s32 %s275, %s273
      %s277 = smul.addr %s271, 4
      %s278 = sadd.s32 %s276, %s277
      %s279 = smul.addr %s278, 4
      %s280 = scalar_lea.vmem %s1, %s279
      %s281 = smul.u32 4, %s23
      %p282 = scmp.lt.s32.totalorder %s20, 2
      %s283 = scalar_select %p282, %s20, 2
      %p284 = scmp.lt.s32.totalorder %s22, 0
      %s285 = scalar_select %p284, %s22, 0
      %s286 = sadd.s32 %s285, %s283
      %s287 = scalar_lea.vmem %s2, %s286
      %s288 = smul.u32 2, %s21
      %p289 = scmp.lt.s32.totalorder %s20, 2
      %s290 = scalar_select %p289, %s20, 2
      %p291 = scmp.lt.s32.totalorder %s288, 1
      %s292 = scalar_select %p291, %s288, 1
      %p293 = scmp.lt.s32.totalorder %s22, 0
      %s294 = scalar_select %p293, %s22, 0
      %s295 = sadd.s32 %s294, %s292
      %s296 = smul.addr %s290, 2
      %s297 = sadd.s32 %s295, %s296
      %s298 = smul.addr %s297, 4
      %s299 = scalar_lea.vmem %s3, %s298
      %s300 = smul.u32 2, %s21
      %p302 = scmp.eq.s32.totalorder %s23, 0
      // Predicated region
      $region33: #{transformer_forward.29} parent=31 // pred_check
        %p303 = pneg %p302
      $region34: #{transformer_forward.29} parent=31 // pred_check_branch
        %305 = sbr.rel (%p303) target = $region36
      $region35: #{transformer_forward.29} parent=31 // pred_region
        %vm306 = vcmask 261120
        %307 = vst.msk [vmem:[#allocation2] sm:$0xff] %vm306, 0.0
        %308 = vst.msk [vmem:[#allocation2 + $0x8] sm:$0xff] %vm306, 0.0
      $region36: #{transformer_forward.29} parent=31 // pred_fallthru
        _
      %v309 = vld [vmem:[#allocation2] sm:$0xff]
      %v310 = vld [vmem:[#allocation2 + $0x8] sm:$0xff]
      %v311 = vld [vmem:[%s267] sm:$0xf]
      %v312 = vld [vmem:[%s267 + $0x4] sm:$0xf]
      %v313 = vld [vmem:[%s280] sm:$0xf]
      %v314 = vld [vmem:[%s280 + $0x4] sm:$0xf]
      %v315 = vld [vmem:[%s280 + $0x8] sm:$0xf]
      %v316 = vld [vmem:[%s280 + $0xc] sm:$0xf]
      %v319 = vunpack.c.l.b16 %v311
      %v320 = vunpack.c.l.b16 %v312
      %v321 = vpack.c.b16 %v320, %v319
      %v326 = vunpack.c.l.b16 %v313
      %v327 = vunpack.c.l.b16 %v314
      %v328 = vunpack.c.l.b16 %v315
      %v329 = vunpack.c.l.b16 %v316
      %v330 = vpack.c.b16 %v327, %v326
      %v331 = vpack.c.b16 %v329, %v328
      %vm334 = vcmask 261120
      %v336 = vsel %vm334, %v321, 0
      %338 = vmatprep.subr.bf16.mxu0 0
      %339 = vmatpush1.bf16.msra.mxu0 %v330
      %340 = vmatprep.subr.bf16.mxu0 0
      %341 = vmatpush1.bf16.msra.mxu0 %v331
      %342 = vmatprep.subr.bf16.mxu0 0
      %343 = vmatpush1.bf16.msra.mxu0 0
      %344 = vmatprep.subr.bf16.mxu0 0
      %345 = vmatpush1.bf16.msra.mxu0 0
      %346 = vmatprep.subr.bf16.mxu0 0
      %347 = vmatpush1.bf16.msra.mxu0 0
      %348 = vmatprep.subr.bf16.mxu0 0
      %349 = vmatpush1.bf16.msra.mxu0 0
      %350 = vmatprep.subr.bf16.mxu0 0
      %351 = vmatpush1.bf16.msra.mxu0 0
      %352 = vmatprep.subr.bf16.mxu0 0
      %353 = vmatpush1.bf16.msra.mxu0 0
      %354 = vmatprep.subr.bf16.mxu0 0
      %355 = vmatpush1.bf16.msra.mxu0 0
      %356 = vmatprep.subr.bf16.mxu0 0
      %357 = vmatpush1.bf16.msra.mxu0 0
      %358 = vmatprep.subr.bf16.mxu0 0
      %359 = vmatpush1.bf16.msra.mxu0 0
      %360 = vmatprep.subr.bf16.mxu0 0
      %361 = vmatpush1.bf16.msra.mxu0 0
      %362 = vmatprep.subr.bf16.mxu0 0
      %363 = vmatpush1.bf16.msra.mxu0 0
      %364 = vmatprep.subr.bf16.mxu0 0
      %365 = vmatpush1.bf16.msra.mxu0 0
      %366 = vmatprep.subr.bf16.mxu0 0
      %367 = vmatpush1.bf16.msra.mxu0 0
      %368 = vmatprep.subr.bf16.mxu0 0
      %369 = vmatpush1.bf16.msra.mxu0 0
      %370 = vmatprep.mubr.bf16.mxu0 0
      %371 = vmatmul.mubr.bf16.gmra.mrb[0].mxu0 %v336
      %v372 = vpop.f32.mrb[0].mxu0
      %v373 = vadd.f32 0.0, %v372
      %v374 = vpop.f32.mrb[0].mxu0
      %v375 = vpop.f32.mrb[0].mxu0
      %v376 = vadd.f32 0.0, %v375
      %v377 = vpop.f32.mrb[0].mxu0
      %378 = vdwg.mxu0
      %v379 = vadd.f32 %v309, %v373
      %v380 = vadd.f32 %v310, %v376
      %381 = vst.msk [vmem:[#allocation2] sm:$0xff] %vm334, %v379
      %382 = vst.msk [vmem:[#allocation2 + $0x8] sm:$0xff] %vm334, %v380
      // Predicated region
      $region37: #{transformer_forward.29} parent=31 // pred_check
        %p383 = pneg %p302
      $region38: #{transformer_forward.29} parent=31 // pred_check_branch
        %385 = sbr.rel (%p383) target = $region40
      $region39: #{transformer_forward.29} parent=31 // pred_region
        %v386 = vld [vmem:[#allocation2] sm:$0xff]
        %v387 = vld [vmem:[#allocation2 + $0x8] sm:$0xff]
        %v388 = vld [vmem:[%s287] sm:$0x1]
        %v389 = vunpack.c.l.bf16 %v388
        %v390 = vlaneseq
        %v391 = vshrl.u32 %v390, 7
        %v392 = vsub.s32 0, %v391
        %v393 = vrot.slane %v389, %v392
        %v394 = vadd.f32 %v386, %v393
        %v395 = vadd.f32 %v387, %v393
        %v396 = vpack.c.bf16 %v395, %v394
        %v398 = vunpack.c.l.b16 %v396
        %v399 = vunpack.c.h.b16 %v396
        %v400 = vpack.c.b16 %v398, %v398
        %v401 = vpack.c.b16 %v399, %v399
        %vm404 = vcmask 257024
        %405 = vst.msk [vmem:[%s299] sm:$0xf] %vm404, %v400
        %406 = vst.msk [vmem:[%s299 + $0x4] sm:$0xf] %vm404, %v401
      $region40: #{transformer_forward.29} parent=31 // pred_fallthru
        _
      %s407 = smul.u32 2, %s21
      %p408 = scmp.lt.s32.totalorder %s20, 2
      %s409 = scalar_select %p408, %s20, 2
      %p410 = scmp.lt.s32.totalorder %s407, 1
      %s411 = scalar_select %p410, %s407, 1
      %p412 = scmp.lt.s32.totalorder %s22, 0
      %s413 = scalar_select %p412, %s22, 0
      %s414 = sadd.s32 %s413, %s411
      %s415 = smul.addr %s409, 2
      %s416 = sadd.s32 %s414, %s415
      %s417 = smul.addr %s416, 4
      %s418 = scalar_lea.vmem %s3, %s417
      // Predicated region
      $region41: #{transformer_forward.29} parent=31 // pred_check
        %p419 = pneg %p148
      $region42: #{transformer_forward.29} parent=31 // pred_check_branch
        %421 = sbr.rel (%p419) target = $region44
      $region43: #{transformer_forward.29} parent=31 // pred_region
        %s422 = smul.u32 2, %s21
      $region44: #{transformer_forward.29} parent=31 // pred_fallthru
        _
    $region32: #{transformer_forward.29} parent=5 // pred_fallthru
      _
    %p423 = scmp.le.s32.totalorder 2, %s9
    // Predicated region
    $region45: #{transformer_forward.29} parent=5 // pred_check
      %p424 = pneg %p423
    $region46: #{transformer_forward.29} parent=5 // pred_check_branch
      %426 = sbr.rel (%p424) target = $region48
    $region47: #{transformer_forward.29} parent=5 // pred_region
      %s427 = ssub.s32 %s9, 2
      // Predicated region
      $region49: #{transformer_forward.29} parent=47 // pred_check
        %p428 = pneg %p154
      $region50: #{transformer_forward.29} parent=47 // pred_check_branch
        %430 = sbr.rel (%p428) target = $region52
      $region51: #{transformer_forward.29} parent=47 // pred_region
        %s431 = smul.u32 2, %s25
        %p432 = scmp.lt.s32.totalorder %s24, 2
        %s433 = scalar_select %p432, %s24, 2
        %p434 = scmp.lt.s32.totalorder %s431, 1
        %s435 = scalar_select %p434, %s431, 1
        %p436 = scmp.lt.s32.totalorder %s26, 0
        %s437 = scalar_select %p436, %s26, 0
        %s438 = sadd.s32 %s437, %s435
        %s439 = smul.addr %s433, 2
        %s440 = sadd.s32 %s438, %s439
        %s441 = smul.addr %s440, 4
        %s442 = scalar_lea.vmem %s3, %s441
      $region52: #{transformer_forward.29} parent=47 // pred_fallthru
        _
    $region48: #{transformer_forward.29} parent=5 // pred_fallthru
      _
  $region6: #{transformer_forward.29} parent=0 // loop_footer
    %s13 = sadd.s32 1, %s9
  $region7: #{transformer_forward.29} parent=0 // loop_footer_branch
    %8 = sbr.rel target = $region3
  $region8: #{transformer_forward.29} parent=0 // loop_exit
    _

// kernel: transformer_forward.30
$region0: #{transformer_forward.30}
  #allocation0 [shape = 'u32[]', space=smem, size = 0x4, offset = 0x4, fixed_abs, tag = 'smem constant byte address 0x4 - core index']
  #allocation1 [shape = 'u32[144,128]{1,0:T(1,128)}', space=vmem, size = 0x12000, scoped, tag = 'internal scratch']
  #allocation2 [shape = 'f32[4,8,1]{2,1,0:T(8,128)}', space=vmem, size = 0x4000, scoped, tag = 'scratch operand']
  #allocation3 [shape = 'f32[4,8,1]{2,1,0:T(8,128)}', space=vmem, size = 0x4000, scoped, tag = 'scratch operand']
  #allocation4 [shape = 'f32[4,8,8]{2,1,0:T(8,128)}', space=vmem, size = 0x4000, scoped, tag = 'scratch operand']
  %s0 = inlined_call_operand.vmem [shape: bf16[3,2,8,32], index: 0, kind: input, shape index: {}, may-alias: {0,1,2}]
  %s1 = inlined_call_operand.vmem [shape: bf16[3,2,8,32], index: 1, kind: input, shape index: {}, may-alias: {0,1,2}]
  %s2 = inlined_call_operand.vmem [shape: bf16[3,2,8,32], index: 2, kind: input, shape index: {}, may-alias: {0,1,2}]
  %s3 = inlined_call_operand.vmem [shape: bf16[2,8,32], index: 3, kind: output, shape index: {}]
  %s4 = sld [smem:[#allocation0]]
  $region53: #{transformer_forward.30} parent=0
    _
  %s6 = ssub.s32 1, %s4
  %s7 = scalar_select 0, %s6, %s4
  loop: start=0, step=1, limit=4
  $region2: #{transformer_forward.30} parent=0 // loop_pre_header
    _
  $region3: #{transformer_forward.30} parent=0 // loop_header
    %s9 = sphi 0, %s13
    %p10 = scmp.ge.s32.totalorder %s9, 4
    %s16 = sphi 0, %s35
    %s17 = sphi 0, %s31
    %s18 = sphi 0, %s27
    %s19 = sphi 0, %s16
    %s20 = sphi 0, %s17
    %s21 = sphi 0, %s18
    %s22 = sphi 0, %s19
    %s23 = sphi 0, %s20
    %s24 = sphi 0, %s21
    %s40 = sphi 0, %s42
    %s43 = sphi 0, %s40
    %s44 = sphi 0, %s43
    %s60 = sphi 0, %s44
    %s68 = sphi 0, %s70
    %s71 = sphi 0, %s68
    %s72 = sphi 0, %s71
    %s88 = sphi 0, %s72
    %s96 = sphi 0, %s98
    %s99 = sphi 0, %s96
    %s100 = sphi 0, %s99
    %s116 = sphi 0, %s100
    %s124 = sphi 0, %s126
    %s127 = sphi 0, %s124
    %s128 = sphi 0, %s127
    %s144 = sphi 0, %s128
  $region4: #{transformer_forward.30} parent=0 // loop_header_branch
    %12 = sbr.rel (%p10) target = $region8
  $region5: #{transformer_forward.30} parent=0 // loop_body
    %s14 = ssub.s32 %s9, 1
    %s15 = ssub.s32 %s9, 2
    %s25 = sadd.s32 1, %s18
    %p26 = scmp.ge.s32.totalorder %s25, 1
    %s27 = scalar_select %p26, 0, %s25
    %s28 = sadd.s32 1, %s17
    %s29 = scalar_select %p26, %s28, %s17
    %p30 = scmp.ge.s32.totalorder %s29, 1
    %s31 = scalar_select %p30, 0, %s29
    %s32 = sadd.s32 1, %s16
    %s33 = scalar_select %p30, %s32, %s16
    %p34 = scmp.ge.s32.totalorder %s33, 2
    %s35 = scalar_select %p34, 0, %s33
    %s36 = ssub.s32 %s16, %s35
    %s37 = ssub.s32 %s17, %s31
    %s38 = sor.u32 %s36, %s37
    %p39 = scmp.eq.s32.totalorder %s38, 0
    %s41 = sadd.s32 %s40, 1
    %s42 = scalar_select %p39, %s40, %s41
    %p45 = pneg %p39
    %p46 = scmp.eq.s32.totalorder %s9, 1
    %p47 = por %p45, %p46
    %p48 = scmp.ne.s32.totalorder %s40, %s43
    %p49 = scmp.eq.s32.totalorder %s9, 0
    %p50 = por %p48, %p49
    %p51 = scmp.ne.s32.totalorder %s40, %s43
    %p52 = scmp.eq.s32.totalorder %s14, 1
    %p53 = por %p51, %p52
    %p54 = scmp.ne.s32.totalorder %s43, %s44
    %p55 = scmp.eq.s32.totalorder %s14, 0
    %p56 = por %p54, %p55
    %p57 = scmp.ne.s32.totalorder %s43, %s44
    %p58 = scmp.eq.s32.totalorder %s15, 1
    %p59 = por %p57, %p58
    %p61 = scmp.ne.s32.totalorder %s44, %s60
    %p62 = scmp.eq.s32.totalorder %s15, 0
    %p63 = por %p61, %p62
    %s64 = ssub.s32 %s16, %s35
    %s65 = ssub.s32 %s18, %s27
    %s66 = sor.u32 %s64, %s65
    %p67 = scmp.eq.s32.totalorder %s66, 0
    %s69 = sadd.s32 %s68, 1
    %s70 = scalar_select %p67, %s68, %s69
    %p73 = pneg %p67
    %p74 = scmp.eq.s32.totalorder %s9, 1
    %p75 = por %p73, %p74
    %p76 = scmp.ne.s32.totalorder %s68, %s71
    %p77 = scmp.eq.s32.totalorder %s9, 0
    %p78 = por %p76, %p77
    %p79 = scmp.ne.s32.totalorder %s68, %s71
    %p80 = scmp.eq.s32.totalorder %s14, 1
    %p81 = por %p79, %p80
    %p82 = scmp.ne.s32.totalorder %s71, %s72
    %p83 = scmp.eq.s32.totalorder %s14, 0
    %p84 = por %p82, %p83
    %p85 = scmp.ne.s32.totalorder %s71, %s72
    %p86 = scmp.eq.s32.totalorder %s15, 1
    %p87 = por %p85, %p86
    %p89 = scmp.ne.s32.totalorder %s72, %s88
    %p90 = scmp.eq.s32.totalorder %s15, 0
    %p91 = por %p89, %p90
    %s92 = ssub.s32 %s16, %s35
    %s93 = ssub.s32 %s18, %s27
    %s94 = sor.u32 %s92, %s93
    %p95 = scmp.eq.s32.totalorder %s94, 0
    %s97 = sadd.s32 %s96, 1
    %s98 = scalar_select %p95, %s96, %s97
    %p101 = pneg %p95
    %p102 = scmp.eq.s32.totalorder %s9, 1
    %p103 = por %p101, %p102
    %p104 = scmp.ne.s32.totalorder %s96, %s99
    %p105 = scmp.eq.s32.totalorder %s9, 0
    %p106 = por %p104, %p105
    %p107 = scmp.ne.s32.totalorder %s96, %s99
    %p108 = scmp.eq.s32.totalorder %s14, 1
    %p109 = por %p107, %p108
    %p110 = scmp.ne.s32.totalorder %s99, %s100
    %p111 = scmp.eq.s32.totalorder %s14, 0
    %p112 = por %p110, %p111
    %p113 = scmp.ne.s32.totalorder %s99, %s100
    %p114 = scmp.eq.s32.totalorder %s15, 1
    %p115 = por %p113, %p114
    %p117 = scmp.ne.s32.totalorder %s100, %s116
    %p118 = scmp.eq.s32.totalorder %s15, 0
    %p119 = por %p117, %p118
    %s120 = ssub.s32 %s16, %s35
    %s121 = ssub.s32 %s17, %s31
    %s122 = sor.u32 %s120, %s121
    %p123 = scmp.eq.s32.totalorder %s122, 0
    %s125 = sadd.s32 %s124, 1
    %s126 = scalar_select %p123, %s124, %s125
    %p129 = pneg %p123
    %p130 = scmp.eq.s32.totalorder %s9, 1
    %p131 = por %p129, %p130
    %p132 = scmp.ne.s32.totalorder %s124, %s127
    %p133 = scmp.eq.s32.totalorder %s9, 0
    %p134 = por %p132, %p133
    %p135 = scmp.ne.s32.totalorder %s124, %s127
    %p136 = scmp.eq.s32.totalorder %s14, 1
    %p137 = por %p135, %p136
    %p138 = scmp.ne.s32.totalorder %s127, %s128
    %p139 = scmp.eq.s32.totalorder %s14, 0
    %p140 = por %p138, %p139
    %p141 = scmp.ne.s32.totalorder %s127, %s128
    %p142 = scmp.eq.s32.totalorder %s15, 1
    %p143 = por %p141, %p142
    %p145 = scmp.ne.s32.totalorder %s128, %s144
    %p146 = scmp.eq.s32.totalorder %s15, 0
    %p147 = por %p145, %p146
    %p148 = scmp.le.s32.totalorder 1, %s9
    %p149 = scmp.lt.s32.totalorder %s9, 3
    %p150 = pnand %p148, %p149
    %p151 = pneg %p150
    // Predicated region
    $region9: #{transformer_forward.30} parent=5 // pred_check
      _
    $region10: #{transformer_forward.30} parent=5 // pred_check_branch
      %153 = sbr.rel (%p150) target = $region12
    $region11: #{transformer_forward.30} parent=5 // pred_region
      %s154 = ssub.s32 %s9, 1
    $region12: #{transformer_forward.30} parent=5 // pred_fallthru
      _
    %p155 = scmp.lt.s32.totalorder %s9, 2
    // Predicated region
    $region13: #{transformer_forward.30} parent=5 // pred_check
      %p156 = pneg %p155
    $region14: #{transformer_forward.30} parent=5 // pred_check_branch
      %158 = sbr.rel (%p156) target = $region16
    $region15: #{transformer_forward.30} parent=5 // pred_region
      // Predicated region
      $region17: #{transformer_forward.30} parent=15 // pred_check
        %p159 = pneg %p50
      $region18: #{transformer_forward.30} parent=15 // pred_check_branch
        %161 = sbr.rel (%p159) target = $region20
      $region19: #{transformer_forward.30} parent=15 // pred_region
        %p162 = scmp.lt.s32.totalorder %s16, 1
        %s163 = scalar_select %p162, %s16, 1
        %p164 = scmp.lt.s32.totalorder %s17, 0
        %s165 = scalar_select %p164, %s17, 0
        %s166 = sadd.s32 %s165, %s163
        %s167 = smul.addr %s166, 4
        %s168 = scalar_lea.vmem %s0, %s167
      $region20: #{transformer_forward.30} parent=15 // pred_fallthru
        _
      // Predicated region
      $region21: #{transformer_forward.30} parent=15 // pred_check
        %p169 = pneg %p78
      $region22: #{transformer_forward.30} parent=15 // pred_check_branch
        %171 = sbr.rel (%p169) target = $region24
      $region23: #{transformer_forward.30} parent=15 // pred_region
        %p172 = scmp.lt.s32.totalorder %s16, 1
        %s173 = scalar_select %p172, %s16, 1
        %p174 = scmp.lt.s32.totalorder %s18, 0
        %s175 = scalar_select %p174, %s18, 0
        %s176 = sadd.s32 %s175, %s173
        %s177 = sadd.s32 %s176, 2
        %s178 = smul.addr %s177, 4
        %s179 = scalar_lea.vmem %s1, %s178
      $region24: #{transformer_forward.30} parent=15 // pred_fallthru
        _
      // Predicated region
      $region25: #{transformer_forward.30} parent=15 // pred_check
        %p180 = pneg %p106
      $region26: #{transformer_forward.30} parent=15 // pred_check_branch
        %182 = sbr.rel (%p180) target = $region28
      $region27: #{transformer_forward.30} parent=15 // pred_region
        %p183 = scmp.lt.s32.totalorder %s16, 1
        %s184 = scalar_select %p183, %s16, 1
        %p185 = scmp.lt.s32.totalorder %s18, 0
        %s186 = scalar_select %p185, %s18, 0
        %s187 = sadd.s32 %s186, %s184
        %s188 = sadd.s32 %s187, 4
        %s189 = smul.addr %s188, 4
        %s190 = scalar_lea.vmem %s2, %s189
      $region28: #{transformer_forward.30} parent=15 // pred_fallthru
        _
    $region16: #{transformer_forward.30} parent=5 // pred_fallthru
      _
    %p191 = scmp.le.s32.totalorder 1, %s9
    %p192 = scmp.lt.s32.totalorder %s9, 3
    %p193 = pnand %p191, %p192
    %p194 = pneg %p193
    // Predicated region
    $region29: #{transformer_forward.30} parent=5 // pred_check
      _
    $region30: #{transformer_forward.30} parent=5 // pred_check_branch
      %196 = sbr.rel (%p193) target = $region32
    $region31: #{transformer_forward.30} parent=5 // pred_region
      %s197 = ssub.s32 %s9, 1
      %p198 = scmp.lt.s32.totalorder %s19, 1
      %s199 = scalar_select %p198, %s19, 1
      %p200 = scmp.lt.s32.totalorder %s20, 0
      %s201 = scalar_select %p200, %s20, 0
      %s202 = sadd.s32 %s201, %s199
      %s203 = smul.addr %s202, 4
      %s204 = scalar_lea.vmem %s0, %s203
      %p205 = pneg %p56
      %p206 = pneg %p53
      %p207 = scmp.lt.s32.totalorder %s19, 1
      %s208 = scalar_select %p207, %s19, 1
      %p209 = scmp.lt.s32.totalorder %s21, 0
      %s210 = scalar_select %p209, %s21, 0
      %s211 = sadd.s32 %s210, %s208
      %s212 = sadd.s32 %s211, 2
      %s213 = smul.addr %s212, 4
      %s214 = scalar_lea.vmem %s1, %s213
      %p215 = pneg %p84
      %p216 = pneg %p81
      %p217 = scmp.lt.s32.totalorder %s19, 1
      %s218 = scalar_select %p217, %s19, 1
      %p219 = scmp.lt.s32.totalorder %s21, 0
      %s220 = scalar_select %p219, %s21, 0
      %s221 = sadd.s32 %s220, %s218
      %s222 = sadd.s32 %s221, 4
      %s223 = smul.addr %s222, 4
      %s224 = scalar_lea.vmem %s2, %s223
      %p225 = pneg %p112
      %p226 = pneg %p109
      %p227 = pneg %p140
      %p228 = pneg %p137
      %p229 = scmp.lt.s32.totalorder %s19, 1
      %s230 = scalar_select %p229, %s19, 1
      %p231 = scmp.lt.s32.totalorder %s20, 0
      %s232 = scalar_select %p231, %s20, 0
      %s233 = sadd.s32 %s232, %s230
      %s234 = smul.addr %s233, 4
      %s235 = scalar_lea.vmem %s3, %s234
      %p236 = scmp.lt.s32.totalorder %s19, 1
      %s237 = scalar_select %p236, %s19, 1
      %p238 = scmp.lt.s32.totalorder %s20, 0
      %s239 = scalar_select %p238, %s20, 0
      %s240 = sadd.s32 %s239, %s237
      %s241 = smul.addr %s240, 4
      %s242 = scalar_lea.vmem %s0, %s241
      %p243 = scmp.lt.s32.totalorder %s19, 1
      %s244 = scalar_select %p243, %s19, 1
      %p245 = scmp.lt.s32.totalorder %s21, 0
      %s246 = scalar_select %p245, %s21, 0
      %s247 = sadd.s32 %s246, %s244
      %s248 = sadd.s32 %s247, 2
      %s249 = smul.addr %s248, 4
      %s250 = scalar_lea.vmem %s1, %s249
      %p251 = scmp.lt.s32.totalorder %s19, 1
      %s252 = scalar_select %p251, %s19, 1
      %p253 = scmp.lt.s32.totalorder %s21, 0
      %s254 = scalar_select %p253, %s21, 0
      %s255 = sadd.s32 %s254, %s252
      %s256 = sadd.s32 %s255, 4
      %s257 = smul.addr %s256, 4
      %s258 = scalar_lea.vmem %s2, %s257
      %p259 = scmp.lt.s32.totalorder %s19, 1
      %s260 = scalar_select %p259, %s19, 1
      %p261 = scmp.lt.s32.totalorder %s20, 0
      %s262 = scalar_select %p261, %s20, 0
      %s263 = sadd.s32 %s262, %s260
      %s264 = smul.addr %s263, 4
      %s265 = scalar_lea.vmem %s3, %s264
      %p267 = scmp.eq.s32.totalorder %s21, 0
      // Predicated region
      $region33: #{transformer_forward.30} parent=31 // pred_check
        %p268 = pneg %p267
      $region34: #{transformer_forward.30} parent=31 // pred_check_branch
        %270 = sbr.rel (%p268) target = $region36
      $region35: #{transformer_forward.30} parent=31 // pred_region
        %vm271 = vcmask 7168
        %272 = vst.msk [vmem:[#allocation2] sm:$0xff] %vm271, -inf
        %273 = vst.msk [vmem:[#allocation2 + $0x8] sm:$0xff] %vm271, -inf
        %274 = vst.msk [vmem:[#allocation2 + $0x10] sm:$0xff] %vm271, -inf
        %275 = vst.msk [vmem:[#allocation2 + $0x18] sm:$0xff] %vm271, -inf
        %276 = vst.msk [vmem:[#allocation3] sm:$0xff] %vm271, 0.0
        %277 = vst.msk [vmem:[#allocation3 + $0x8] sm:$0xff] %vm271, 0.0
        %278 = vst.msk [vmem:[#allocation3 + $0x10] sm:$0xff] %vm271, 0.0
        %279 = vst.msk [vmem:[#allocation3 + $0x18] sm:$0xff] %vm271, 0.0
        %vm280 = vcmask 64512
        %281 = vst.msk [vmem:[#allocation4] sm:$0xff] %vm280, 0.0
        %282 = vst.msk [vmem:[#allocation4 + $0x8] sm:$0xff] %vm280, 0.0
        %283 = vst.msk [vmem:[#allocation4 + $0x10] sm:$0xff] %vm280, 0.0
        %284 = vst.msk [vmem:[#allocation4 + $0x18] sm:$0xff] %vm280, 0.0
      $region36: #{transformer_forward.30} parent=31 // pred_fallthru
        _
      %v285 = vld [vmem:[%s242] sm:$0xf]
      %v286 = vld [vmem:[%s250] sm:$0xf]
      %v287 = vld [vmem:[%s258] sm:$0xf]
      %vm288 = vcmask 64512
      %v290 = vsel %vm288, %v285, 0
      %v293 = vsel %vm288, %v286, 0
      %295 = vmatprep.subr.bf16.mxu0 0
      %296 = vmatpush1.bf16.xpose.msra.mxu0 %v293
      %297 = vmatprep.subr.bf16.mxu0 0
      %298 = vmatpush1.bf16.xpose.msra.mxu0 0
      %299 = vmatprep.subr.bf16.mxu0 0
      %300 = vmatpush1.bf16.xpose.msra.mxu0 0
      %301 = vmatprep.subr.bf16.mxu0 0
      %302 = vmatpush1.bf16.xpose.msra.mxu0 0
      %303 = vmatprep.subr.bf16.mxu0 0
      %304 = vmatpush1.bf16.xpose.msra.mxu0 0
      %305 = vmatprep.subr.bf16.mxu0 0
      %306 = vmatpush1.bf16.xpose.msra.mxu0 0
      %307 = vmatprep.subr.bf16.mxu0 0
      %308 = vmatpush1.bf16.xpose.msra.mxu0 0
      %309 = vmatprep.subr.bf16.mxu0 0
      %310 = vmatpush1.bf16.xpose.msra.mxu0 0
      %311 = vmatprep.subr.bf16.mxu0 0
      %312 = vmatpush1.bf16.xpose.msra.mxu0 0
      %313 = vmatprep.subr.bf16.mxu0 0
      %314 = vmatpush1.bf16.xpose.msra.mxu0 0
      %315 = vmatprep.subr.bf16.mxu0 0
      %316 = vmatpush1.bf16.xpose.msra.mxu0 0
      %317 = vmatprep.subr.bf16.mxu0 0
      %318 = vmatpush1.bf16.xpose.msra.mxu0 0
      %319 = vmatprep.subr.bf16.mxu0 0
      %320 = vmatpush1.bf16.xpose.msra.mxu0 0
      %321 = vmatprep.subr.bf16.mxu0 0
      %322 = vmatpush1.bf16.xpose.msra.mxu0 0
      %323 = vmatprep.subr.bf16.mxu0 0
      %324 = vmatpush1.bf16.xpose.msra.mxu0 0
      %325 = vmatprep.subr.bf16.mxu0 0
      %326 = vmatpush1.bf16.xpose.msra.mxu0 0
      %327 = vmatprep.mubr.bf16.mxu0 0
      %328 = vmatmul.mubr.bf16.gmra.mrb[0].mxu0 %v290
      %v329 = vpop.f32.mrb[0].mxu0
      %v330 = vadd.f32 0.0, %v329
      %v331 = vpop.f32.mrb[0].mxu0
      %v332 = vpop.f32.mrb[0].mxu0
      %v333 = vpop.f32.mrb[0].mxu0
      %334 = vdwg.mxu0
      %v335 = vld [vmem:[#allocation2] sm:$0xff]
      %v336 = vsel %vm288, %v330, -inf
      %337 = vmax.xlane.f32.xlu0 %v336
      %v338 = vpop.xlane.xlu0 %337
      %v339 = vmax.f32 %v335, %v338
      %v340 = vsub.f32 %v335, %v339
      %v341 = vmul.f32 %v340, 1.442695
      %v342 = vpow.pop %v341
      %344 = vset.pattern.permute.xlu0 0
      %345 = vperm.xlu0 %344, %v339
      %v346 = vpop.permute.xlu0 %345
      %v348 = vsub.f32 %v330, %v346
      %v349 = vmul.f32 %v348, 1.442695
      %v350 = vpow.pop %v349
      %v351 = vld [vmem:[#allocation3] sm:$0xff]
      %v352 = vmul.f32 %v342, %v351
      %v353 = vsel %vm288, %v350, 0.0
      %354 = vadd.xlane.f32.xlu0 %v353
      %v355 = vpop.xlane.xlu0 %354
      %v356 = vadd.f32 %v352, %v355
      %vm357 = vcmask 7168
      %358 = vst.msk [vmem:[#allocation3] sm:$0xff] %vm357, %v356
      %v359 = vld [vmem:[#allocation4] sm:$0xff]
      %361 = vset.pattern.permute.xlu0 0
      %362 = vperm.xlu0 %361, %v342
      %v363 = vpop.permute.xlu0 %362
      %v365 = vmul.f32 %v363, %v359
      %v366 = vpack.c.bf16 %v350, %v350
      %v368 = vsel %vm288, %v366, 0
      %vm370 = vcmask 1043456
      %v372 = vsel %vm370, %v287, 0
      %374 = vmatprep.subr.bf16.mxu0 0
      %375 = vmatpush1.bf16.msra.mxu0 %v372
      %376 = vmatprep.subr.bf16.mxu0 0
      %377 = vmatpush1.bf16.msra.mxu0 0
      %378 = vmatprep.subr.bf16.mxu0 0
      %379 = vmatpush1.bf16.msra.mxu0 0
      %380 = vmatprep.subr.bf16.mxu0 0
      %381 = vmatpush1.bf16.msra.mxu0 0
      %382 = vmatprep.subr.bf16.mxu0 0
      %383 = vmatpush1.bf16.msra.mxu0 0
      %384 = vmatprep.subr.bf16.mxu0 0
      %385 = vmatpush1.bf16.msra.mxu0 0
      %386 = vmatprep.subr.bf16.mxu0 0
      %387 = vmatpush1.bf16.msra.mxu0 0
      %388 = vmatprep.subr.bf16.mxu0 0
      %389 = vmatpush1.bf16.msra.mxu0 0
      %390 = vmatprep.subr.bf16.mxu0 0
      %391 = vmatpush1.bf16.msra.mxu0 0
      %392 = vmatprep.subr.bf16.mxu0 0
      %393 = vmatpush1.bf16.msra.mxu0 0
      %394 = vmatprep.subr.bf16.mxu0 0
      %395 = vmatpush1.bf16.msra.mxu0 0
      %396 = vmatprep.subr.bf16.mxu0 0
      %397 = vmatpush1.bf16.msra.mxu0 0
      %398 = vmatprep.subr.bf16.mxu0 0
      %399 = vmatpush1.bf16.msra.mxu0 0
      %400 = vmatprep.subr.bf16.mxu0 0
      %401 = vmatpush1.bf16.msra.mxu0 0
      %402 = vmatprep.subr.bf16.mxu0 0
      %403 = vmatpush1.bf16.msra.mxu0 0
      %404 = vmatprep.subr.bf16.mxu0 0
      %405 = vmatpush1.bf16.msra.mxu0 0
      %406 = vmatprep.mubr.bf16.mxu0 0
      %407 = vmatmul.mubr.bf16.gmra.mrb[0].mxu0 %v368
      %v408 = vpop.f32.mrb[0].mxu0
      %v409 = vadd.f32 0.0, %v408
      %v410 = vpop.f32.mrb[0].mxu0
      %v411 = vpop.f32.mrb[0].mxu0
      %v412 = vpop.f32.mrb[0].mxu0
      %413 = vdwg.mxu0
      %v414 = vadd.f32 %v365, %v409
      %415 = vst.msk [vmem:[#allocation4] sm:$0xff] %vm288, %v414
      %416 = vst.msk [vmem:[#allocation2] sm:$0xff] %vm357, %v339
      %v417 = vld [vmem:[%s242] sm:$0xf]
      %v418 = vld [vmem:[%s250] sm:$0xf]
      %v419 = vld [vmem:[%s258] sm:$0xf]
      %v421 = vunpack.c.l.b16 %v417
      %v422 = vpack.c.b16 %v421, %v421
      %423 = vrot.lane.b32.xlu0 %v422, 120
      %v424 = vpop.permute.xlu0 %423
      %v426 = vunpack.c.l.b16 %v418
      %v427 = vpack.c.b16 %v426, %v426
      %428 = vrot.lane.b32.xlu0 %v427, 120
      %v429 = vpop.permute.xlu0 %428
      %v431 = vsel %vm288, %v424, 0
      %v434 = vsel %vm288, %v429, 0
      %436 = vmatprep.subr.bf16.mxu0 0
      %437 = vmatpush1.bf16.xpose.msra.mxu0 %v434
      %438 = vmatprep.subr.bf16.mxu0 0
      %439 = vmatpush1.bf16.xpose.msra.mxu0 0
      %440 = vmatprep.subr.bf16.mxu0 0
      %441 = vmatpush1.bf16.xpose.msra.mxu0 0
      %442 = vmatprep.subr.bf16.mxu0 0
      %443 = vmatpush1.bf16.xpose.msra.mxu0 0
      %444 = vmatprep.subr.bf16.mxu0 0
      %445 = vmatpush1.bf16.xpose.msra.mxu0 0
      %446 = vmatprep.subr.bf16.mxu0 0
      %447 = vmatpush1.bf16.xpose.msra.mxu0 0
      %448 = vmatprep.subr.bf16.mxu0 0
      %449 = vmatpush1.bf16.xpose.msra.mxu0 0
      %450 = vmatprep.subr.bf16.mxu0 0
      %451 = vmatpush1.bf16.xpose.msra.mxu0 0
      %452 = vmatprep.subr.bf16.mxu0 0
      %453 = vmatpush1.bf16.xpose.msra.mxu0 0
      %454 = vmatprep.subr.bf16.mxu0 0
      %455 = vmatpush1.bf16.xpose.msra.mxu0 0
      %456 = vmatprep.subr.bf16.mxu0 0
      %457 = vmatpush1.bf16.xpose.msra.mxu0 0
      %458 = vmatprep.subr.bf16.mxu0 0
      %459 = vmatpush1.bf16.xpose.msra.mxu0 0
      %460 = vmatprep.subr.bf16.mxu0 0
      %461 = vmatpush1.bf16.xpose.msra.mxu0 0
      %462 = vmatprep.subr.bf16.mxu0 0
      %463 = vmatpush1.bf16.xpose.msra.mxu0 0
      %464 = vmatprep.subr.bf16.mxu0 0
      %465 = vmatpush1.bf16.xpose.msra.mxu0 0
      %466 = vmatprep.subr.bf16.mxu0 0
      %467 = vmatpush1.bf16.xpose.msra.mxu0 0
      %468 = vmatprep.mubr.bf16.mxu0 0
      %469 = vmatmul.mubr.bf16.gmra.mrb[0].mxu0 %v431
      %v470 = vpop.f32.mrb[0].mxu0
      %v471 = vadd.f32 0.0, %v470
      %v472 = vpop.f32.mrb[0].mxu0
      %v473 = vpop.f32.mrb[0].mxu0
      %v474 = vpop.f32.mrb[0].mxu0
      %475 = vdwg.mxu0
      %s476 = scalar_lea.vmem [#allocation2], 8
      %v477 = vld [vmem:[%s476] sm:$0xff]
      %v478 = vsel %vm288, %v471, -inf
      %479 = vmax.xlane.f32.xlu0 %v478
      %v480 = vpop.xlane.xlu0 %479
      %v481 = vmax.f32 %v477, %v480
      %v482 = vsub.f32 %v477, %v481
      %v483 = vmul.f32 %v482, 1.442695
      %v484 = vpow.pop %v483
      %486 = vset.pattern.permute.xlu0 0
      %487 = vperm.xlu0 %486, %v481
      %v488 = vpop.permute.xlu0 %487
      %v490 = vsub.f32 %v471, %v488
      %v491 = vmul.f32 %v490, 1.442695
      %v492 = vpow.pop %v491
      %s493 = scalar_lea.vmem [#allocation3], 8
      %v494 = vld [vmem:[%s493] sm:$0xff]
      %v495 = vmul.f32 %v484, %v494
      %v496 = vsel %vm288, %v492, 0.0
      %497 = vadd.xlane.f32.xlu0 %v496
      %v498 = vpop.xlane.xlu0 %497
      %v499 = vadd.f32 %v495, %v498
      %500 = vst.msk [vmem:[%s493] sm:$0xff] %vm357, %v499
      %s501 = scalar_lea.vmem [#allocation4], 8
      %v502 = vld [vmem:[%s501] sm:$0xff]
      %504 = vset.pattern.permute.xlu0 0
      %505 = vperm.xlu0 %504, %v484
      %v506 = vpop.permute.xlu0 %505
      %v508 = vmul.f32 %v506, %v502
      %v509 = vpack.c.bf16 %v492, %v492
      %v511 = vunpack.c.l.b16 %v419
      %v512 = vpack.c.b16 %v511, %v511
      %513 = vrot.lane.b32.xlu0 %v512, 120
      %v514 = vpop.permute.xlu0 %513
      %v516 = vsel %vm288, %v509, 0
      %v519 = vsel %vm370, %v514, 0
      %521 = vmatprep.subr.bf16.mxu0 0
      %522 = vmatpush1.bf16.msra.mxu0 %v519
      %523 = vmatprep.subr.bf16.mxu0 0
      %524 = vmatpush1.bf16.msra.mxu0 0
      %525 = vmatprep.subr.bf16.mxu0 0
      %526 = vmatpush1.bf16.msra.mxu0 0
      %527 = vmatprep.subr.bf16.mxu0 0
      %528 = vmatpush1.bf16.msra.mxu0 0
      %529 = vmatprep.subr.bf16.mxu0 0
      %530 = vmatpush1.bf16.msra.mxu0 0
      %531 = vmatprep.subr.bf16.mxu0 0
      %532 = vmatpush1.bf16.msra.mxu0 0
      %533 = vmatprep.subr.bf16.mxu0 0
      %534 = vmatpush1.bf16.msra.mxu0 0
      %535 = vmatprep.subr.bf16.mxu0 0
      %536 = vmatpush1.bf16.msra.mxu0 0
      %537 = vmatprep.subr.bf16.mxu0 0
      %538 = vmatpush1.bf16.msra.mxu0 0
      %539 = vmatprep.subr.bf16.mxu0 0
      %540 = vmatpush1.bf16.msra.mxu0 0
      %541 = vmatprep.subr.bf16.mxu0 0
      %542 = vmatpush1.bf16.msra.mxu0 0
      %543 = vmatprep.subr.bf16.mxu0 0
      %544 = vmatpush1.bf16.msra.mxu0 0
      %545 = vmatprep.subr.bf16.mxu0 0
      %546 = vmatpush1.bf16.msra.mxu0 0
      %547 = vmatprep.subr.bf16.mxu0 0
      %548 = vmatpush1.bf16.msra.mxu0 0
      %549 = vmatprep.subr.bf16.mxu0 0
      %550 = vmatpush1.bf16.msra.mxu0 0
      %551 = vmatprep.subr.bf16.mxu0 0
      %552 = vmatpush1.bf16.msra.mxu0 0
      %553 = vmatprep.mubr.bf16.mxu0 0
      %554 = vmatmul.mubr.bf16.gmra.mrb[0].mxu0 %v516
      %v555 = vpop.f32.mrb[0].mxu0
      %v556 = vadd.f32 0.0, %v555
      %v557 = vpop.f32.mrb[0].mxu0
      %v558 = vpop.f32.mrb[0].mxu0
      %v559 = vpop.f32.mrb[0].mxu0
      %560 = vdwg.mxu0
      %v561 = vadd.f32 %v508, %v556
      %562 = vst.msk [vmem:[%s501] sm:$0xff] %vm288, %v561
      %563 = vst.msk [vmem:[%s476] sm:$0xff] %vm357, %v481
      %v564 = vld [vmem:[%s242] sm:$0xf]
      %v565 = vld [vmem:[%s250] sm:$0xf]
      %v566 = vld [vmem:[%s258] sm:$0xf]
      %v568 = vunpack.c.l.b16 %v564
      %v569 = vpack.c.b16 %v568, %v568
      %570 = vrot.lane.b32.xlu0 %v569, 112
      %v571 = vpop.permute.xlu0 %570
      %v573 = vunpack.c.l.b16 %v565
      %v574 = vpack.c.b16 %v573, %v573
      %575 = vrot.lane.b32.xlu0 %v574, 112
      %v576 = vpop.permute.xlu0 %575
      %v578 = vsel %vm288, %v571, 0
      %v581 = vsel %vm288, %v576, 0
      %583 = vmatprep.subr.bf16.mxu0 0
      %584 = vmatpush1.bf16.xpose.msra.mxu0 %v581
      %585 = vmatprep.subr.bf16.mxu0 0
      %586 = vmatpush1.bf16.xpose.msra.mxu0 0
      %587 = vmatprep.subr.bf16.mxu0 0
      %588 = vmatpush1.bf16.xpose.msra.mxu0 0
      %589 = vmatprep.subr.bf16.mxu0 0
      %590 = vmatpush1.bf16.xpose.msra.mxu0 0
      %591 = vmatprep.subr.bf16.mxu0 0
      %592 = vmatpush1.bf16.xpose.msra.mxu0 0
      %593 = vmatprep.subr.bf16.mxu0 0
      %594 = vmatpush1.bf16.xpose.msra.mxu0 0
      %595 = vmatprep.subr.bf16.mxu0 0
      %596 = vmatpush1.bf16.xpose.msra.mxu0 0
      %597 = vmatprep.subr.bf16.mxu0 0
      %598 = vmatpush1.bf16.xpose.msra.mxu0 0
      %599 = vmatprep.subr.bf16.mxu0 0
      %600 = vmatpush1.bf16.xpose.msra.mxu0 0
      %601 = vmatprep.subr.bf16.mxu0 0
      %602 = vmatpush1.bf16.xpose.msra.mxu0 0
      %603 = vmatprep.subr.bf16.mxu0 0
      %604 = vmatpush1.bf16.xpose.msra.mxu0 0
      %605 = vmatprep.subr.bf16.mxu0 0
      %606 = vmatpush1.bf16.xpose.msra.mxu0 0
      %607 = vmatprep.subr.bf16.mxu0 0
      %608 = vmatpush1.bf16.xpose.msra.mxu0 0
      %609 = vmatprep.subr.bf16.mxu0 0
      %610 = vmatpush1.bf16.xpose.msra.mxu0 0
      %611 = vmatprep.subr.bf16.mxu0 0
      %612 = vmatpush1.bf16.xpose.msra.mxu0 0
      %613 = vmatprep.subr.bf16.mxu0 0
      %614 = vmatpush1.bf16.xpose.msra.mxu0 0
      %615 = vmatprep.mubr.bf16.mxu0 0
      %616 = vmatmul.mubr.bf16.gmra.mrb[0].mxu0 %v578
      %v617 = vpop.f32.mrb[0].mxu0
      %v618 = vadd.f32 0.0, %v617
      %v619 = vpop.f32.mrb[0].mxu0
      %v620 = vpop.f32.mrb[0].mxu0
      %v621 = vpop.f32.mrb[0].mxu0
      %622 = vdwg.mxu0
      %s623 = scalar_lea.vmem [#allocation2], 16
      %v624 = vld [vmem:[%s623] sm:$0xff]
      %v625 = vsel %vm288, %v618, -inf
      %626 = vmax.xlane.f32.xlu0 %v625
      %v627 = vpop.xlane.xlu0 %626
      %v628 = vmax.f32 %v624, %v627
      %v629 = vsub.f32 %v624, %v628
      %v630 = vmul.f32 %v629, 1.442695
      %v631 = vpow.pop %v630
      %633 = vset.pattern.permute.xlu0 0
      %634 = vperm.xlu0 %633, %v628
      %v635 = vpop.permute.xlu0 %634
      %v637 = vsub.f32 %v618, %v635
      %v638 = vmul.f32 %v637, 1.442695
      %v639 = vpow.pop %v638
      %s640 = scalar_lea.vmem [#allocation3], 16
      %v641 = vld [vmem:[%s640] sm:$0xff]
      %v642 = vmul.f32 %v631, %v641
      %v643 = vsel %vm288, %v639, 0.0
      %644 = vadd.xlane.f32.xlu0 %v643
      %v645 = vpop.xlane.xlu0 %644
      %v646 = vadd.f32 %v642, %v645
      %647 = vst.msk [vmem:[%s640] sm:$0xff] %vm357, %v646
      %s648 = scalar_lea.vmem [#allocation4], 16
      %v649 = vld [vmem:[%s648] sm:$0xff]
      %651 = vset.pattern.permute.xlu0 0
      %652 = vperm.xlu0 %651, %v631
      %v653 = vpop.permute.xlu0 %652
      %v655 = vmul.f32 %v653, %v649
      %v656 = vpack.c.bf16 %v639, %v639
      %v658 = vunpack.c.l.b16 %v566
      %v659 = vpack.c.b16 %v658, %v658
      %660 = vrot.lane.b32.xlu0 %v659, 112
      %v661 = vpop.permute.xlu0 %660
      %v663 = vsel %vm288, %v656, 0
      %v666 = vsel %vm370, %v661, 0
      %668 = vmatprep.subr.bf16.mxu0 0
      %669 = vmatpush1.bf16.msra.mxu0 %v666
      %670 = vmatprep.subr.bf16.mxu0 0
      %671 = vmatpush1.bf16.msra.mxu0 0
      %672 = vmatprep.subr.bf16.mxu0 0
      %673 = vmatpush1.bf16.msra.mxu0 0
      %674 = vmatprep.subr.bf16.mxu0 0
      %675 = vmatpush1.bf16.msra.mxu0 0
      %676 = vmatprep.subr.bf16.mxu0 0
      %677 = vmatpush1.bf16.msra.mxu0 0
      %678 = vmatprep.subr.bf16.mxu0 0
      %679 = vmatpush1.bf16.msra.mxu0 0
      %680 = vmatprep.subr.bf16.mxu0 0
      %681 = vmatpush1.bf16.msra.mxu0 0
      %682 = vmatprep.subr.bf16.mxu0 0
      %683 = vmatpush1.bf16.msra.mxu0 0
      %684 = vmatprep.subr.bf16.mxu0 0
      %685 = vmatpush1.bf16.msra.mxu0 0
      %686 = vmatprep.subr.bf16.mxu0 0
      %687 = vmatpush1.bf16.msra.mxu0 0
      %688 = vmatprep.subr.bf16.mxu0 0
      %689 = vmatpush1.bf16.msra.mxu0 0
      %690 = vmatprep.subr.bf16.mxu0 0
      %691 = vmatpush1.bf16.msra.mxu0 0
      %692 = vmatprep.subr.bf16.mxu0 0
      %693 = vmatpush1.bf16.msra.mxu0 0
      %694 = vmatprep.subr.bf16.mxu0 0
      %695 = vmatpush1.bf16.msra.mxu0 0
      %696 = vmatprep.subr.bf16.mxu0 0
      %697 = vmatpush1.bf16.msra.mxu0 0
      %698 = vmatprep.subr.bf16.mxu0 0
      %699 = vmatpush1.bf16.msra.mxu0 0
      %700 = vmatprep.mubr.bf16.mxu0 0
      %701 = vmatmul.mubr.bf16.gmra.mrb[0].mxu0 %v663
      %v702 = vpop.f32.mrb[0].mxu0
      %v703 = vadd.f32 0.0, %v702
      %v704 = vpop.f32.mrb[0].mxu0
      %v705 = vpop.f32.mrb[0].mxu0
      %v706 = vpop.f32.mrb[0].mxu0
      %707 = vdwg.mxu0
      %v708 = vadd.f32 %v655, %v703
      %709 = vst.msk [vmem:[%s648] sm:$0xff] %vm288, %v708
      %710 = vst.msk [vmem:[%s623] sm:$0xff] %vm357, %v628
      %v711 = vld [vmem:[%s242] sm:$0xf]
      %v712 = vld [vmem:[%s250] sm:$0xf]
      %v713 = vld [vmem:[%s258] sm:$0xf]
      %v715 = vunpack.c.l.b16 %v711
      %v716 = vpack.c.b16 %v715, %v715
      %717 = vrot.lane.b32.xlu0 %v716, 104
      %v718 = vpop.permute.xlu0 %717
      %v720 = vunpack.c.l.b16 %v712
      %v721 = vpack.c.b16 %v720, %v720
      %722 = vrot.lane.b32.xlu0 %v721, 104
      %v723 = vpop.permute.xlu0 %722
      %v725 = vsel %vm288, %v718, 0
      %v728 = vsel %vm288, %v723, 0
      %730 = vmatprep.subr.bf16.mxu0 0
      %731 = vmatpush1.bf16.xpose.msra.mxu0 %v728
      %732 = vmatprep.subr.bf16.mxu0 0
      %733 = vmatpush1.bf16.xpose.msra.mxu0 0
      %734 = vmatprep.subr.bf16.mxu0 0
      %735 = vmatpush1.bf16.xpose.msra.mxu0 0
      %736 = vmatprep.subr.bf16.mxu0 0
      %737 = vmatpush1.bf16.xpose.msra.mxu0 0
      %738 = vmatprep.subr.bf16.mxu0 0
      %739 = vmatpush1.bf16.xpose.msra.mxu0 0
      %740 = vmatprep.subr.bf16.mxu0 0
      %741 = vmatpush1.bf16.xpose.msra.mxu0 0
      %742 = vmatprep.subr.bf16.mxu0 0
      %743 = vmatpush1.bf16.xpose.msra.mxu0 0
      %744 = vmatprep.subr.bf16.mxu0 0
      %745 = vmatpush1.bf16.xpose.msra.mxu0 0
      %746 = vmatprep.subr.bf16.mxu0 0
      %747 = vmatpush1.bf16.xpose.msra.mxu0 0
      %748 = vmatprep.subr.bf16.mxu0 0
      %749 = vmatpush1.bf16.xpose.msra.mxu0 0
      %750 = vmatprep.subr.bf16.mxu0 0
      %751 = vmatpush1.bf16.xpose.msra.mxu0 0
      %752 = vmatprep.subr.bf16.mxu0 0
      %753 = vmatpush1.bf16.xpose.msra.mxu0 0
      %754 = vmatprep.subr.bf16.mxu0 0
      %755 = vmatpush1.bf16.xpose.msra.mxu0 0
      %756 = vmatprep.subr.bf16.mxu0 0
      %757 = vmatpush1.bf16.xpose.msra.mxu0 0
      %758 = vmatprep.subr.bf16.mxu0 0
      %759 = vmatpush1.bf16.xpose.msra.mxu0 0
      %760 = vmatprep.subr.bf16.mxu0 0
      %761 = vmatpush1.bf16.xpose.msra.mxu0 0
      %762 = vmatprep.mubr.bf16.mxu0 0
      %763 = vmatmul.mubr.bf16.gmra.mrb[0].mxu0 %v725
      %v764 = vpop.f32.mrb[0].mxu0
      %v765 = vadd.f32 0.0, %v764
      %v766 = vpop.f32.mrb[0].mxu0
      %v767 = vpop.f32.mrb[0].mxu0
      %v768 = vpop.f32.mrb[0].mxu0
      %769 = vdwg.mxu0
      %s770 = scalar_lea.vmem [#allocation2], 24
      %v771 = vld [vmem:[%s770] sm:$0xff]
      %v772 = vsel %vm288, %v765, -inf
      %773 = vmax.xlane.f32.xlu0 %v772
      %v774 = vpop.xlane.xlu0 %773
      %v775 = vmax.f32 %v771, %v774
      %v776 = vsub.f32 %v771, %v775
      %v777 = vmul.f32 %v776, 1.442695
      %v778 = vpow.pop %v777
      %780 = vset.pattern.permute.xlu0 0
      %781 = vperm.xlu0 %780, %v775
      %v782 = vpop.permute.xlu0 %781
      %v784 = vsub.f32 %v765, %v782
      %v785 = vmul.f32 %v784, 1.442695
      %v786 = vpow.pop %v785
      %s787 = scalar_lea.vmem [#allocation3], 24
      %v788 = vld [vmem:[%s787] sm:$0xff]
      %v789 = vmul.f32 %v778, %v788
      %v790 = vsel %vm288, %v786, 0.0
      %791 = vadd.xlane.f32.xlu0 %v790
      %v792 = vpop.xlane.xlu0 %791
      %v793 = vadd.f32 %v789, %v792
      %794 = vst.msk [vmem:[%s787] sm:$0xff] %vm357, %v793
      %s795 = scalar_lea.vmem [#allocation4], 24
      %v796 = vld [vmem:[%s795] sm:$0xff]
      %798 = vset.pattern.permute.xlu0 0
      %799 = vperm.xlu0 %798, %v778
      %v800 = vpop.permute.xlu0 %799
      %v802 = vmul.f32 %v800, %v796
      %v803 = vpack.c.bf16 %v786, %v786
      %v805 = vunpack.c.l.b16 %v713
      %v806 = vpack.c.b16 %v805, %v805
      %807 = vrot.lane.b32.xlu0 %v806, 104
      %v808 = vpop.permute.xlu0 %807
      %v810 = vsel %vm288, %v803, 0
      %v813 = vsel %vm370, %v808, 0
      %815 = vmatprep.subr.bf16.mxu0 0
      %816 = vmatpush1.bf16.msra.mxu0 %v813
      %817 = vmatprep.subr.bf16.mxu0 0
      %818 = vmatpush1.bf16.msra.mxu0 0
      %819 = vmatprep.subr.bf16.mxu0 0
      %820 = vmatpush1.bf16.msra.mxu0 0
      %821 = vmatprep.subr.bf16.mxu0 0
      %822 = vmatpush1.bf16.msra.mxu0 0
      %823 = vmatprep.subr.bf16.mxu0 0
      %824 = vmatpush1.bf16.msra.mxu0 0
      %825 = vmatprep.subr.bf16.mxu0 0
      %826 = vmatpush1.bf16.msra.mxu0 0
      %827 = vmatprep.subr.bf16.mxu0 0
      %828 = vmatpush1.bf16.msra.mxu0 0
      %829 = vmatprep.subr.bf16.mxu0 0
      %830 = vmatpush1.bf16.msra.mxu0 0
      %831 = vmatprep.subr.bf16.mxu0 0
      %832 = vmatpush1.bf16.msra.mxu0 0
      %833 = vmatprep.subr.bf16.mxu0 0
      %834 = vmatpush1.bf16.msra.mxu0 0
      %835 = vmatprep.subr.bf16.mxu0 0
      %836 = vmatpush1.bf16.msra.mxu0 0
      %837 = vmatprep.subr.bf16.mxu0 0
      %838 = vmatpush1.bf16.msra.mxu0 0
      %839 = vmatprep.subr.bf16.mxu0 0
      %840 = vmatpush1.bf16.msra.mxu0 0
      %841 = vmatprep.subr.bf16.mxu0 0
      %842 = vmatpush1.bf16.msra.mxu0 0
      %843 = vmatprep.subr.bf16.mxu0 0
      %844 = vmatpush1.bf16.msra.mxu0 0
      %845 = vmatprep.subr.bf16.mxu0 0
      %846 = vmatpush1.bf16.msra.mxu0 0
      %847 = vmatprep.mubr.bf16.mxu0 0
      %848 = vmatmul.mubr.bf16.gmra.mrb[0].mxu0 %v810
      %v849 = vpop.f32.mrb[0].mxu0
      %v850 = vadd.f32 0.0, %v849
      %v851 = vpop.f32.mrb[0].mxu0
      %v852 = vpop.f32.mrb[0].mxu0
      %v853 = vpop.f32.mrb[0].mxu0
      %854 = vdwg.mxu0
      %v855 = vadd.f32 %v802, %v850
      %856 = vst.msk [vmem:[%s795] sm:$0xff] %vm288, %v855
      %857 = vst.msk [vmem:[%s770] sm:$0xff] %vm357, %v775
      // Predicated region
      $region37: #{transformer_forward.30} parent=31 // pred_check
        %p858 = pneg %p267
      $region38: #{transformer_forward.30} parent=31 // pred_check_branch
        %860 = sbr.rel (%p858) target = $region40
      $region39: #{transformer_forward.30} parent=31 // pred_region
        %v861 = vld [vmem:[#allocation3] sm:$0xff]
        %v862 = vrcp.pop %v861
        %v863 = vld [vmem:[#allocation4] sm:$0xff]
        %865 = vset.pattern.permute.xlu0 0
        %866 = vperm.xlu0 %865, %v862
        %v867 = vpop.permute.xlu0 %866
        %v869 = vmul.f32 %v863, %v867
        %v870 = vpack.c.bf16 %v869, %v869
        %vm871 = vcmask 60416
        %872 = vst.msk [vmem:[%s265] sm:$0xf] %vm871, %v870
        %v873 = vld [vmem:[%s493] sm:$0xff]
        %v874 = vrcp.pop %v873
        %v875 = vld [vmem:[%s501] sm:$0xff]
        %877 = vset.pattern.permute.xlu0 0
        %878 = vperm.xlu0 %877, %v874
        %v879 = vpop.permute.xlu0 %878
        %v881 = vmul.f32 %v875, %v879
        %v882 = vpack.c.bf16 %v881, %v881
        %v884 = vunpack.c.l.b16 %v882
        %v885 = vpack.c.b16 %v884, %v884
        %886 = vrot.lane.b32.xlu0 %v885, 8
        %v887 = vpop.permute.xlu0 %886
        %vm889 = vcmask 126016
        %890 = vst.msk [vmem:[%s265] sm:$0xf] %vm889, %v887
        %v891 = vld [vmem:[%s640] sm:$0xff]
        %v892 = vrcp.pop %v891
        %v893 = vld [vmem:[%s648] sm:$0xff]
        %895 = vset.pattern.permute.xlu0 0
        %896 = vperm.xlu0 %895, %v892
        %v897 = vpop.permute.xlu0 %896
        %v899 = vmul.f32 %v893, %v897
        %v900 = vpack.c.bf16 %v899, %v899
        %v902 = vunpack.c.l.b16 %v900
        %v903 = vpack.c.b16 %v902, %v902
        %904 = vrot.lane.b32.xlu0 %v903, 16
        %v905 = vpop.permute.xlu0 %904
        %vm907 = vcmask 191616
        %908 = vst.msk [vmem:[%s265] sm:$0xf] %vm907, %v905
        %v909 = vld [vmem:[%s787] sm:$0xff]
        %v910 = vrcp.pop %v909
        %v911 = vld [vmem:[%s795] sm:$0xff]
        %913 = vset.pattern.permute.xlu0 0
        %914 = vperm.xlu0 %913, %v910
        %v915 = vpop.permute.xlu0 %914
        %v917 = vmul.f32 %v911, %v915
        %v918 = vpack.c.bf16 %v917, %v917
        %v920 = vunpack.c.l.b16 %v918
        %v921 = vpack.c.b16 %v920, %v920
        %922 = vrot.lane.b32.xlu0 %v921, 24
        %v923 = vpop.permute.xlu0 %922
        %vm925 = vcmask 257216
        %926 = vst.msk [vmem:[%s265] sm:$0xf] %vm925, %v923
      $region40: #{transformer_forward.30} parent=31 // pred_fallthru
        _
      %p927 = scmp.lt.s32.totalorder %s19, 1
      %s928 = scalar_select %p927, %s19, 1
      %p929 = scmp.lt.s32.totalorder %s20, 0
      %s930 = scalar_select %p929, %s20, 0
      %s931 = sadd.s32 %s930, %s928
      %s932 = smul.addr %s931, 4
      %s933 = scalar_lea.vmem %s3, %s932
      // Predicated region
      $region41: #{transformer_forward.30} parent=31 // pred_check
        %p934 = pneg %p137
      $region42: #{transformer_forward.30} parent=31 // pred_check_branch
        %936 = sbr.rel (%p934) target = $region44
      $region43: #{transformer_forward.30} parent=31 // pred_region
        _
      $region44: #{transformer_forward.30} parent=31 // pred_fallthru
        _
    $region32: #{transformer_forward.30} parent=5 // pred_fallthru
      _
    %p937 = scmp.le.s32.totalorder 2, %s9
    // Predicated region
    $region45: #{transformer_forward.30} parent=5 // pred_check
      %p938 = pneg %p937
    $region46: #{transformer_forward.30} parent=5 // pred_check_branch
      %940 = sbr.rel (%p938) target = $region48
    $region47: #{transformer_forward.30} parent=5 // pred_region
      %s941 = ssub.s32 %s9, 2
      // Predicated region
      $region49: #{transformer_forward.30} parent=47 // pred_check
        %p942 = pneg %p143
      $region50: #{transformer_forward.30} parent=47 // pred_check_branch
        %944 = sbr.rel (%p942) target = $region52
      $region51: #{transformer_forward.30} parent=47 // pred_region
        %p945 = scmp.lt.s32.totalorder %s22, 1
        %s946 = scalar_select %p945, %s22, 1
        %p947 = scmp.lt.s32.totalorder %s23, 0
        %s948 = scalar_select %p947, %s23, 0
        %s949 = sadd.s32 %s948, %s946
        %s950 = smul.addr %s949, 4
        %s951 = scalar_lea.vmem %s3, %s950
      $region52: #{transformer_forward.30} parent=47 // pred_fallthru
        _
    $region48: #{transformer_forward.30} parent=5 // pred_fallthru
      _
  $region6: #{transformer_forward.30} parent=0 // loop_footer
    %s13 = sadd.s32 1, %s9
  $region7: #{transformer_forward.30} parent=0 // loop_footer_branch
    %8 = sbr.rel target = $region3
  $region8: #{transformer_forward.30} parent=0 // loop_exit
    _

// kernel: transformer_forward.43
$region0: #{transformer_forward.43}
  #allocation0 [shape = 'u32[]', space=smem, size = 0x4, offset = 0x4, fixed_abs, tag = 'smem constant byte address 0x4 - core index']
  #allocation1 [shape = 'u32[144,128]{1,0:T(1,128)}', space=vmem, size = 0x12000, scoped, tag = 'internal scratch']
  #allocation2 [shape = 'f32[16,32]{1,0:T(8,128)}', space=vmem, size = 0x2000, scoped, tag = 'scratch operand']
  %s0 = inlined_call_operand.vmem [shape: bf16[16,32], index: 0, kind: input, shape index: {}]
  %s1 = inlined_call_operand.vmem [shape: bf16[2,32,32], index: 1, kind: input, shape index: {}]
  %s2 = inlined_call_operand.vmem [shape: bf16[2,1,32], index: 2, kind: input, shape index: {}]
  %s3 = inlined_call_operand.vmem [shape: bf16[2,16,32], index: 3, kind: output, shape index: {}]
  %s4 = sld [smem:[#allocation0]]
  $region53: #{transformer_forward.43} parent=0
    _
  %s6 = ssub.s32 1, %s4
  %s7 = scalar_select 0, %s6, %s4
  loop: start=0, step=1, limit=4
  $region2: #{transformer_forward.43} parent=0 // loop_pre_header
    _
  $region3: #{transformer_forward.43} parent=0 // loop_header
    %s9 = sphi 0, %s13
    %p10 = scmp.ge.s32.totalorder %s9, 4
    %s16 = sphi 0, %s42
    %s17 = sphi 0, %s38
    %s18 = sphi 0, %s34
    %s19 = sphi 0, %s30
    %s20 = sphi 0, %s16
    %s21 = sphi 0, %s17
    %s22 = sphi 0, %s18
    %s23 = sphi 0, %s19
    %s24 = sphi 0, %s20
    %s25 = sphi 0, %s21
    %s26 = sphi 0, %s22
    %s27 = sphi 0, %s23
    %s47 = sphi 0, %s49
    %s50 = sphi 0, %s47
    %s51 = sphi 0, %s50
    %s67 = sphi 0, %s51
    %s77 = sphi 0, %s79
    %s80 = sphi 0, %s77
    %s81 = sphi 0, %s80
    %s97 = sphi 0, %s81
    %s105 = sphi 0, %s107
    %s108 = sphi 0, %s105
    %s109 = sphi 0, %s108
    %s125 = sphi 0, %s109
    %s135 = sphi 0, %s137
    %s138 = sphi 0, %s135
    %s139 = sphi 0, %s138
    %s155 = sphi 0, %s139
  $region4: #{transformer_forward.43} parent=0 // loop_header_branch
    %12 = sbr.rel (%p10) target = $region8
  $region5: #{transformer_forward.43} parent=0 // loop_body
    %s14 = ssub.s32 %s9, 1
    %s15 = ssub.s32 %s9, 2
    %s28 = sadd.s32 1, %s19
    %p29 = scmp.ge.s32.totalorder %s28, 1
    %s30 = scalar_select %p29, 0, %s28
    %s31 = sadd.s32 1, %s18
    %s32 = scalar_select %p29, %s31, %s18
    %p33 = scmp.ge.s32.totalorder %s32, 1
    %s34 = scalar_select %p33, 0, %s32
    %s35 = sadd.s32 1, %s17
    %s36 = scalar_select %p33, %s35, %s17
    %p37 = scmp.ge.s32.totalorder %s36, 1
    %s38 = scalar_select %p37, 0, %s36
    %s39 = sadd.s32 1, %s16
    %s40 = scalar_select %p37, %s39, %s16
    %p41 = scmp.ge.s32.totalorder %s40, 2
    %s42 = scalar_select %p41, 0, %s40
    %s43 = ssub.s32 %s17, %s38
    %s44 = ssub.s32 %s19, %s30
    %s45 = sor.u32 %s43, %s44
    %p46 = scmp.eq.s32.totalorder %s45, 0
    %s48 = sadd.s32 %s47, 1
    %s49 = scalar_select %p46, %s47, %s48
    %p52 = pneg %p46
    %p53 = scmp.eq.s32.totalorder %s9, 1
    %p54 = por %p52, %p53
    %p55 = scmp.ne.s32.totalorder %s47, %s50
    %p56 = scmp.eq.s32.totalorder %s9, 0
    %p57 = por %p55, %p56
    %p58 = scmp.ne.s32.totalorder %s47, %s50
    %p59 = scmp.eq.s32.totalorder %s14, 1
    %p60 = por %p58, %p59
    %p61 = scmp.ne.s32.totalorder %s50, %s51
    %p62 = scmp.eq.s32.totalorder %s14, 0
    %p63 = por %p61, %p62
    %p64 = scmp.ne.s32.totalorder %s50, %s51
    %p65 = scmp.eq.s32.totalorder %s15, 1
    %p66 = por %p64, %p65
    %p68 = scmp.ne.s32.totalorder %s51, %s67
    %p69 = scmp.eq.s32.totalorder %s15, 0
    %p70 = por %p68, %p69
    %s71 = ssub.s32 %s16, %s42
    %s72 = ssub.s32 %s19, %s30
    %s73 = sor.u32 %s71, %s72
    %s74 = ssub.s32 %s18, %s34
    %s75 = sor.u32 %s73, %s74
    %p76 = scmp.eq.s32.totalorder %s75, 0
    %s78 = sadd.s32 %s77, 1
    %s79 = scalar_select %p76, %s77, %s78
    %p82 = pneg %p76
    %p83 = scmp.eq.s32.totalorder %s9, 1
    %p84 = por %p82, %p83
    %p85 = scmp.ne.s32.totalorder %s77, %s80
    %p86 = scmp.eq.s32.totalorder %s9, 0
    %p87 = por %p85, %p86
    %p88 = scmp.ne.s32.totalorder %s77, %s80
    %p89 = scmp.eq.s32.totalorder %s14, 1
    %p90 = por %p88, %p89
    %p91 = scmp.ne.s32.totalorder %s80, %s81
    %p92 = scmp.eq.s32.totalorder %s14, 0
    %p93 = por %p91, %p92
    %p94 = scmp.ne.s32.totalorder %s80, %s81
    %p95 = scmp.eq.s32.totalorder %s15, 1
    %p96 = por %p94, %p95
    %p98 = scmp.ne.s32.totalorder %s81, %s97
    %p99 = scmp.eq.s32.totalorder %s15, 0
    %p100 = por %p98, %p99
    %s101 = ssub.s32 %s16, %s42
    %s102 = ssub.s32 %s18, %s34
    %s103 = sor.u32 %s101, %s102
    %p104 = scmp.eq.s32.totalorder %s103, 0
    %s106 = sadd.s32 %s105, 1
    %s107 = scalar_select %p104, %s105, %s106
    %p110 = pneg %p104
    %p111 = scmp.eq.s32.totalorder %s9, 1
    %p112 = por %p110, %p111
    %p113 = scmp.ne.s32.totalorder %s105, %s108
    %p114 = scmp.eq.s32.totalorder %s9, 0
    %p115 = por %p113, %p114
    %p116 = scmp.ne.s32.totalorder %s105, %s108
    %p117 = scmp.eq.s32.totalorder %s14, 1
    %p118 = por %p116, %p117
    %p119 = scmp.ne.s32.totalorder %s108, %s109
    %p120 = scmp.eq.s32.totalorder %s14, 0
    %p121 = por %p119, %p120
    %p122 = scmp.ne.s32.totalorder %s108, %s109
    %p123 = scmp.eq.s32.totalorder %s15, 1
    %p124 = por %p122, %p123
    %p126 = scmp.ne.s32.totalorder %s109, %s125
    %p127 = scmp.eq.s32.totalorder %s15, 0
    %p128 = por %p126, %p127
    %s129 = ssub.s32 %s16, %s42
    %s130 = ssub.s32 %s17, %s38
    %s131 = sor.u32 %s129, %s130
    %s132 = ssub.s32 %s18, %s34
    %s133 = sor.u32 %s131, %s132
    %p134 = scmp.eq.s32.totalorder %s133, 0
    %s136 = sadd.s32 %s135, 1
    %s137 = scalar_select %p134, %s135, %s136
    %p140 = pneg %p134
    %p141 = scmp.eq.s32.totalorder %s9, 1
    %p142 = por %p140, %p141
    %p143 = scmp.ne.s32.totalorder %s135, %s138
    %p144 = scmp.eq.s32.totalorder %s9, 0
    %p145 = por %p143, %p144
    %p146 = scmp.ne.s32.totalorder %s135, %s138
    %p147 = scmp.eq.s32.totalorder %s14, 1
    %p148 = por %p146, %p147
    %p149 = scmp.ne.s32.totalorder %s138, %s139
    %p150 = scmp.eq.s32.totalorder %s14, 0
    %p151 = por %p149, %p150
    %p152 = scmp.ne.s32.totalorder %s138, %s139
    %p153 = scmp.eq.s32.totalorder %s15, 1
    %p154 = por %p152, %p153
    %p156 = scmp.ne.s32.totalorder %s139, %s155
    %p157 = scmp.eq.s32.totalorder %s15, 0
    %p158 = por %p156, %p157
    %p159 = scmp.le.s32.totalorder 1, %s9
    %p160 = scmp.lt.s32.totalorder %s9, 3
    %p161 = pnand %p159, %p160
    %p162 = pneg %p161
    // Predicated region
    $region9: #{transformer_forward.43} parent=5 // pred_check
      _
    $region10: #{transformer_forward.43} parent=5 // pred_check_branch
      %164 = sbr.rel (%p161) target = $region12
    $region11: #{transformer_forward.43} parent=5 // pred_region
      %s165 = ssub.s32 %s9, 1
      // Predicated region
      $region13: #{transformer_forward.43} parent=11 // pred_check
        %p166 = pneg %p63
      $region14: #{transformer_forward.43} parent=11 // pred_check_branch
        %168 = sbr.rel (%p166) target = $region16
      $region15: #{transformer_forward.43} parent=11 // pred_region
        %s169 = smul.u32 2, %s21
        %p170 = scmp.lt.s32.totalorder %s169, 1
        %s171 = scalar_select %p170, %s169, 1
        %p172 = scmp.lt.s32.totalorder %s23, 0
        %s173 = scalar_select %p172, %s23, 0
        %s174 = sadd.s32 %s173, %s171
        %s175 = smul.addr %s174, 4
        %s176 = scalar_lea.vmem %s0, %s175
        %s177 = smul.u32 2, %s21
      $region16: #{transformer_forward.43} parent=11 // pred_fallthru
        _
    $region12: #{transformer_forward.43} parent=5 // pred_fallthru
      _
    %p178 = scmp.lt.s32.totalorder %s9, 2
    // Predicated region
    $region17: #{transformer_forward.43} parent=5 // pred_check
      %p179 = pneg %p178
    $region18: #{transformer_forward.43} parent=5 // pred_check_branch
      %181 = sbr.rel (%p179) target = $region20
    $region19: #{transformer_forward.43} parent=5 // pred_region
      // Predicated region
      $region21: #{transformer_forward.43} parent=19 // pred_check
        %p182 = pneg %p87
      $region22: #{transformer_forward.43} parent=19 // pred_check_branch
        %184 = sbr.rel (%p182) target = $region24
      $region23: #{transformer_forward.43} parent=19 // pred_region
        %s185 = smul.u32 4, %s19
        %p186 = scmp.lt.s32.totalorder %s16, 1
        %s187 = scalar_select %p186, %s16, 1
        %p188 = scmp.lt.s32.totalorder %s185, 3
        %s189 = scalar_select %p188, %s185, 3
        %p190 = scmp.lt.s32.totalorder %s18, 0
        %s191 = scalar_select %p190, %s18, 0
        %s192 = sadd.s32 %s191, %s189
        %s193 = smul.addr %s187, 4
        %s194 = sadd.s32 %s192, %s193
        %s195 = smul.addr %s194, 4
        %s196 = scalar_lea.vmem %s1, %s195
        %s197 = smul.u32 4, %s19
      $region24: #{transformer_forward.43} parent=19 // pred_fallthru
        _
      // Predicated region
      $region25: #{transformer_forward.43} parent=19 // pred_check
        %p198 = pneg %p115
      $region26: #{transformer_forward.43} parent=19 // pred_check_branch
        %200 = sbr.rel (%p198) target = $region28
      $region27: #{transformer_forward.43} parent=19 // pred_region
        %p201 = scmp.lt.s32.totalorder %s16, 1
        %s202 = scalar_select %p201, %s16, 1
        %p203 = scmp.lt.s32.totalorder %s18, 0
        %s204 = scalar_select %p203, %s18, 0
        %s205 = sadd.s32 %s204, %s202
        %s206 = scalar_lea.vmem %s2, %s205
      $region28: #{transformer_forward.43} parent=19 // pred_fallthru
        _
    $region20: #{transformer_forward.43} parent=5 // pred_fallthru
      _
    %p207 = scmp.le.s32.totalorder 1, %s9
    %p208 = scmp.lt.s32.totalorder %s9, 3
    %p209 = pnand %p207, %p208
    %p210 = pneg %p209
    // Predicated region
    $region29: #{transformer_forward.43} parent=5 // pred_check
      _
    $region30: #{transformer_forward.43} parent=5 // pred_check_branch
      %212 = sbr.rel (%p209) target = $region32
    $region31: #{transformer_forward.43} parent=5 // pred_region
      %s213 = ssub.s32 %s9, 1
      %s214 = smul.u32 2, %s21
      %p215 = scmp.lt.s32.totalorder %s214, 1
      %s216 = scalar_select %p215, %s214, 1
      %p217 = scmp.lt.s32.totalorder %s23, 0
      %s218 = scalar_select %p217, %s23, 0
      %s219 = sadd.s32 %s218, %s216
      %s220 = smul.addr %s219, 4
      %s221 = scalar_lea.vmem %s0, %s220
      %p222 = pneg %p63
      %p223 = pneg %p60
      %s224 = smul.u32 4, %s23
      %p225 = scmp.lt.s32.totalorder %s20, 1
      %s226 = scalar_select %p225, %s20, 1
      %p227 = scmp.lt.s32.totalorder %s224, 3
      %s228 = scalar_select %p227, %s224, 3
      %p229 = scmp.lt.s32.totalorder %s22, 0
      %s230 = scalar_select %p229, %s22, 0
      %s231 = sadd.s32 %s230, %s228
      %s232 = smul.addr %s226, 4
      %s233 = sadd.s32 %s231, %s232
      %s234 = smul.addr %s233, 4
      %s235 = scalar_lea.vmem %s1, %s234
      %p236 = pneg %p93
      %p237 = pneg %p90
      %p238 = scmp.lt.s32.totalorder %s20, 1
      %s239 = scalar_select %p238, %s20, 1
      %p240 = scmp.lt.s32.totalorder %s22, 0
      %s241 = scalar_select %p240, %s22, 0
      %s242 = sadd.s32 %s241, %s239
      %s243 = scalar_lea.vmem %s2, %s242
      %p244 = pneg %p121
      %p245 = pneg %p118
      %p246 = pneg %p151
      %p247 = pneg %p148
      %s248 = smul.u32 2, %s21
      %p249 = scmp.lt.s32.totalorder %s20, 1
      %s250 = scalar_select %p249, %s20, 1
      %p251 = scmp.lt.s32.totalorder %s248, 1
      %s252 = scalar_select %p251, %s248, 1
      %p253 = scmp.lt.s32.totalorder %s22, 0
      %s254 = scalar_select %p253, %s22, 0
      %s255 = sadd.s32 %s254, %s252
      %s256 = smul.addr %s250, 2
      %s257 = sadd.s32 %s255, %s256
      %s258 = smul.addr %s257, 4
      %s259 = scalar_lea.vmem %s3, %s258
      %s260 = smul.u32 2, %s21
      %p261 = scmp.lt.s32.totalorder %s260, 1
      %s262 = scalar_select %p261, %s260, 1
      %p263 = scmp.lt.s32.totalorder %s23, 0
      %s264 = scalar_select %p263, %s23, 0
      %s265 = sadd.s32 %s264, %s262
      %s266 = smul.addr %s265, 4
      %s267 = scalar_lea.vmem %s0, %s266
      %s268 = smul.u32 2, %s21
      %s269 = smul.u32 4, %s23
      %p270 = scmp.lt.s32.totalorder %s20, 1
      %s271 = scalar_select %p270, %s20, 1
      %p272 = scmp.lt.s32.totalorder %s269, 3
      %s273 = scalar_select %p272, %s269, 3
      %p274 = scmp.lt.s32.totalorder %s22, 0
      %s275 = scalar_select %p274, %s22, 0
      %s276 = sadd.s32 %s275, %s273
      %s277 = smul.addr %s271, 4
      %s278 = sadd.s32 %s276, %s277
      %s279 = smul.addr %s278, 4
      %s280 = scalar_lea.vmem %s1, %s279
      %s281 = smul.u32 4, %s23
      %p282 = scmp.lt.s32.totalorder %s20, 1
      %s283 = scalar_select %p282, %s20, 1
      %p284 = scmp.lt.s32.totalorder %s22, 0
      %s285 = scalar_select %p284, %s22, 0
      %s286 = sadd.s32 %s285, %s283
      %s287 = scalar_lea.vmem %s2, %s286
      %s288 = smul.u32 2, %s21
      %p289 = scmp.lt.s32.totalorder %s20, 1
      %s290 = scalar_select %p289, %s20, 1
      %p291 = scmp.lt.s32.totalorder %s288, 1
      %s292 = scalar_select %p291, %s288, 1
      %p293 = scmp.lt.s32.totalorder %s22, 0
      %s294 = scalar_select %p293, %s22, 0
      %s295 = sadd.s32 %s294, %s292
      %s296 = smul.addr %s290, 2
      %s297 = sadd.s32 %s295, %s296
      %s298 = smul.addr %s297, 4
      %s299 = scalar_lea.vmem %s3, %s298
      %s300 = smul.u32 2, %s21
      %p302 = scmp.eq.s32.totalorder %s23, 0
      // Predicated region
      $region33: #{transformer_forward.43} parent=31 // pred_check
        %p303 = pneg %p302
      $region34: #{transformer_forward.43} parent=31 // pred_check_branch
        %305 = sbr.rel (%p303) target = $region36
      $region35: #{transformer_forward.43} parent=31 // pred_region
        %vm306 = vcmask 261120
        %307 = vst.msk [vmem:[#allocation2] sm:$0xff] %vm306, 0.0
        %308 = vst.msk [vmem:[#allocation2 + $0x8] sm:$0xff] %vm306, 0.0
      $region36: #{transformer_forward.43} parent=31 // pred_fallthru
        _
      %v309 = vld [vmem:[#allocation2] sm:$0xff]
      %v310 = vld [vmem:[#allocation2 + $0x8] sm:$0xff]
      %v311 = vld [vmem:[%s267] sm:$0xf]
      %v312 = vld [vmem:[%s267 + $0x4] sm:$0xf]
      %v313 = vld [vmem:[%s280] sm:$0xf]
      %v314 = vld [vmem:[%s280 + $0x4] sm:$0xf]
      %v315 = vld [vmem:[%s280 + $0x8] sm:$0xf]
      %v316 = vld [vmem:[%s280 + $0xc] sm:$0xf]
      %v319 = vunpack.c.l.b16 %v311
      %v320 = vunpack.c.l.b16 %v312
      %v321 = vpack.c.b16 %v320, %v319
      %v326 = vunpack.c.l.b16 %v313
      %v327 = vunpack.c.l.b16 %v314
      %v328 = vunpack.c.l.b16 %v315
      %v329 = vunpack.c.l.b16 %v316
      %v330 = vpack.c.b16 %v327, %v326
      %v331 = vpack.c.b16 %v329, %v328
      %vm334 = vcmask 261120
      %v336 = vsel %vm334, %v321, 0
      %338 = vmatprep.subr.bf16.mxu0 0
      %339 = vmatpush1.bf16.msra.mxu0 %v330
      %340 = vmatprep.subr.bf16.mxu0 0
      %341 = vmatpush1.bf16.msra.mxu0 %v331
      %342 = vmatprep.subr.bf16.mxu0 0
      %343 = vmatpush1.bf16.msra.mxu0 0
      %344 = vmatprep.subr.bf16.mxu0 0
      %345 = vmatpush1.bf16.msra.mxu0 0
      %346 = vmatprep.subr.bf16.mxu0 0
      %347 = vmatpush1.bf16.msra.mxu0 0
      %348 = vmatprep.subr.bf16.mxu0 0
      %349 = vmatpush1.bf16.msra.mxu0 0
      %350 = vmatprep.subr.bf16.mxu0 0
      %351 = vmatpush1.bf16.msra.mxu0 0
      %352 = vmatprep.subr.bf16.mxu0 0
      %353 = vmatpush1.bf16.msra.mxu0 0
      %354 = vmatprep.subr.bf16.mxu0 0
      %355 = vmatpush1.bf16.msra.mxu0 0
      %356 = vmatprep.subr.bf16.mxu0 0
      %357 = vmatpush1.bf16.msra.mxu0 0
      %358 = vmatprep.subr.bf16.mxu0 0
      %359 = vmatpush1.bf16.msra.mxu0 0
      %360 = vmatprep.subr.bf16.mxu0 0
      %361 = vmatpush1.bf16.msra.mxu0 0
      %362 = vmatprep.subr.bf16.mxu0 0
      %363 = vmatpush1.bf16.msra.mxu0 0
      %364 = vmatprep.subr.bf16.mxu0 0
      %365 = vmatpush1.bf16.msra.mxu0 0
      %366 = vmatprep.subr.bf16.mxu0 0
      %367 = vmatpush1.bf16.msra.mxu0 0
      %368 = vmatprep.subr.bf16.mxu0 0
      %369 = vmatpush1.bf16.msra.mxu0 0
      %370 = vmatprep.mubr.bf16.mxu0 0
      %371 = vmatmul.mubr.bf16.gmra.mrb[0].mxu0 %v336
      %v372 = vpop.f32.mrb[0].mxu0
      %v373 = vadd.f32 0.0, %v372
      %v374 = vpop.f32.mrb[0].mxu0
      %v375 = vpop.f32.mrb[0].mxu0
      %v376 = vadd.f32 0.0, %v375
      %v377 = vpop.f32.mrb[0].mxu0
      %378 = vdwg.mxu0
      %v379 = vadd.f32 %v309, %v373
      %v380 = vadd.f32 %v310, %v376
      %381 = vst.msk [vmem:[#allocation2] sm:$0xff] %vm334, %v379
      %382 = vst.msk [vmem:[#allocation2 + $0x8] sm:$0xff] %vm334, %v380
      // Predicated region
      $region37: #{transformer_forward.43} parent=31 // pred_check
        %p383 = pneg %p302
      $region38: #{transformer_forward.43} parent=31 // pred_check_branch
        %385 = sbr.rel (%p383) target = $region40
      $region39: #{transformer_forward.43} parent=31 // pred_region
        %v386 = vld [vmem:[#allocation2] sm:$0xff]
        %v387 = vld [vmem:[#allocation2 + $0x8] sm:$0xff]
        %v388 = vld [vmem:[%s287] sm:$0x1]
        %v389 = vunpack.c.l.bf16 %v388
        %v390 = vlaneseq
        %v391 = vshrl.u32 %v390, 7
        %v392 = vsub.s32 0, %v391
        %v393 = vrot.slane %v389, %v392
        %v394 = vadd.f32 %v386, %v393
        %v395 = vadd.f32 %v387, %v393
        %v396 = vpack.c.bf16 %v395, %v394
        %v398 = vunpack.c.l.b16 %v396
        %v399 = vunpack.c.h.b16 %v396
        %v400 = vpack.c.b16 %v398, %v398
        %v401 = vpack.c.b16 %v399, %v399
        %vm404 = vcmask 257024
        %405 = vst.msk [vmem:[%s299] sm:$0xf] %vm404, %v400
        %406 = vst.msk [vmem:[%s299 + $0x4] sm:$0xf] %vm404, %v401
      $region40: #{transformer_forward.43} parent=31 // pred_fallthru
        _
      %s407 = smul.u32 2, %s21
      %p408 = scmp.lt.s32.totalorder %s20, 1
      %s409 = scalar_select %p408, %s20, 1
      %p410 = scmp.lt.s32.totalorder %s407, 1
      %s411 = scalar_select %p410, %s407, 1
      %p412 = scmp.lt.s32.totalorder %s22, 0
      %s413 = scalar_select %p412, %s22, 0
      %s414 = sadd.s32 %s413, %s411
      %s415 = smul.addr %s409, 2
      %s416 = sadd.s32 %s414, %s415
      %s417 = smul.addr %s416, 4
      %s418 = scalar_lea.vmem %s3, %s417
      // Predicated region
      $region41: #{transformer_forward.43} parent=31 // pred_check
        %p419 = pneg %p148
      $region42: #{transformer_forward.43} parent=31 // pred_check_branch
        %421 = sbr.rel (%p419) target = $region44
      $region43: #{transformer_forward.43} parent=31 // pred_region
        %s422 = smul.u32 2, %s21
      $region44: #{transformer_forward.43} parent=31 // pred_fallthru
        _
    $region32: #{transformer_forward.43} parent=5 // pred_fallthru
      _
    %p423 = scmp.le.s32.totalorder 2, %s9
    // Predicated region
    $region45: #{transformer_forward.43} parent=5 // pred_check
      %p424 = pneg %p423
    $region46: #{transformer_forward.43} parent=5 // pred_check_branch
      %426 = sbr.rel (%p424) target = $region48
    $region47: #{transformer_forward.43} parent=5 // pred_region
      %s427 = ssub.s32 %s9, 2
      // Predicated region
      $region49: #{transformer_forward.43} parent=47 // pred_check
        %p428 = pneg %p154
      $region50: #{transformer_forward.43} parent=47 // pred_check_branch
        %430 = sbr.rel (%p428) target = $region52
      $region51: #{transformer_forward.43} parent=47 // pred_region
        %s431 = smul.u32 2, %s25
        %p432 = scmp.lt.s32.totalorder %s24, 1
        %s433 = scalar_select %p432, %s24, 1
        %p434 = scmp.lt.s32.totalorder %s431, 1
        %s435 = scalar_select %p434, %s431, 1
        %p436 = scmp.lt.s32.totalorder %s26, 0
        %s437 = scalar_select %p436, %s26, 0
        %s438 = sadd.s32 %s437, %s435
        %s439 = smul.addr %s433, 2
        %s440 = sadd.s32 %s438, %s439
        %s441 = smul.addr %s440, 4
        %s442 = scalar_lea.vmem %s3, %s441
      $region52: #{transformer_forward.43} parent=47 // pred_fallthru
        _
    $region48: #{transformer_forward.43} parent=5 // pred_fallthru
      _
  $region6: #{transformer_forward.43} parent=0 // loop_footer
    %s13 = sadd.s32 1, %s9
  $region7: #{transformer_forward.43} parent=0 // loop_footer_branch
    %8 = sbr.rel target = $region3
  $region8: #{transformer_forward.43} parent=0 // loop_exit
    _

// kernel: transformer_forward.33
$region0: #{transformer_forward.33}
  #allocation0 [shape = 'u32[]', space=smem, size = 0x4, offset = 0x4, fixed_abs, tag = 'smem constant byte address 0x4 - core index']
  #allocation1 [shape = 'u32[144,128]{1,0:T(1,128)}', space=vmem, size = 0x12000, scoped, tag = 'internal scratch']
  #allocation2 [shape = 'f32[16,32]{1,0:T(8,128)}', space=vmem, size = 0x2000, scoped, tag = 'scratch operand']
  %s0 = inlined_call_operand.vmem [shape: bf16[16,64], index: 0, kind: input, shape index: {}]
  %s1 = inlined_call_operand.vmem [shape: bf16[64,32], index: 1, kind: input, shape index: {}]
  %s2 = inlined_call_operand.vmem [shape: bf16[1,32], index: 2, kind: input, shape index: {}]
  %s3 = inlined_call_operand.vmem [shape: bf16[16,32], index: 3, kind: input, shape index: {}]
  %s4 = inlined_call_operand.vmem [shape: bf16[1,32], index: 4, kind: input, shape index: {}]
  %s5 = inlined_call_operand.vmem [shape: bf16[1,32], index: 5, kind: input, shape index: {}]
  %s6 = inlined_call_operand.vmem [shape: bf16[16,32], index: 6, kind: output, shape index: {}]
  %s7 = sld [smem:[#allocation0]]
  $region42: #{transformer_forward.33} parent=0
    _
  %s9 = ssub.s32 1, %s7
  %s10 = scalar_select 0, %s9, %s7
  // Predicated region
  $region2: #{transformer_forward.33} parent=0 // pred_check
    _
  $region3: #{transformer_forward.33} parent=0 // pred_check_branch
    %12 = sbr.rel (0) target = $region5
  $region4: #{transformer_forward.33} parent=0 // pred_region
    _
  $region5: #{transformer_forward.33} parent=0 // pred_fallthru
    _
  // Predicated region
  $region6: #{transformer_forward.33} parent=0 // pred_check
    _
  $region7: #{transformer_forward.33} parent=0 // pred_check_branch
    %14 = sbr.rel (0) target = $region9
  $region8: #{transformer_forward.33} parent=0 // pred_region
    _
  $region9: #{transformer_forward.33} parent=0 // pred_fallthru
    _
  // Predicated region
  $region10: #{transformer_forward.33} parent=0 // pred_check
    _
  $region11: #{transformer_forward.33} parent=0 // pred_check_branch
    %16 = sbr.rel (0) target = $region13
  $region12: #{transformer_forward.33} parent=0 // pred_region
    _
  $region13: #{transformer_forward.33} parent=0 // pred_fallthru
    _
  // Predicated region
  $region14: #{transformer_forward.33} parent=0 // pred_check
    _
  $region15: #{transformer_forward.33} parent=0 // pred_check_branch
    %18 = sbr.rel (0) target = $region17
  $region16: #{transformer_forward.33} parent=0 // pred_region
    _
  $region17: #{transformer_forward.33} parent=0 // pred_fallthru
    _
  // Predicated region
  $region18: #{transformer_forward.33} parent=0 // pred_check
    _
  $region19: #{transformer_forward.33} parent=0 // pred_check_branch
    %20 = sbr.rel (0) target = $region21
  $region20: #{transformer_forward.33} parent=0 // pred_region
    _
  $region21: #{transformer_forward.33} parent=0 // pred_fallthru
    _
  // Predicated region
  $region22: #{transformer_forward.33} parent=0 // pred_check
    _
  $region23: #{transformer_forward.33} parent=0 // pred_check_branch
    %22 = sbr.rel (0) target = $region25
  $region24: #{transformer_forward.33} parent=0 // pred_region
    _
  $region25: #{transformer_forward.33} parent=0 // pred_fallthru
    _
  %p24 = scmp.eq.s32.totalorder 0, 0
  // Predicated region
  $region26: #{transformer_forward.33} parent=0 // pred_check
    %p25 = pneg %p24
  $region27: #{transformer_forward.33} parent=0 // pred_check_branch
    %27 = sbr.rel (%p25) target = $region29
  $region28: #{transformer_forward.33} parent=0 // pred_region
    %vm28 = vcmask 261120
    %29 = vst.msk [vmem:[#allocation2] sm:$0xff] %vm28, 0.0
    %30 = vst.msk [vmem:[#allocation2 + $0x8] sm:$0xff] %vm28, 0.0
  $region29: #{transformer_forward.33} parent=0 // pred_fallthru
    _
  %v31 = vld [vmem:[#allocation2] sm:$0xff]
  %v32 = vld [vmem:[#allocation2 + $0x8] sm:$0xff]
  %v33 = vld [vmem:[%s0] sm:$0xf]
  %v34 = vld [vmem:[%s0 + $0x4] sm:$0xf]
  %v35 = vld [vmem:[%s1] sm:$0xf]
  %v36 = vld [vmem:[%s1 + $0x4] sm:$0xf]
  %v37 = vld [vmem:[%s1 + $0x8] sm:$0xf]
  %v38 = vld [vmem:[%s1 + $0xc] sm:$0xf]
  %v39 = vld [vmem:[%s1 + $0x10] sm:$0xf]
  %v40 = vld [vmem:[%s1 + $0x14] sm:$0xf]
  %v41 = vld [vmem:[%s1 + $0x18] sm:$0xf]
  %v42 = vld [vmem:[%s1 + $0x1c] sm:$0xf]
  %v45 = vunpack.c.l.b16 %v33
  %v46 = vunpack.c.l.b16 %v34
  %v47 = vpack.c.b16 %v46, %v45
  %v56 = vunpack.c.l.b16 %v35
  %v57 = vunpack.c.l.b16 %v36
  %v58 = vunpack.c.l.b16 %v37
  %v59 = vunpack.c.l.b16 %v38
  %v60 = vunpack.c.l.b16 %v39
  %v61 = vunpack.c.l.b16 %v40
  %v62 = vunpack.c.l.b16 %v41
  %v63 = vunpack.c.l.b16 %v42
  %v64 = vpack.c.b16 %v57, %v56
  %v65 = vpack.c.b16 %v59, %v58
  %v66 = vpack.c.b16 %v61, %v60
  %v67 = vpack.c.b16 %v63, %v62
  %vm72 = vcmask 523264
  %v74 = vsel %vm72, %v47, 0
  %76 = vmatprep.subr.bf16.mxu0 0
  %77 = vmatpush1.bf16.msra.mxu0 %v64
  %78 = vmatprep.subr.bf16.mxu0 0
  %79 = vmatpush1.bf16.msra.mxu0 %v65
  %80 = vmatprep.subr.bf16.mxu0 0
  %81 = vmatpush1.bf16.msra.mxu0 %v66
  %82 = vmatprep.subr.bf16.mxu0 0
  %83 = vmatpush1.bf16.msra.mxu0 %v67
  %84 = vmatprep.subr.bf16.mxu0 0
  %85 = vmatpush1.bf16.msra.mxu0 0
  %86 = vmatprep.subr.bf16.mxu0 0
  %87 = vmatpush1.bf16.msra.mxu0 0
  %88 = vmatprep.subr.bf16.mxu0 0
  %89 = vmatpush1.bf16.msra.mxu0 0
  %90 = vmatprep.subr.bf16.mxu0 0
  %91 = vmatpush1.bf16.msra.mxu0 0
  %92 = vmatprep.subr.bf16.mxu0 0
  %93 = vmatpush1.bf16.msra.mxu0 0
  %94 = vmatprep.subr.bf16.mxu0 0
  %95 = vmatpush1.bf16.msra.mxu0 0
  %96 = vmatprep.subr.bf16.mxu0 0
  %97 = vmatpush1.bf16.msra.mxu0 0
  %98 = vmatprep.subr.bf16.mxu0 0
  %99 = vmatpush1.bf16.msra.mxu0 0
  %100 = vmatprep.subr.bf16.mxu0 0
  %101 = vmatpush1.bf16.msra.mxu0 0
  %102 = vmatprep.subr.bf16.mxu0 0
  %103 = vmatpush1.bf16.msra.mxu0 0
  %104 = vmatprep.subr.bf16.mxu0 0
  %105 = vmatpush1.bf16.msra.mxu0 0
  %106 = vmatprep.subr.bf16.mxu0 0
  %107 = vmatpush1.bf16.msra.mxu0 0
  %108 = vmatprep.mubr.bf16.mxu0 0
  %109 = vmatmul.mubr.bf16.gmra.mrb[0].mxu0 %v74
  %v110 = vpop.f32.mrb[0].mxu0
  %v111 = vadd.f32 0.0, %v110
  %v112 = vpop.f32.mrb[0].mxu0
  %v113 = vpop.f32.mrb[0].mxu0
  %v114 = vadd.f32 0.0, %v113
  %v115 = vpop.f32.mrb[0].mxu0
  %116 = vdwg.mxu0
  %v117 = vadd.f32 %v31, %v111
  %v118 = vadd.f32 %v32, %v114
  %vm119 = vcmask 261120
  %120 = vst.msk [vmem:[#allocation2] sm:$0xff] %vm119, %v117
  %121 = vst.msk [vmem:[#allocation2 + $0x8] sm:$0xff] %vm119, %v118
  // Predicated region
  $region30: #{transformer_forward.33} parent=0 // pred_check
    %p122 = pneg %p24
  $region31: #{transformer_forward.33} parent=0 // pred_check_branch
    %124 = sbr.rel (%p122) target = $region33
  $region32: #{transformer_forward.33} parent=0 // pred_region
    %v125 = vld [vmem:[#allocation2] sm:$0xff]
    %v126 = vld [vmem:[#allocation2 + $0x8] sm:$0xff]
    %v127 = vld [vmem:[%s2] sm:$0x1]
    %v128 = vunpack.c.l.bf16 %v127
    %v129 = vlaneseq
    %v130 = vshrl.u32 %v129, 7
    %v131 = vsub.s32 0, %v130
    %v132 = vrot.slane %v128, %v131
    %v133 = vadd.f32 %v125, %v132
    %v134 = vadd.f32 %v126, %v132
    %v135 = vld [vmem:[%s3] sm:$0xf]
    %v136 = vld [vmem:[%s3 + $0x4] sm:$0xf]
    %v137 = vunpack.c.l.bf16 %v135
    %v138 = vunpack.c.l.bf16 %v136
    %v139 = vadd.f32 %v133, %v137
    %v140 = vadd.f32 %v134, %v138
    %v141 = vsel %vm119, %v139, 0.0
    %142 = vadd.xlane.f32.xlu0 %v141
    %v143 = vpop.xlane.xlu0 %142
    %v144 = vsel %vm119, %v140, 0.0
    %145 = vadd.xlane.f32.xlu0 %v144
    %v146 = vpop.xlane.xlu0 %145
    %v147 = vrcp.pop 32.0
    %v148 = vmul.f32 %v143, %v147
    %v149 = vmul.f32 %v146, %v147
    %v150 = vsub.f32 %v139, %v148
    %v151 = vsub.f32 %v140, %v149
    %v152 = vmul.f32 %v150, %v150
    %v153 = vmul.f32 %v151, %v151
    %v154 = vsel %vm119, %v152, 0.0
    %155 = vadd.xlane.f32.xlu0 %v154
    %v156 = vpop.xlane.xlu0 %155
    %v157 = vsel %vm119, %v153, 0.0
    %158 = vadd.xlane.f32.xlu0 %v157
    %v159 = vpop.xlane.xlu0 %158
    %v160 = vmul.f32 %v156, %v147
    %v161 = vmul.f32 %v159, %v147
    %v162 = vadd.f32 %v160, 1e-05
    %v163 = vadd.f32 %v161, 1e-05
    %v164 = vrsqrt.pop %v162
    %v165 = vrsqrt.pop %v163
    %v166 = vmul.f32 %v150, %v164
    %v167 = vmul.f32 %v151, %v165
    %v168 = vld [vmem:[%s4] sm:$0x1]
    %v169 = vunpack.c.l.bf16 %v168
    %v170 = vlaneseq
    %v171 = vshrl.u32 %v170, 7
    %v172 = vsub.s32 0, %v171
    %v173 = vrot.slane %v169, %v172
    %v174 = vmul.f32 %v166, %v173
    %v175 = vmul.f32 %v167, %v173
    %v176 = vld [vmem:[%s5] sm:$0x1]
    %v177 = vunpack.c.l.bf16 %v176
    %v178 = vlaneseq
    %v179 = vshrl.u32 %v178, 7
    %v180 = vsub.s32 0, %v179
    %v181 = vrot.slane %v177, %v180
    %v182 = vadd.f32 %v174, %v181
    %v183 = vadd.f32 %v175, %v181
    %v184 = vpack.c.bf16 %v183, %v182
    %v186 = vunpack.c.l.b16 %v184
    %v187 = vunpack.c.h.b16 %v184
    %v188 = vpack.c.b16 %v186, %v186
    %v189 = vpack.c.b16 %v187, %v187
    %vm192 = vcmask 257024
    %193 = vst.msk [vmem:[%s6] sm:$0xf] %vm192, %v188
    %194 = vst.msk [vmem:[%s6 + $0x4] sm:$0xf] %vm192, %v189
  $region33: #{transformer_forward.33} parent=0 // pred_fallthru
    _
  // Predicated region
  $region34: #{transformer_forward.33} parent=0 // pred_check
    _
  $region35: #{transformer_forward.33} parent=0 // pred_check_branch
    %196 = sbr.rel (0) target = $region37
  $region36: #{transformer_forward.33} parent=0 // pred_region
    _
  $region37: #{transformer_forward.33} parent=0 // pred_fallthru
    _
  // Predicated region
  $region38: #{transformer_forward.33} parent=0 // pred_check
    _
  $region39: #{transformer_forward.33} parent=0 // pred_check_branch
    %198 = sbr.rel (0) target = $region41
  $region40: #{transformer_forward.33} parent=0 // pred_region
    _
  $region41: #{transformer_forward.33} parent=0 // pred_fallthru
    _

// kernel: transformer_forward.42
$region0: #{transformer_forward.42}
  #allocation0 [shape = 'u32[]', space=smem, size = 0x4, offset = 0x4, fixed_abs, tag = 'smem constant byte address 0x4 - core index']
  #allocation1 [shape = 'u32[144,128]{1,0:T(1,128)}', space=vmem, size = 0x12000, scoped, tag = 'internal scratch']
  #allocation2 [shape = 'f32[16,32]{1,0:T(8,128)}', space=vmem, size = 0x2000, scoped, tag = 'scratch operand']
  %s0 = inlined_call_operand.vmem [shape: bf16[16,32], index: 0, kind: input, shape index: {}]
  %s1 = inlined_call_operand.vmem [shape: bf16[1,32,32], index: 1, kind: input, shape index: {}]
  %s2 = inlined_call_operand.vmem [shape: bf16[1,1,32], index: 2, kind: input, shape index: {}]
  %s3 = inlined_call_operand.vmem [shape: bf16[1,16,32], index: 3, kind: output, shape index: {}]
  %s4 = sld [smem:[#allocation0]]
  $region30: #{transformer_forward.42} parent=0
    _
  %s6 = ssub.s32 1, %s4
  %s7 = scalar_select 0, %s6, %s4
  // Predicated region
  $region2: #{transformer_forward.42} parent=0 // pred_check
    _
  $region3: #{transformer_forward.42} parent=0 // pred_check_branch
    %9 = sbr.rel (0) target = $region5
  $region4: #{transformer_forward.42} parent=0 // pred_region
    _
  $region5: #{transformer_forward.42} parent=0 // pred_fallthru
    _
  // Predicated region
  $region6: #{transformer_forward.42} parent=0 // pred_check
    _
  $region7: #{transformer_forward.42} parent=0 // pred_check_branch
    %11 = sbr.rel (0) target = $region9
  $region8: #{transformer_forward.42} parent=0 // pred_region
    _
  $region9: #{transformer_forward.42} parent=0 // pred_fallthru
    _
  // Predicated region
  $region10: #{transformer_forward.42} parent=0 // pred_check
    _
  $region11: #{transformer_forward.42} parent=0 // pred_check_branch
    %13 = sbr.rel (0) target = $region13
  $region12: #{transformer_forward.42} parent=0 // pred_region
    _
  $region13: #{transformer_forward.42} parent=0 // pred_fallthru
    _
  %p15 = scmp.eq.s32.totalorder 0, 0
  // Predicated region
  $region14: #{transformer_forward.42} parent=0 // pred_check
    %p16 = pneg %p15
  $region15: #{transformer_forward.42} parent=0 // pred_check_branch
    %18 = sbr.rel (%p16) target = $region17
  $region16: #{transformer_forward.42} parent=0 // pred_region
    %vm19 = vcmask 261120
    %20 = vst.msk [vmem:[#allocation2] sm:$0xff] %vm19, 0.0
    %21 = vst.msk [vmem:[#allocation2 + $0x8] sm:$0xff] %vm19, 0.0
  $region17: #{transformer_forward.42} parent=0 // pred_fallthru
    _
  %v22 = vld [vmem:[#allocation2] sm:$0xff]
  %v23 = vld [vmem:[#allocation2 + $0x8] sm:$0xff]
  %v24 = vld [vmem:[%s0] sm:$0xf]
  %v25 = vld [vmem:[%s0 + $0x4] sm:$0xf]
  %v26 = vld [vmem:[%s1] sm:$0xf]
  %v27 = vld [vmem:[%s1 + $0x4] sm:$0xf]
  %v28 = vld [vmem:[%s1 + $0x8] sm:$0xf]
  %v29 = vld [vmem:[%s1 + $0xc] sm:$0xf]
  %v32 = vunpack.c.l.b16 %v24
  %v33 = vunpack.c.l.b16 %v25
  %v34 = vpack.c.b16 %v33, %v32
  %v39 = vunpack.c.l.b16 %v26
  %v40 = vunpack.c.l.b16 %v27
  %v41 = vunpack.c.l.b16 %v28
  %v42 = vunpack.c.l.b16 %v29
  %v43 = vpack.c.b16 %v40, %v39
  %v44 = vpack.c.b16 %v42, %v41
  %vm47 = vcmask 261120
  %v49 = vsel %vm47, %v34, 0
  %51 = vmatprep.subr.bf16.mxu0 0
  %52 = vmatpush1.bf16.msra.mxu0 %v43
  %53 = vmatprep.subr.bf16.mxu0 0
  %54 = vmatpush1.bf16.msra.mxu0 %v44
  %55 = vmatprep.subr.bf16.mxu0 0
  %56 = vmatpush1.bf16.msra.mxu0 0
  %57 = vmatprep.subr.bf16.mxu0 0
  %58 = vmatpush1.bf16.msra.mxu0 0
  %59 = vmatprep.subr.bf16.mxu0 0
  %60 = vmatpush1.bf16.msra.mxu0 0
  %61 = vmatprep.subr.bf16.mxu0 0
  %62 = vmatpush1.bf16.msra.mxu0 0
  %63 = vmatprep.subr.bf16.mxu0 0
  %64 = vmatpush1.bf16.msra.mxu0 0
  %65 = vmatprep.subr.bf16.mxu0 0
  %66 = vmatpush1.bf16.msra.mxu0 0
  %67 = vmatprep.subr.bf16.mxu0 0
  %68 = vmatpush1.bf16.msra.mxu0 0
  %69 = vmatprep.subr.bf16.mxu0 0
  %70 = vmatpush1.bf16.msra.mxu0 0
  %71 = vmatprep.subr.bf16.mxu0 0
  %72 = vmatpush1.bf16.msra.mxu0 0
  %73 = vmatprep.subr.bf16.mxu0 0
  %74 = vmatpush1.bf16.msra.mxu0 0
  %75 = vmatprep.subr.bf16.mxu0 0
  %76 = vmatpush1.bf16.msra.mxu0 0
  %77 = vmatprep.subr.bf16.mxu0 0
  %78 = vmatpush1.bf16.msra.mxu0 0
  %79 = vmatprep.subr.bf16.mxu0 0
  %80 = vmatpush1.bf16.msra.mxu0 0
  %81 = vmatprep.subr.bf16.mxu0 0
  %82 = vmatpush1.bf16.msra.mxu0 0
  %83 = vmatprep.mubr.bf16.mxu0 0
  %84 = vmatmul.mubr.bf16.gmra.mrb[0].mxu0 %v49
  %v85 = vpop.f32.mrb[0].mxu0
  %v86 = vadd.f32 0.0, %v85
  %v87 = vpop.f32.mrb[0].mxu0
  %v88 = vpop.f32.mrb[0].mxu0
  %v89 = vadd.f32 0.0, %v88
  %v90 = vpop.f32.mrb[0].mxu0
  %91 = vdwg.mxu0
  %v92 = vadd.f32 %v22, %v86
  %v93 = vadd.f32 %v23, %v89
  %94 = vst.msk [vmem:[#allocation2] sm:$0xff] %vm47, %v92
  %95 = vst.msk [vmem:[#allocation2 + $0x8] sm:$0xff] %vm47, %v93
  // Predicated region
  $region18: #{transformer_forward.42} parent=0 // pred_check
    %p96 = pneg %p15
  $region19: #{transformer_forward.42} parent=0 // pred_check_branch
    %98 = sbr.rel (%p96) target = $region21
  $region20: #{transformer_forward.42} parent=0 // pred_region
    %v99 = vld [vmem:[#allocation2] sm:$0xff]
    %v100 = vld [vmem:[#allocation2 + $0x8] sm:$0xff]
    %v101 = vld [vmem:[%s2] sm:$0x1]
    %v102 = vunpack.c.l.bf16 %v101
    %v103 = vlaneseq
    %v104 = vshrl.u32 %v103, 7
    %v105 = vsub.s32 0, %v104
    %v106 = vrot.slane %v102, %v105
    %v107 = vadd.f32 %v99, %v106
    %v108 = vadd.f32 %v100, %v106
    %v109 = vpack.c.bf16 %v108, %v107
    %v111 = vunpack.c.l.b16 %v109
    %v112 = vunpack.c.h.b16 %v109
    %v113 = vpack.c.b16 %v111, %v111
    %v114 = vpack.c.b16 %v112, %v112
    %vm117 = vcmask 257024
    %118 = vst.msk [vmem:[%s3] sm:$0xf] %vm117, %v113
    %119 = vst.msk [vmem:[%s3 + $0x4] sm:$0xf] %vm117, %v114
  $region21: #{transformer_forward.42} parent=0 // pred_fallthru
    _
  // Predicated region
  $region22: #{transformer_forward.42} parent=0 // pred_check
    _
  $region23: #{transformer_forward.42} parent=0 // pred_check_branch
    %121 = sbr.rel (0) target = $region25
  $region24: #{transformer_forward.42} parent=0 // pred_region
    _
  $region25: #{transformer_forward.42} parent=0 // pred_fallthru
    _
  // Predicated region
  $region26: #{transformer_forward.42} parent=0 // pred_check
    _
  $region27: #{transformer_forward.42} parent=0 // pred_check_branch
    %123 = sbr.rel (0) target = $region29
  $region28: #{transformer_forward.42} parent=0 // pred_region
    _
  $region29: #{transformer_forward.42} parent=0 // pred_fallthru
    _

// kernel: transformer_forward.57
$region0: #{transformer_forward.57}
  #allocation0 [shape = 'u32[]', space=smem, size = 0x4, offset = 0x4, fixed_abs, tag = 'smem constant byte address 0x4 - core index']
  #allocation1 [shape = 'u32[144,128]{1,0:T(1,128)}', space=vmem, size = 0x12000, scoped, tag = 'internal scratch']
  #allocation2 [shape = 'f32[16,64]{1,0:T(8,128)}', space=vmem, size = 0x2000, scoped, tag = 'scratch operand']
  %s0 = inlined_call_operand.vmem [shape: bf16[16,32], index: 0, kind: input, shape index: {}]
  %s1 = inlined_call_operand.vmem [shape: bf16[1,32,64], index: 1, kind: input, shape index: {}]
  %s2 = inlined_call_operand.vmem [shape: bf16[1,1,64], index: 2, kind: input, shape index: {}]
  %s3 = inlined_call_operand.hbm [shape: bf16[1,16,64], index: 3, kind: output, shape index: {}]
  %s4 = sld [smem:[#allocation0]]
  $region30: #{transformer_forward.57} parent=0
    _
  %s6 = ssub.s32 1, %s4
  %s7 = scalar_select 0, %s6, %s4
  $region1: #{transformer_forward.57} parent=0
    #allocation3 [shape = 'u8[4096]{0}', space=vmem, size = 0x1000, scoped, tag = 'output window, operand 0, single buffered']
    #allocation4 [shape = 's32[1]{0}', space=sflag, size = 0x4, scoped, tag = 'scoped memory for transformer_forward.57']
    %8 = vsyncpa [#allocation4], 0
    // Predicated region
    $region2: #{transformer_forward.57} parent=1 // pred_check
      _
    $region3: #{transformer_forward.57} parent=1 // pred_check_branch
      %10 = sbr.rel (0) target = $region5
    $region4: #{transformer_forward.57} parent=1 // pred_region
      _
    $region5: #{transformer_forward.57} parent=1 // pred_fallthru
      _
    // Predicated region
    $region6: #{transformer_forward.57} parent=1 // pred_check
      _
    $region7: #{transformer_forward.57} parent=1 // pred_check_branch
      %12 = sbr.rel (0) target = $region9
    $region8: #{transformer_forward.57} parent=1 // pred_region
      _
    $region9: #{transformer_forward.57} parent=1 // pred_fallthru
      _
    // Predicated region
    $region10: #{transformer_forward.57} parent=1 // pred_check
      _
    $region11: #{transformer_forward.57} parent=1 // pred_check_branch
      %14 = sbr.rel (0) target = $region13
    $region12: #{transformer_forward.57} parent=1 // pred_region
      _
    $region13: #{transformer_forward.57} parent=1 // pred_fallthru
      _
    %p16 = scmp.eq.s32.totalorder 0, 0
    // Predicated region
    $region14: #{transformer_forward.57} parent=1 // pred_check
      %p17 = pneg %p16
    $region15: #{transformer_forward.57} parent=1 // pred_check_branch
      %19 = sbr.rel (%p17) target = $region17
    $region16: #{transformer_forward.57} parent=1 // pred_region
      %vm20 = vcmask 523264
      %21 = vst.msk [vmem:[#allocation2] sm:$0xff] %vm20, 0.0
      %22 = vst.msk [vmem:[#allocation2 + $0x8] sm:$0xff] %vm20, 0.0
    $region17: #{transformer_forward.57} parent=1 // pred_fallthru
      _
    %v23 = vld [vmem:[#allocation2] sm:$0xff]
    %v24 = vld [vmem:[#allocation2 + $0x8] sm:$0xff]
    %v25 = vld [vmem:[%s0] sm:$0xf]
    %v26 = vld [vmem:[%s0 + $0x4] sm:$0xf]
    %v27 = vld [vmem:[%s1] sm:$0xf]
    %v28 = vld [vmem:[%s1 + $0x4] sm:$0xf]
    %v29 = vld [vmem:[%s1 + $0x8] sm:$0xf]
    %v30 = vld [vmem:[%s1 + $0xc] sm:$0xf]
    %v33 = vunpack.c.l.b16 %v25
    %v34 = vunpack.c.l.b16 %v26
    %v35 = vpack.c.b16 %v34, %v33
    %v40 = vunpack.c.l.b16 %v27
    %v41 = vunpack.c.l.b16 %v28
    %v42 = vunpack.c.l.b16 %v29
    %v43 = vunpack.c.l.b16 %v30
    %v44 = vpack.c.b16 %v41, %v40
    %v45 = vpack.c.b16 %v43, %v42
    %vm48 = vcmask 261120
    %v50 = vsel %vm48, %v35, 0
    %52 = vmatprep.subr.bf16.mxu0 0
    %53 = vmatpush1.bf16.msra.mxu0 %v44
    %54 = vmatprep.subr.bf16.mxu0 0
    %55 = vmatpush1.bf16.msra.mxu0 %v45
    %56 = vmatprep.subr.bf16.mxu0 0
    %57 = vmatpush1.bf16.msra.mxu0 0
    %58 = vmatprep.subr.bf16.mxu0 0
    %59 = vmatpush1.bf16.msra.mxu0 0
    %60 = vmatprep.subr.bf16.mxu0 0
    %61 = vmatpush1.bf16.msra.mxu0 0
    %62 = vmatprep.subr.bf16.mxu0 0
    %63 = vmatpush1.bf16.msra.mxu0 0
    %64 = vmatprep.subr.bf16.mxu0 0
    %65 = vmatpush1.bf16.msra.mxu0 0
    %66 = vmatprep.subr.bf16.mxu0 0
    %67 = vmatpush1.bf16.msra.mxu0 0
    %68 = vmatprep.subr.bf16.mxu0 0
    %69 = vmatpush1.bf16.msra.mxu0 0
    %70 = vmatprep.subr.bf16.mxu0 0
    %71 = vmatpush1.bf16.msra.mxu0 0
    %72 = vmatprep.subr.bf16.mxu0 0
    %73 = vmatpush1.bf16.msra.mxu0 0
    %74 = vmatprep.subr.bf16.mxu0 0
    %75 = vmatpush1.bf16.msra.mxu0 0
    %76 = vmatprep.subr.bf16.mxu0 0
    %77 = vmatpush1.bf16.msra.mxu0 0
    %78 = vmatprep.subr.bf16.mxu0 0
    %79 = vmatpush1.bf16.msra.mxu0 0
    %80 = vmatprep.subr.bf16.mxu0 0
    %81 = vmatpush1.bf16.msra.mxu0 0
    %82 = vmatprep.subr.bf16.mxu0 0
    %83 = vmatpush1.bf16.msra.mxu0 0
    %84 = vmatprep.mubr.bf16.mxu0 0
    %85 = vmatmul.mubr.bf16.gmra.mrb[0].mxu0 %v50
    %v86 = vpop.f32.mrb[0].mxu0
    %v87 = vadd.f32 0.0, %v86
    %v88 = vpop.f32.mrb[0].mxu0
    %v89 = vpop.f32.mrb[0].mxu0
    %v90 = vadd.f32 0.0, %v89
    %v91 = vpop.f32.mrb[0].mxu0
    %92 = vdwg.mxu0
    %v93 = vadd.f32 %v23, %v87
    %v94 = vadd.f32 %v24, %v90
    %vm95 = vcmask 523264
    %96 = vst.msk [vmem:[#allocation2] sm:$0xff] %vm95, %v93
    %97 = vst.msk [vmem:[#allocation2 + $0x8] sm:$0xff] %vm95, %v94
    // Predicated region
    $region18: #{transformer_forward.57} parent=1 // pred_check
      %p98 = pneg %p16
    $region19: #{transformer_forward.57} parent=1 // pred_check_branch
      %100 = sbr.rel (%p98) target = $region21
    $region20: #{transformer_forward.57} parent=1 // pred_region
      %v101 = vld [vmem:[#allocation2] sm:$0xff]
      %v102 = vld [vmem:[#allocation2 + $0x8] sm:$0xff]
      %v103 = vld [vmem:[%s2] sm:$0x1]
      %v104 = vunpack.c.l.bf16 %v103
      %v105 = vlaneseq
      %v106 = vshrl.u32 %v105, 7
      %v107 = vsub.s32 0, %v106
      %v108 = vrot.slane %v104, %v107
      %v109 = vadd.f32 %v101, %v108
      %v110 = vadd.f32 %v102, %v108
      %v111 = vpack.c.bf16 %v110, %v109
      %v113 = vunpack.c.l.b16 %v111
      %v114 = vunpack.c.h.b16 %v111
      %v115 = vpack.c.b16 %v113, %v113
      %v116 = vpack.c.b16 %v114, %v114
      %vm119 = vcmask 519168
      %120 = vst.msk [vmem:[#allocation3] sm:$0xf] %vm119, %v115
      %121 = vst.msk [vmem:[#allocation3 + $0x4] sm:$0xf] %vm119, %v116
    $region21: #{transformer_forward.57} parent=1 // pred_fallthru
      _
    // Predicated region
    $region22: #{transformer_forward.57} parent=1 // pred_check
      _
    $region23: #{transformer_forward.57} parent=1 // pred_check_branch
      %123 = sbr.rel (0) target = $region25
    $region24: #{transformer_forward.57} parent=1 // pred_region
      %s125 = ssub.s32 128, 128
      %126 = vsyncadd [#allocation4], %s125
      %s127 = sshll.u32 [#allocation3], 4
      %s128 = int_to_ptr.vmem [resolvable:$true] %s127
      %133 = dma.vmem_to_hbm [thread:$0]  %s128, 128, %s3, [#allocation4], 64, 64, 4
    $region25: #{transformer_forward.57} parent=1 // pred_fallthru
      _
    // Predicated region
    $region26: #{transformer_forward.57} parent=1 // pred_check
      _
    $region27: #{transformer_forward.57} parent=1 // pred_check_branch
      %135 = sbr.rel (0) target = $region29
    $region28: #{transformer_forward.57} parent=1 // pred_region
      %136 = dma.done [#allocation4], 128
    $region29: #{transformer_forward.57} parent=1 // pred_fallthru
      _
    %137 = vsyncpa [#allocation4], 1

// kernel: transformer_forward.44
$region0: #{transformer_forward.44}
  #allocation0 [shape = 'u32[]', space=smem, size = 0x4, offset = 0x4, fixed_abs, tag = 'smem constant byte address 0x4 - core index']
  #allocation1 [shape = 'u32[144,128]{1,0:T(1,128)}', space=vmem, size = 0x12000, scoped, tag = 'internal scratch']
  #allocation2 [shape = 'f32[4,8,1]{2,1,0:T(8,128)}', space=vmem, size = 0x4000, scoped, tag = 'scratch operand']
  #allocation3 [shape = 'f32[4,8,1]{2,1,0:T(8,128)}', space=vmem, size = 0x4000, scoped, tag = 'scratch operand']
  #allocation4 [shape = 'f32[4,8,8]{2,1,0:T(8,128)}', space=vmem, size = 0x4000, scoped, tag = 'scratch operand']
  %s0 = inlined_call_operand.vmem [shape: bf16[1,2,8,32], index: 0, kind: input, shape index: {}]
  %s1 = inlined_call_operand.vmem [shape: bf16[2,2,8,32], index: 1, kind: input, shape index: {}, may-alias: {1,2}]
  %s2 = inlined_call_operand.vmem [shape: bf16[2,2,8,32], index: 2, kind: input, shape index: {}, may-alias: {1,2}]
  %s3 = inlined_call_operand.vmem [shape: bf16[2,8,32], index: 3, kind: output, shape index: {}]
  %s4 = sld [smem:[#allocation0]]
  $region53: #{transformer_forward.44} parent=0
    _
  %s6 = ssub.s32 1, %s4
  %s7 = scalar_select 0, %s6, %s4
  loop: start=0, step=1, limit=4
  $region2: #{transformer_forward.44} parent=0 // loop_pre_header
    _
  $region3: #{transformer_forward.44} parent=0 // loop_header
    %s9 = sphi 0, %s13
    %p10 = scmp.ge.s32.totalorder %s9, 4
    %s16 = sphi 0, %s35
    %s17 = sphi 0, %s31
    %s18 = sphi 0, %s27
    %s19 = sphi 0, %s16
    %s20 = sphi 0, %s17
    %s21 = sphi 0, %s18
    %s22 = sphi 0, %s19
    %s23 = sphi 0, %s20
    %s24 = sphi 0, %s21
    %s40 = sphi 0, %s42
    %s43 = sphi 0, %s40
    %s44 = sphi 0, %s43
    %s60 = sphi 0, %s44
    %s68 = sphi 0, %s70
    %s71 = sphi 0, %s68
    %s72 = sphi 0, %s71
    %s88 = sphi 0, %s72
    %s96 = sphi 0, %s98
    %s99 = sphi 0, %s96
    %s100 = sphi 0, %s99
    %s116 = sphi 0, %s100
    %s124 = sphi 0, %s126
    %s127 = sphi 0, %s124
    %s128 = sphi 0, %s127
    %s144 = sphi 0, %s128
  $region4: #{transformer_forward.44} parent=0 // loop_header_branch
    %12 = sbr.rel (%p10) target = $region8
  $region5: #{transformer_forward.44} parent=0 // loop_body
    %s14 = ssub.s32 %s9, 1
    %s15 = ssub.s32 %s9, 2
    %s25 = sadd.s32 1, %s18
    %p26 = scmp.ge.s32.totalorder %s25, 1
    %s27 = scalar_select %p26, 0, %s25
    %s28 = sadd.s32 1, %s17
    %s29 = scalar_select %p26, %s28, %s17
    %p30 = scmp.ge.s32.totalorder %s29, 1
    %s31 = scalar_select %p30, 0, %s29
    %s32 = sadd.s32 1, %s16
    %s33 = scalar_select %p30, %s32, %s16
    %p34 = scmp.ge.s32.totalorder %s33, 2
    %s35 = scalar_select %p34, 0, %s33
    %s36 = ssub.s32 %s16, %s35
    %s37 = ssub.s32 %s17, %s31
    %s38 = sor.u32 %s36, %s37
    %p39 = scmp.eq.s32.totalorder %s38, 0
    %s41 = sadd.s32 %s40, 1
    %s42 = scalar_select %p39, %s40, %s41
    %p45 = pneg %p39
    %p46 = scmp.eq.s32.totalorder %s9, 1
    %p47 = por %p45, %p46
    %p48 = scmp.ne.s32.totalorder %s40, %s43
    %p49 = scmp.eq.s32.totalorder %s9, 0
    %p50 = por %p48, %p49
    %p51 = scmp.ne.s32.totalorder %s40, %s43
    %p52 = scmp.eq.s32.totalorder %s14, 1
    %p53 = por %p51, %p52
    %p54 = scmp.ne.s32.totalorder %s43, %s44
    %p55 = scmp.eq.s32.totalorder %s14, 0
    %p56 = por %p54, %p55
    %p57 = scmp.ne.s32.totalorder %s43, %s44
    %p58 = scmp.eq.s32.totalorder %s15, 1
    %p59 = por %p57, %p58
    %p61 = scmp.ne.s32.totalorder %s44, %s60
    %p62 = scmp.eq.s32.totalorder %s15, 0
    %p63 = por %p61, %p62
    %s64 = ssub.s32 %s16, %s35
    %s65 = ssub.s32 %s18, %s27
    %s66 = sor.u32 %s64, %s65
    %p67 = scmp.eq.s32.totalorder %s66, 0
    %s69 = sadd.s32 %s68, 1
    %s70 = scalar_select %p67, %s68, %s69
    %p73 = pneg %p67
    %p74 = scmp.eq.s32.totalorder %s9, 1
    %p75 = por %p73, %p74
    %p76 = scmp.ne.s32.totalorder %s68, %s71
    %p77 = scmp.eq.s32.totalorder %s9, 0
    %p78 = por %p76, %p77
    %p79 = scmp.ne.s32.totalorder %s68, %s71
    %p80 = scmp.eq.s32.totalorder %s14, 1
    %p81 = por %p79, %p80
    %p82 = scmp.ne.s32.totalorder %s71, %s72
    %p83 = scmp.eq.s32.totalorder %s14, 0
    %p84 = por %p82, %p83
    %p85 = scmp.ne.s32.totalorder %s71, %s72
    %p86 = scmp.eq.s32.totalorder %s15, 1
    %p87 = por %p85, %p86
    %p89 = scmp.ne.s32.totalorder %s72, %s88
    %p90 = scmp.eq.s32.totalorder %s15, 0
    %p91 = por %p89, %p90
    %s92 = ssub.s32 %s16, %s35
    %s93 = ssub.s32 %s18, %s27
    %s94 = sor.u32 %s92, %s93
    %p95 = scmp.eq.s32.totalorder %s94, 0
    %s97 = sadd.s32 %s96, 1
    %s98 = scalar_select %p95, %s96, %s97
    %p101 = pneg %p95
    %p102 = scmp.eq.s32.totalorder %s9, 1
    %p103 = por %p101, %p102
    %p104 = scmp.ne.s32.totalorder %s96, %s99
    %p105 = scmp.eq.s32.totalorder %s9, 0
    %p106 = por %p104, %p105
    %p107 = scmp.ne.s32.totalorder %s96, %s99
    %p108 = scmp.eq.s32.totalorder %s14, 1
    %p109 = por %p107, %p108
    %p110 = scmp.ne.s32.totalorder %s99, %s100
    %p111 = scmp.eq.s32.totalorder %s14, 0
    %p112 = por %p110, %p111
    %p113 = scmp.ne.s32.totalorder %s99, %s100
    %p114 = scmp.eq.s32.totalorder %s15, 1
    %p115 = por %p113, %p114
    %p117 = scmp.ne.s32.totalorder %s100, %s116
    %p118 = scmp.eq.s32.totalorder %s15, 0
    %p119 = por %p117, %p118
    %s120 = ssub.s32 %s16, %s35
    %s121 = ssub.s32 %s17, %s31
    %s122 = sor.u32 %s120, %s121
    %p123 = scmp.eq.s32.totalorder %s122, 0
    %s125 = sadd.s32 %s124, 1
    %s126 = scalar_select %p123, %s124, %s125
    %p129 = pneg %p123
    %p130 = scmp.eq.s32.totalorder %s9, 1
    %p131 = por %p129, %p130
    %p132 = scmp.ne.s32.totalorder %s124, %s127
    %p133 = scmp.eq.s32.totalorder %s9, 0
    %p134 = por %p132, %p133
    %p135 = scmp.ne.s32.totalorder %s124, %s127
    %p136 = scmp.eq.s32.totalorder %s14, 1
    %p137 = por %p135, %p136
    %p138 = scmp.ne.s32.totalorder %s127, %s128
    %p139 = scmp.eq.s32.totalorder %s14, 0
    %p140 = por %p138, %p139
    %p141 = scmp.ne.s32.totalorder %s127, %s128
    %p142 = scmp.eq.s32.totalorder %s15, 1
    %p143 = por %p141, %p142
    %p145 = scmp.ne.s32.totalorder %s128, %s144
    %p146 = scmp.eq.s32.totalorder %s15, 0
    %p147 = por %p145, %p146
    %p148 = scmp.le.s32.totalorder 1, %s9
    %p149 = scmp.lt.s32.totalorder %s9, 3
    %p150 = pnand %p148, %p149
    %p151 = pneg %p150
    // Predicated region
    $region9: #{transformer_forward.44} parent=5 // pred_check
      _
    $region10: #{transformer_forward.44} parent=5 // pred_check_branch
      %153 = sbr.rel (%p150) target = $region12
    $region11: #{transformer_forward.44} parent=5 // pred_region
      %s154 = ssub.s32 %s9, 1
    $region12: #{transformer_forward.44} parent=5 // pred_fallthru
      _
    %p155 = scmp.lt.s32.totalorder %s9, 2
    // Predicated region
    $region13: #{transformer_forward.44} parent=5 // pred_check
      %p156 = pneg %p155
    $region14: #{transformer_forward.44} parent=5 // pred_check_branch
      %158 = sbr.rel (%p156) target = $region16
    $region15: #{transformer_forward.44} parent=5 // pred_region
      // Predicated region
      $region17: #{transformer_forward.44} parent=15 // pred_check
        %p159 = pneg %p50
      $region18: #{transformer_forward.44} parent=15 // pred_check_branch
        %161 = sbr.rel (%p159) target = $region20
      $region19: #{transformer_forward.44} parent=15 // pred_region
        %p162 = scmp.lt.s32.totalorder %s16, 1
        %s163 = scalar_select %p162, %s16, 1
        %p164 = scmp.lt.s32.totalorder %s17, 0
        %s165 = scalar_select %p164, %s17, 0
        %s166 = sadd.s32 %s165, %s163
        %s167 = smul.addr %s166, 4
        %s168 = scalar_lea.vmem %s0, %s167
      $region20: #{transformer_forward.44} parent=15 // pred_fallthru
        _
      // Predicated region
      $region21: #{transformer_forward.44} parent=15 // pred_check
        %p169 = pneg %p78
      $region22: #{transformer_forward.44} parent=15 // pred_check_branch
        %171 = sbr.rel (%p169) target = $region24
      $region23: #{transformer_forward.44} parent=15 // pred_region
        %p172 = scmp.lt.s32.totalorder %s16, 1
        %s173 = scalar_select %p172, %s16, 1
        %p174 = scmp.lt.s32.totalorder %s18, 0
        %s175 = scalar_select %p174, %s18, 0
        %s176 = sadd.s32 %s175, %s173
        %s177 = smul.addr %s176, 4
        %s178 = scalar_lea.vmem %s1, %s177
      $region24: #{transformer_forward.44} parent=15 // pred_fallthru
        _
      // Predicated region
      $region25: #{transformer_forward.44} parent=15 // pred_check
        %p179 = pneg %p106
      $region26: #{transformer_forward.44} parent=15 // pred_check_branch
        %181 = sbr.rel (%p179) target = $region28
      $region27: #{transformer_forward.44} parent=15 // pred_region
        %p182 = scmp.lt.s32.totalorder %s16, 1
        %s183 = scalar_select %p182, %s16, 1
        %p184 = scmp.lt.s32.totalorder %s18, 0
        %s185 = scalar_select %p184, %s18, 0
        %s186 = sadd.s32 %s185, %s183
        %s187 = sadd.s32 %s186, 2
        %s188 = smul.addr %s187, 4
        %s189 = scalar_lea.vmem %s2, %s188
      $region28: #{transformer_forward.44} parent=15 // pred_fallthru
        _
    $region16: #{transformer_forward.44} parent=5 // pred_fallthru
      _
    %p190 = scmp.le.s32.totalorder 1, %s9
    %p191 = scmp.lt.s32.totalorder %s9, 3
    %p192 = pnand %p190, %p191
    %p193 = pneg %p192
    // Predicated region
    $region29: #{transformer_forward.44} parent=5 // pred_check
      _
    $region30: #{transformer_forward.44} parent=5 // pred_check_branch
      %195 = sbr.rel (%p192) target = $region32
    $region31: #{transformer_forward.44} parent=5 // pred_region
      %s196 = ssub.s32 %s9, 1
      %p197 = scmp.lt.s32.totalorder %s19, 1
      %s198 = scalar_select %p197, %s19, 1
      %p199 = scmp.lt.s32.totalorder %s20, 0
      %s200 = scalar_select %p199, %s20, 0
      %s201 = sadd.s32 %s200, %s198
      %s202 = smul.addr %s201, 4
      %s203 = scalar_lea.vmem %s0, %s202
      %p204 = pneg %p56
      %p205 = pneg %p53
      %p206 = scmp.lt.s32.totalorder %s19, 1
      %s207 = scalar_select %p206, %s19, 1
      %p208 = scmp.lt.s32.totalorder %s21, 0
      %s209 = scalar_select %p208, %s21, 0
      %s210 = sadd.s32 %s209, %s207
      %s211 = smul.addr %s210, 4
      %s212 = scalar_lea.vmem %s1, %s211
      %p213 = pneg %p84
      %p214 = pneg %p81
      %p215 = scmp.lt.s32.totalorder %s19, 1
      %s216 = scalar_select %p215, %s19, 1
      %p217 = scmp.lt.s32.totalorder %s21, 0
      %s218 = scalar_select %p217, %s21, 0
      %s219 = sadd.s32 %s218, %s216
      %s220 = sadd.s32 %s219, 2
      %s221 = smul.addr %s220, 4
      %s222 = scalar_lea.vmem %s2, %s221
      %p223 = pneg %p112
      %p224 = pneg %p109
      %p225 = pneg %p140
      %p226 = pneg %p137
      %p227 = scmp.lt.s32.totalorder %s19, 1
      %s228 = scalar_select %p227, %s19, 1
      %p229 = scmp.lt.s32.totalorder %s20, 0
      %s230 = scalar_select %p229, %s20, 0
      %s231 = sadd.s32 %s230, %s228
      %s232 = smul.addr %s231, 4
      %s233 = scalar_lea.vmem %s3, %s232
      %p234 = scmp.lt.s32.totalorder %s19, 1
      %s235 = scalar_select %p234, %s19, 1
      %p236 = scmp.lt.s32.totalorder %s20, 0
      %s237 = scalar_select %p236, %s20, 0
      %s238 = sadd.s32 %s237, %s235
      %s239 = smul.addr %s238, 4
      %s240 = scalar_lea.vmem %s0, %s239
      %p241 = scmp.lt.s32.totalorder %s19, 1
      %s242 = scalar_select %p241, %s19, 1
      %p243 = scmp.lt.s32.totalorder %s21, 0
      %s244 = scalar_select %p243, %s21, 0
      %s245 = sadd.s32 %s244, %s242
      %s246 = smul.addr %s245, 4
      %s247 = scalar_lea.vmem %s1, %s246
      %p248 = scmp.lt.s32.totalorder %s19, 1
      %s249 = scalar_select %p248, %s19, 1
      %p250 = scmp.lt.s32.totalorder %s21, 0
      %s251 = scalar_select %p250, %s21, 0
      %s252 = sadd.s32 %s251, %s249
      %s253 = sadd.s32 %s252, 2
      %s254 = smul.addr %s253, 4
      %s255 = scalar_lea.vmem %s2, %s254
      %p256 = scmp.lt.s32.totalorder %s19, 1
      %s257 = scalar_select %p256, %s19, 1
      %p258 = scmp.lt.s32.totalorder %s20, 0
      %s259 = scalar_select %p258, %s20, 0
      %s260 = sadd.s32 %s259, %s257
      %s261 = smul.addr %s260, 4
      %s262 = scalar_lea.vmem %s3, %s261
      %p264 = scmp.eq.s32.totalorder %s21, 0
      // Predicated region
      $region33: #{transformer_forward.44} parent=31 // pred_check
        %p265 = pneg %p264
      $region34: #{transformer_forward.44} parent=31 // pred_check_branch
        %267 = sbr.rel (%p265) target = $region36
      $region35: #{transformer_forward.44} parent=31 // pred_region
        %vm268 = vcmask 7168
        %269 = vst.msk [vmem:[#allocation2] sm:$0xff] %vm268, -inf
        %270 = vst.msk [vmem:[#allocation2 + $0x8] sm:$0xff] %vm268, -inf
        %271 = vst.msk [vmem:[#allocation2 + $0x10] sm:$0xff] %vm268, -inf
        %272 = vst.msk [vmem:[#allocation2 + $0x18] sm:$0xff] %vm268, -inf
        %273 = vst.msk [vmem:[#allocation3] sm:$0xff] %vm268, 0.0
        %274 = vst.msk [vmem:[#allocation3 + $0x8] sm:$0xff] %vm268, 0.0
        %275 = vst.msk [vmem:[#allocation3 + $0x10] sm:$0xff] %vm268, 0.0
        %276 = vst.msk [vmem:[#allocation3 + $0x18] sm:$0xff] %vm268, 0.0
        %vm277 = vcmask 64512
        %278 = vst.msk [vmem:[#allocation4] sm:$0xff] %vm277, 0.0
        %279 = vst.msk [vmem:[#allocation4 + $0x8] sm:$0xff] %vm277, 0.0
        %280 = vst.msk [vmem:[#allocation4 + $0x10] sm:$0xff] %vm277, 0.0
        %281 = vst.msk [vmem:[#allocation4 + $0x18] sm:$0xff] %vm277, 0.0
      $region36: #{transformer_forward.44} parent=31 // pred_fallthru
        _
      %v282 = vld [vmem:[%s240] sm:$0xf]
      %v283 = vld [vmem:[%s247] sm:$0xf]
      %v284 = vld [vmem:[%s255] sm:$0xf]
      %vm285 = vcmask 64512
      %v287 = vsel %vm285, %v282, 0
      %v290 = vsel %vm285, %v283, 0
      %292 = vmatprep.subr.bf16.mxu0 0
      %293 = vmatpush1.bf16.xpose.msra.mxu0 %v290
      %294 = vmatprep.subr.bf16.mxu0 0
      %295 = vmatpush1.bf16.xpose.msra.mxu0 0
      %296 = vmatprep.subr.bf16.mxu0 0
      %297 = vmatpush1.bf16.xpose.msra.mxu0 0
      %298 = vmatprep.subr.bf16.mxu0 0
      %299 = vmatpush1.bf16.xpose.msra.mxu0 0
      %300 = vmatprep.subr.bf16.mxu0 0
      %301 = vmatpush1.bf16.xpose.msra.mxu0 0
      %302 = vmatprep.subr.bf16.mxu0 0
      %303 = vmatpush1.bf16.xpose.msra.mxu0 0
      %304 = vmatprep.subr.bf16.mxu0 0
      %305 = vmatpush1.bf16.xpose.msra.mxu0 0
      %306 = vmatprep.subr.bf16.mxu0 0
      %307 = vmatpush1.bf16.xpose.msra.mxu0 0
      %308 = vmatprep.subr.bf16.mxu0 0
      %309 = vmatpush1.bf16.xpose.msra.mxu0 0
      %310 = vmatprep.subr.bf16.mxu0 0
      %311 = vmatpush1.bf16.xpose.msra.mxu0 0
      %312 = vmatprep.subr.bf16.mxu0 0
      %313 = vmatpush1.bf16.xpose.msra.mxu0 0
      %314 = vmatprep.subr.bf16.mxu0 0
      %315 = vmatpush1.bf16.xpose.msra.mxu0 0
      %316 = vmatprep.subr.bf16.mxu0 0
      %317 = vmatpush1.bf16.xpose.msra.mxu0 0
      %318 = vmatprep.subr.bf16.mxu0 0
      %319 = vmatpush1.bf16.xpose.msra.mxu0 0
      %320 = vmatprep.subr.bf16.mxu0 0
      %321 = vmatpush1.bf16.xpose.msra.mxu0 0
      %322 = vmatprep.subr.bf16.mxu0 0
      %323 = vmatpush1.bf16.xpose.msra.mxu0 0
      %324 = vmatprep.mubr.bf16.mxu0 0
      %325 = vmatmul.mubr.bf16.gmra.mrb[0].mxu0 %v287
      %v326 = vpop.f32.mrb[0].mxu0
      %v327 = vadd.f32 0.0, %v326
      %v328 = vpop.f32.mrb[0].mxu0
      %v329 = vpop.f32.mrb[0].mxu0
      %v330 = vpop.f32.mrb[0].mxu0
      %331 = vdwg.mxu0
      %v332 = vld [vmem:[#allocation2] sm:$0xff]
      %v333 = vsel %vm285, %v327, -inf
      %334 = vmax.xlane.f32.xlu0 %v333
      %v335 = vpop.xlane.xlu0 %334
      %v336 = vmax.f32 %v332, %v335
      %v337 = vsub.f32 %v332, %v336
      %v338 = vmul.f32 %v337, 1.442695
      %v339 = vpow.pop %v338
      %341 = vset.pattern.permute.xlu0 0
      %342 = vperm.xlu0 %341, %v336
      %v343 = vpop.permute.xlu0 %342
      %v345 = vsub.f32 %v327, %v343
      %v346 = vmul.f32 %v345, 1.442695
      %v347 = vpow.pop %v346
      %v348 = vld [vmem:[#allocation3] sm:$0xff]
      %v349 = vmul.f32 %v339, %v348
      %v350 = vsel %vm285, %v347, 0.0
      %351 = vadd.xlane.f32.xlu0 %v350
      %v352 = vpop.xlane.xlu0 %351
      %v353 = vadd.f32 %v349, %v352
      %vm354 = vcmask 7168
      %355 = vst.msk [vmem:[#allocation3] sm:$0xff] %vm354, %v353
      %v356 = vld [vmem:[#allocation4] sm:$0xff]
      %358 = vset.pattern.permute.xlu0 0
      %359 = vperm.xlu0 %358, %v339
      %v360 = vpop.permute.xlu0 %359
      %v362 = vmul.f32 %v360, %v356
      %v363 = vpack.c.bf16 %v347, %v347
      %v365 = vsel %vm285, %v363, 0
      %vm367 = vcmask 1043456
      %v369 = vsel %vm367, %v284, 0
      %371 = vmatprep.subr.bf16.mxu0 0
      %372 = vmatpush1.bf16.msra.mxu0 %v369
      %373 = vmatprep.subr.bf16.mxu0 0
      %374 = vmatpush1.bf16.msra.mxu0 0
      %375 = vmatprep.subr.bf16.mxu0 0
      %376 = vmatpush1.bf16.msra.mxu0 0
      %377 = vmatprep.subr.bf16.mxu0 0
      %378 = vmatpush1.bf16.msra.mxu0 0
      %379 = vmatprep.subr.bf16.mxu0 0
      %380 = vmatpush1.bf16.msra.mxu0 0
      %381 = vmatprep.subr.bf16.mxu0 0
      %382 = vmatpush1.bf16.msra.mxu0 0
      %383 = vmatprep.subr.bf16.mxu0 0
      %384 = vmatpush1.bf16.msra.mxu0 0
      %385 = vmatprep.subr.bf16.mxu0 0
      %386 = vmatpush1.bf16.msra.mxu0 0
      %387 = vmatprep.subr.bf16.mxu0 0
      %388 = vmatpush1.bf16.msra.mxu0 0
      %389 = vmatprep.subr.bf16.mxu0 0
      %390 = vmatpush1.bf16.msra.mxu0 0
      %391 = vmatprep.subr.bf16.mxu0 0
      %392 = vmatpush1.bf16.msra.mxu0 0
      %393 = vmatprep.subr.bf16.mxu0 0
      %394 = vmatpush1.bf16.msra.mxu0 0
      %395 = vmatprep.subr.bf16.mxu0 0
      %396 = vmatpush1.bf16.msra.mxu0 0
      %397 = vmatprep.subr.bf16.mxu0 0
      %398 = vmatpush1.bf16.msra.mxu0 0
      %399 = vmatprep.subr.bf16.mxu0 0
      %400 = vmatpush1.bf16.msra.mxu0 0
      %401 = vmatprep.subr.bf16.mxu0 0
      %402 = vmatpush1.bf16.msra.mxu0 0
      %403 = vmatprep.mubr.bf16.mxu0 0
      %404 = vmatmul.mubr.bf16.gmra.mrb[0].mxu0 %v365
      %v405 = vpop.f32.mrb[0].mxu0
      %v406 = vadd.f32 0.0, %v405
      %v407 = vpop.f32.mrb[0].mxu0
      %v408 = vpop.f32.mrb[0].mxu0
      %v409 = vpop.f32.mrb[0].mxu0
      %410 = vdwg.mxu0
      %v411 = vadd.f32 %v362, %v406
      %412 = vst.msk [vmem:[#allocation4] sm:$0xff] %vm285, %v411
      %413 = vst.msk [vmem:[#allocation2] sm:$0xff] %vm354, %v336
      %v414 = vld [vmem:[%s240] sm:$0xf]
      %v415 = vld [vmem:[%s247] sm:$0xf]
      %v416 = vld [vmem:[%s255] sm:$0xf]
      %v418 = vunpack.c.l.b16 %v414
      %v419 = vpack.c.b16 %v418, %v418
      %420 = vrot.lane.b32.xlu0 %v419, 120
      %v421 = vpop.permute.xlu0 %420
      %v423 = vunpack.c.l.b16 %v415
      %v424 = vpack.c.b16 %v423, %v423
      %425 = vrot.lane.b32.xlu0 %v424, 120
      %v426 = vpop.permute.xlu0 %425
      %v428 = vsel %vm285, %v421, 0
      %v431 = vsel %vm285, %v426, 0
      %433 = vmatprep.subr.bf16.mxu0 0
      %434 = vmatpush1.bf16.xpose.msra.mxu0 %v431
      %435 = vmatprep.subr.bf16.mxu0 0
      %436 = vmatpush1.bf16.xpose.msra.mxu0 0
      %437 = vmatprep.subr.bf16.mxu0 0
      %438 = vmatpush1.bf16.xpose.msra.mxu0 0
      %439 = vmatprep.subr.bf16.mxu0 0
      %440 = vmatpush1.bf16.xpose.msra.mxu0 0
      %441 = vmatprep.subr.bf16.mxu0 0
      %442 = vmatpush1.bf16.xpose.msra.mxu0 0
      %443 = vmatprep.subr.bf16.mxu0 0
      %444 = vmatpush1.bf16.xpose.msra.mxu0 0
      %445 = vmatprep.subr.bf16.mxu0 0
      %446 = vmatpush1.bf16.xpose.msra.mxu0 0
      %447 = vmatprep.subr.bf16.mxu0 0
      %448 = vmatpush1.bf16.xpose.msra.mxu0 0
      %449 = vmatprep.subr.bf16.mxu0 0
      %450 = vmatpush1.bf16.xpose.msra.mxu0 0
      %451 = vmatprep.subr.bf16.mxu0 0
      %452 = vmatpush1.bf16.xpose.msra.mxu0 0
      %453 = vmatprep.subr.bf16.mxu0 0
      %454 = vmatpush1.bf16.xpose.msra.mxu0 0
      %455 = vmatprep.subr.bf16.mxu0 0
      %456 = vmatpush1.bf16.xpose.msra.mxu0 0
      %457 = vmatprep.subr.bf16.mxu0 0
      %458 = vmatpush1.bf16.xpose.msra.mxu0 0
      %459 = vmatprep.subr.bf16.mxu0 0
      %460 = vmatpush1.bf16.xpose.msra.mxu0 0
      %461 = vmatprep.subr.bf16.mxu0 0
      %462 = vmatpush1.bf16.xpose.msra.mxu0 0
      %463 = vmatprep.subr.bf16.mxu0 0
      %464 = vmatpush1.bf16.xpose.msra.mxu0 0
      %465 = vmatprep.mubr.bf16.mxu0 0
      %466 = vmatmul.mubr.bf16.gmra.mrb[0].mxu0 %v428
      %v467 = vpop.f32.mrb[0].mxu0
      %v468 = vadd.f32 0.0, %v467
      %v469 = vpop.f32.mrb[0].mxu0
      %v470 = vpop.f32.mrb[0].mxu0
      %v471 = vpop.f32.mrb[0].mxu0
      %472 = vdwg.mxu0
      %s473 = scalar_lea.vmem [#allocation2], 8
      %v474 = vld [vmem:[%s473] sm:$0xff]
      %v475 = vsel %vm285, %v468, -inf
      %476 = vmax.xlane.f32.xlu0 %v475
      %v477 = vpop.xlane.xlu0 %476
      %v478 = vmax.f32 %v474, %v477
      %v479 = vsub.f32 %v474, %v478
      %v480 = vmul.f32 %v479, 1.442695
      %v481 = vpow.pop %v480
      %483 = vset.pattern.permute.xlu0 0
      %484 = vperm.xlu0 %483, %v478
      %v485 = vpop.permute.xlu0 %484
      %v487 = vsub.f32 %v468, %v485
      %v488 = vmul.f32 %v487, 1.442695
      %v489 = vpow.pop %v488
      %s490 = scalar_lea.vmem [#allocation3], 8
      %v491 = vld [vmem:[%s490] sm:$0xff]
      %v492 = vmul.f32 %v481, %v491
      %v493 = vsel %vm285, %v489, 0.0
      %494 = vadd.xlane.f32.xlu0 %v493
      %v495 = vpop.xlane.xlu0 %494
      %v496 = vadd.f32 %v492, %v495
      %497 = vst.msk [vmem:[%s490] sm:$0xff] %vm354, %v496
      %s498 = scalar_lea.vmem [#allocation4], 8
      %v499 = vld [vmem:[%s498] sm:$0xff]
      %501 = vset.pattern.permute.xlu0 0
      %502 = vperm.xlu0 %501, %v481
      %v503 = vpop.permute.xlu0 %502
      %v505 = vmul.f32 %v503, %v499
      %v506 = vpack.c.bf16 %v489, %v489
      %v508 = vunpack.c.l.b16 %v416
      %v509 = vpack.c.b16 %v508, %v508
      %510 = vrot.lane.b32.xlu0 %v509, 120
      %v511 = vpop.permute.xlu0 %510
      %v513 = vsel %vm285, %v506, 0
      %v516 = vsel %vm367, %v511, 0
      %518 = vmatprep.subr.bf16.mxu0 0
      %519 = vmatpush1.bf16.msra.mxu0 %v516
      %520 = vmatprep.subr.bf16.mxu0 0
      %521 = vmatpush1.bf16.msra.mxu0 0
      %522 = vmatprep.subr.bf16.mxu0 0
      %523 = vmatpush1.bf16.msra.mxu0 0
      %524 = vmatprep.subr.bf16.mxu0 0
      %525 = vmatpush1.bf16.msra.mxu0 0
      %526 = vmatprep.subr.bf16.mxu0 0
      %527 = vmatpush1.bf16.msra.mxu0 0
      %528 = vmatprep.subr.bf16.mxu0 0
      %529 = vmatpush1.bf16.msra.mxu0 0
      %530 = vmatprep.subr.bf16.mxu0 0
      %531 = vmatpush1.bf16.msra.mxu0 0
      %532 = vmatprep.subr.bf16.mxu0 0
      %533 = vmatpush1.bf16.msra.mxu0 0
      %534 = vmatprep.subr.bf16.mxu0 0
      %535 = vmatpush1.bf16.msra.mxu0 0
      %536 = vmatprep.subr.bf16.mxu0 0
      %537 = vmatpush1.bf16.msra.mxu0 0
      %538 = vmatprep.subr.bf16.mxu0 0
      %539 = vmatpush1.bf16.msra.mxu0 0
      %540 = vmatprep.subr.bf16.mxu0 0
      %541 = vmatpush1.bf16.msra.mxu0 0
      %542 = vmatprep.subr.bf16.mxu0 0
      %543 = vmatpush1.bf16.msra.mxu0 0
      %544 = vmatprep.subr.bf16.mxu0 0
      %545 = vmatpush1.bf16.msra.mxu0 0
      %546 = vmatprep.subr.bf16.mxu0 0
      %547 = vmatpush1.bf16.msra.mxu0 0
      %548 = vmatprep.subr.bf16.mxu0 0
      %549 = vmatpush1.bf16.msra.mxu0 0
      %550 = vmatprep.mubr.bf16.mxu0 0
      %551 = vmatmul.mubr.bf16.gmra.mrb[0].mxu0 %v513
      %v552 = vpop.f32.mrb[0].mxu0
      %v553 = vadd.f32 0.0, %v552
      %v554 = vpop.f32.mrb[0].mxu0
      %v555 = vpop.f32.mrb[0].mxu0
      %v556 = vpop.f32.mrb[0].mxu0
      %557 = vdwg.mxu0
      %v558 = vadd.f32 %v505, %v553
      %559 = vst.msk [vmem:[%s498] sm:$0xff] %vm285, %v558
      %560 = vst.msk [vmem:[%s473] sm:$0xff] %vm354, %v478
      %v561 = vld [vmem:[%s240] sm:$0xf]
      %v562 = vld [vmem:[%s247] sm:$0xf]
      %v563 = vld [vmem:[%s255] sm:$0xf]
      %v565 = vunpack.c.l.b16 %v561
      %v566 = vpack.c.b16 %v565, %v565
      %567 = vrot.lane.b32.xlu0 %v566, 112
      %v568 = vpop.permute.xlu0 %567
      %v570 = vunpack.c.l.b16 %v562
      %v571 = vpack.c.b16 %v570, %v570
      %572 = vrot.lane.b32.xlu0 %v571, 112
      %v573 = vpop.permute.xlu0 %572
      %v575 = vsel %vm285, %v568, 0
      %v578 = vsel %vm285, %v573, 0
      %580 = vmatprep.subr.bf16.mxu0 0
      %581 = vmatpush1.bf16.xpose.msra.mxu0 %v578
      %582 = vmatprep.subr.bf16.mxu0 0
      %583 = vmatpush1.bf16.xpose.msra.mxu0 0
      %584 = vmatprep.subr.bf16.mxu0 0
      %585 = vmatpush1.bf16.xpose.msra.mxu0 0
      %586 = vmatprep.subr.bf16.mxu0 0
      %587 = vmatpush1.bf16.xpose.msra.mxu0 0
      %588 = vmatprep.subr.bf16.mxu0 0
      %589 = vmatpush1.bf16.xpose.msra.mxu0 0
      %590 = vmatprep.subr.bf16.mxu0 0
      %591 = vmatpush1.bf16.xpose.msra.mxu0 0
      %592 = vmatprep.subr.bf16.mxu0 0
      %593 = vmatpush1.bf16.xpose.msra.mxu0 0
      %594 = vmatprep.subr.bf16.mxu0 0
      %595 = vmatpush1.bf16.xpose.msra.mxu0 0
      %596 = vmatprep.subr.bf16.mxu0 0
      %597 = vmatpush1.bf16.xpose.msra.mxu0 0
      %598 = vmatprep.subr.bf16.mxu0 0
      %599 = vmatpush1.bf16.xpose.msra.mxu0 0
      %600 = vmatprep.subr.bf16.mxu0 0
      %601 = vmatpush1.bf16.xpose.msra.mxu0 0
      %602 = vmatprep.subr.bf16.mxu0 0
      %603 = vmatpush1.bf16.xpose.msra.mxu0 0
      %604 = vmatprep.subr.bf16.mxu0 0
      %605 = vmatpush1.bf16.xpose.msra.mxu0 0
      %606 = vmatprep.subr.bf16.mxu0 0
      %607 = vmatpush1.bf16.xpose.msra.mxu0 0
      %608 = vmatprep.subr.bf16.mxu0 0
      %609 = vmatpush1.bf16.xpose.msra.mxu0 0
      %610 = vmatprep.subr.bf16.mxu0 0
      %611 = vmatpush1.bf16.xpose.msra.mxu0 0
      %612 = vmatprep.mubr.bf16.mxu0 0
      %613 = vmatmul.mubr.bf16.gmra.mrb[0].mxu0 %v575
      %v614 = vpop.f32.mrb[0].mxu0
      %v615 = vadd.f32 0.0, %v614
      %v616 = vpop.f32.mrb[0].mxu0
      %v617 = vpop.f32.mrb[0].mxu0
      %v618 = vpop.f32.mrb[0].mxu0
      %619 = vdwg.mxu0
      %s620 = scalar_lea.vmem [#allocation2], 16
      %v621 = vld [vmem:[%s620] sm:$0xff]
      %v622 = vsel %vm285, %v615, -inf
      %623 = vmax.xlane.f32.xlu0 %v622
      %v624 = vpop.xlane.xlu0 %623
      %v625 = vmax.f32 %v621, %v624
      %v626 = vsub.f32 %v621, %v625
      %v627 = vmul.f32 %v626, 1.442695
      %v628 = vpow.pop %v627
      %630 = vset.pattern.permute.xlu0 0
      %631 = vperm.xlu0 %630, %v625
      %v632 = vpop.permute.xlu0 %631
      %v634 = vsub.f32 %v615, %v632
      %v635 = vmul.f32 %v634, 1.442695
      %v636 = vpow.pop %v635
      %s637 = scalar_lea.vmem [#allocation3], 16
      %v638 = vld [vmem:[%s637] sm:$0xff]
      %v639 = vmul.f32 %v628, %v638
      %v640 = vsel %vm285, %v636, 0.0
      %641 = vadd.xlane.f32.xlu0 %v640
      %v642 = vpop.xlane.xlu0 %641
      %v643 = vadd.f32 %v639, %v642
      %644 = vst.msk [vmem:[%s637] sm:$0xff] %vm354, %v643
      %s645 = scalar_lea.vmem [#allocation4], 16
      %v646 = vld [vmem:[%s645] sm:$0xff]
      %648 = vset.pattern.permute.xlu0 0
      %649 = vperm.xlu0 %648, %v628
      %v650 = vpop.permute.xlu0 %649
      %v652 = vmul.f32 %v650, %v646
      %v653 = vpack.c.bf16 %v636, %v636
      %v655 = vunpack.c.l.b16 %v563
      %v656 = vpack.c.b16 %v655, %v655
      %657 = vrot.lane.b32.xlu0 %v656, 112
      %v658 = vpop.permute.xlu0 %657
      %v660 = vsel %vm285, %v653, 0
      %v663 = vsel %vm367, %v658, 0
      %665 = vmatprep.subr.bf16.mxu0 0
      %666 = vmatpush1.bf16.msra.mxu0 %v663
      %667 = vmatprep.subr.bf16.mxu0 0
      %668 = vmatpush1.bf16.msra.mxu0 0
      %669 = vmatprep.subr.bf16.mxu0 0
      %670 = vmatpush1.bf16.msra.mxu0 0
      %671 = vmatprep.subr.bf16.mxu0 0
      %672 = vmatpush1.bf16.msra.mxu0 0
      %673 = vmatprep.subr.bf16.mxu0 0
      %674 = vmatpush1.bf16.msra.mxu0 0
      %675 = vmatprep.subr.bf16.mxu0 0
      %676 = vmatpush1.bf16.msra.mxu0 0
      %677 = vmatprep.subr.bf16.mxu0 0
      %678 = vmatpush1.bf16.msra.mxu0 0
      %679 = vmatprep.subr.bf16.mxu0 0
      %680 = vmatpush1.bf16.msra.mxu0 0
      %681 = vmatprep.subr.bf16.mxu0 0
      %682 = vmatpush1.bf16.msra.mxu0 0
      %683 = vmatprep.subr.bf16.mxu0 0
      %684 = vmatpush1.bf16.msra.mxu0 0
      %685 = vmatprep.subr.bf16.mxu0 0
      %686 = vmatpush1.bf16.msra.mxu0 0
      %687 = vmatprep.subr.bf16.mxu0 0
      %688 = vmatpush1.bf16.msra.mxu0 0
      %689 = vmatprep.subr.bf16.mxu0 0
      %690 = vmatpush1.bf16.msra.mxu0 0
      %691 = vmatprep.subr.bf16.mxu0 0
      %692 = vmatpush1.bf16.msra.mxu0 0
      %693 = vmatprep.subr.bf16.mxu0 0
      %694 = vmatpush1.bf16.msra.mxu0 0
      %695 = vmatprep.subr.bf16.mxu0 0
      %696 = vmatpush1.bf16.msra.mxu0 0
      %697 = vmatprep.mubr.bf16.mxu0 0
      %698 = vmatmul.mubr.bf16.gmra.mrb[0].mxu0 %v660
      %v699 = vpop.f32.mrb[0].mxu0
      %v700 = vadd.f32 0.0, %v699
      %v701 = vpop.f32.mrb[0].mxu0
      %v702 = vpop.f32.mrb[0].mxu0
      %v703 = vpop.f32.mrb[0].mxu0
      %704 = vdwg.mxu0
      %v705 = vadd.f32 %v652, %v700
      %706 = vst.msk [vmem:[%s645] sm:$0xff] %vm285, %v705
      %707 = vst.msk [vmem:[%s620] sm:$0xff] %vm354, %v625
      %v708 = vld [vmem:[%s240] sm:$0xf]
      %v709 = vld [vmem:[%s247] sm:$0xf]
      %v710 = vld [vmem:[%s255] sm:$0xf]
      %v712 = vunpack.c.l.b16 %v708
      %v713 = vpack.c.b16 %v712, %v712
      %714 = vrot.lane.b32.xlu0 %v713, 104
      %v715 = vpop.permute.xlu0 %714
      %v717 = vunpack.c.l.b16 %v709
      %v718 = vpack.c.b16 %v717, %v717
      %719 = vrot.lane.b32.xlu0 %v718, 104
      %v720 = vpop.permute.xlu0 %719
      %v722 = vsel %vm285, %v715, 0
      %v725 = vsel %vm285, %v720, 0
      %727 = vmatprep.subr.bf16.mxu0 0
      %728 = vmatpush1.bf16.xpose.msra.mxu0 %v725
      %729 = vmatprep.subr.bf16.mxu0 0
      %730 = vmatpush1.bf16.xpose.msra.mxu0 0
      %731 = vmatprep.subr.bf16.mxu0 0
      %732 = vmatpush1.bf16.xpose.msra.mxu0 0
      %733 = vmatprep.subr.bf16.mxu0 0
      %734 = vmatpush1.bf16.xpose.msra.mxu0 0
      %735 = vmatprep.subr.bf16.mxu0 0
      %736 = vmatpush1.bf16.xpose.msra.mxu0 0
      %737 = vmatprep.subr.bf16.mxu0 0
      %738 = vmatpush1.bf16.xpose.msra.mxu0 0
      %739 = vmatprep.subr.bf16.mxu0 0
      %740 = vmatpush1.bf16.xpose.msra.mxu0 0
      %741 = vmatprep.subr.bf16.mxu0 0
      %742 = vmatpush1.bf16.xpose.msra.mxu0 0
      %743 = vmatprep.subr.bf16.mxu0 0
      %744 = vmatpush1.bf16.xpose.msra.mxu0 0
      %745 = vmatprep.subr.bf16.mxu0 0
      %746 = vmatpush1.bf16.xpose.msra.mxu0 0
      %747 = vmatprep.subr.bf16.mxu0 0
      %748 = vmatpush1.bf16.xpose.msra.mxu0 0
      %749 = vmatprep.subr.bf16.mxu0 0
      %750 = vmatpush1.bf16.xpose.msra.mxu0 0
      %751 = vmatprep.subr.bf16.mxu0 0
      %752 = vmatpush1.bf16.xpose.msra.mxu0 0
      %753 = vmatprep.subr.bf16.mxu0 0
      %754 = vmatpush1.bf16.xpose.msra.mxu0 0
      %755 = vmatprep.subr.bf16.mxu0 0
      %756 = vmatpush1.bf16.xpose.msra.mxu0 0
      %757 = vmatprep.subr.bf16.mxu0 0
      %758 = vmatpush1.bf16.xpose.msra.mxu0 0
      %759 = vmatprep.mubr.bf16.mxu0 0
      %760 = vmatmul.mubr.bf16.gmra.mrb[0].mxu0 %v722
      %v761 = vpop.f32.mrb[0].mxu0
      %v762 = vadd.f32 0.0, %v761
      %v763 = vpop.f32.mrb[0].mxu0
      %v764 = vpop.f32.mrb[0].mxu0
      %v765 = vpop.f32.mrb[0].mxu0
      %766 = vdwg.mxu0
      %s767 = scalar_lea.vmem [#allocation2], 24
      %v768 = vld [vmem:[%s767] sm:$0xff]
      %v769 = vsel %vm285, %v762, -inf
      %770 = vmax.xlane.f32.xlu0 %v769
      %v771 = vpop.xlane.xlu0 %770
      %v772 = vmax.f32 %v768, %v771
      %v773 = vsub.f32 %v768, %v772
      %v774 = vmul.f32 %v773, 1.442695
      %v775 = vpow.pop %v774
      %777 = vset.pattern.permute.xlu0 0
      %778 = vperm.xlu0 %777, %v772
      %v779 = vpop.permute.xlu0 %778
      %v781 = vsub.f32 %v762, %v779
      %v782 = vmul.f32 %v781, 1.442695
      %v783 = vpow.pop %v782
      %s784 = scalar_lea.vmem [#allocation3], 24
      %v785 = vld [vmem:[%s784] sm:$0xff]
      %v786 = vmul.f32 %v775, %v785
      %v787 = vsel %vm285, %v783, 0.0
      %788 = vadd.xlane.f32.xlu0 %v787
      %v789 = vpop.xlane.xlu0 %788
      %v790 = vadd.f32 %v786, %v789
      %791 = vst.msk [vmem:[%s784] sm:$0xff] %vm354, %v790
      %s792 = scalar_lea.vmem [#allocation4], 24
      %v793 = vld [vmem:[%s792] sm:$0xff]
      %795 = vset.pattern.permute.xlu0 0
      %796 = vperm.xlu0 %795, %v775
      %v797 = vpop.permute.xlu0 %796
      %v799 = vmul.f32 %v797, %v793
      %v800 = vpack.c.bf16 %v783, %v783
      %v802 = vunpack.c.l.b16 %v710
      %v803 = vpack.c.b16 %v802, %v802
      %804 = vrot.lane.b32.xlu0 %v803, 104
      %v805 = vpop.permute.xlu0 %804
      %v807 = vsel %vm285, %v800, 0
      %v810 = vsel %vm367, %v805, 0
      %812 = vmatprep.subr.bf16.mxu0 0
      %813 = vmatpush1.bf16.msra.mxu0 %v810
      %814 = vmatprep.subr.bf16.mxu0 0
      %815 = vmatpush1.bf16.msra.mxu0 0
      %816 = vmatprep.subr.bf16.mxu0 0
      %817 = vmatpush1.bf16.msra.mxu0 0
      %818 = vmatprep.subr.bf16.mxu0 0
      %819 = vmatpush1.bf16.msra.mxu0 0
      %820 = vmatprep.subr.bf16.mxu0 0
      %821 = vmatpush1.bf16.msra.mxu0 0
      %822 = vmatprep.subr.bf16.mxu0 0
      %823 = vmatpush1.bf16.msra.mxu0 0
      %824 = vmatprep.subr.bf16.mxu0 0
      %825 = vmatpush1.bf16.msra.mxu0 0
      %826 = vmatprep.subr.bf16.mxu0 0
      %827 = vmatpush1.bf16.msra.mxu0 0
      %828 = vmatprep.subr.bf16.mxu0 0
      %829 = vmatpush1.bf16.msra.mxu0 0
      %830 = vmatprep.subr.bf16.mxu0 0
      %831 = vmatpush1.bf16.msra.mxu0 0
      %832 = vmatprep.subr.bf16.mxu0 0
      %833 = vmatpush1.bf16.msra.mxu0 0
      %834 = vmatprep.subr.bf16.mxu0 0
      %835 = vmatpush1.bf16.msra.mxu0 0
      %836 = vmatprep.subr.bf16.mxu0 0
      %837 = vmatpush1.bf16.msra.mxu0 0
      %838 = vmatprep.subr.bf16.mxu0 0
      %839 = vmatpush1.bf16.msra.mxu0 0
      %840 = vmatprep.subr.bf16.mxu0 0
      %841 = vmatpush1.bf16.msra.mxu0 0
      %842 = vmatprep.subr.bf16.mxu0 0
      %843 = vmatpush1.bf16.msra.mxu0 0
      %844 = vmatprep.mubr.bf16.mxu0 0
      %845 = vmatmul.mubr.bf16.gmra.mrb[0].mxu0 %v807
      %v846 = vpop.f32.mrb[0].mxu0
      %v847 = vadd.f32 0.0, %v846
      %v848 = vpop.f32.mrb[0].mxu0
      %v849 = vpop.f32.mrb[0].mxu0
      %v850 = vpop.f32.mrb[0].mxu0
      %851 = vdwg.mxu0
      %v852 = vadd.f32 %v799, %v847
      %853 = vst.msk [vmem:[%s792] sm:$0xff] %vm285, %v852
      %854 = vst.msk [vmem:[%s767] sm:$0xff] %vm354, %v772
      // Predicated region
      $region37: #{transformer_forward.44} parent=31 // pred_check
        %p855 = pneg %p264
      $region38: #{transformer_forward.44} parent=31 // pred_check_branch
        %857 = sbr.rel (%p855) target = $region40
      $region39: #{transformer_forward.44} parent=31 // pred_region
        %v858 = vld [vmem:[#allocation3] sm:$0xff]
        %v859 = vrcp.pop %v858
        %v860 = vld [vmem:[#allocation4] sm:$0xff]
        %862 = vset.pattern.permute.xlu0 0
        %863 = vperm.xlu0 %862, %v859
        %v864 = vpop.permute.xlu0 %863
        %v866 = vmul.f32 %v860, %v864
        %v867 = vpack.c.bf16 %v866, %v866
        %vm868 = vcmask 60416
        %869 = vst.msk [vmem:[%s262] sm:$0xf] %vm868, %v867
        %v870 = vld [vmem:[%s490] sm:$0xff]
        %v871 = vrcp.pop %v870
        %v872 = vld [vmem:[%s498] sm:$0xff]
        %874 = vset.pattern.permute.xlu0 0
        %875 = vperm.xlu0 %874, %v871
        %v876 = vpop.permute.xlu0 %875
        %v878 = vmul.f32 %v872, %v876
        %v879 = vpack.c.bf16 %v878, %v878
        %v881 = vunpack.c.l.b16 %v879
        %v882 = vpack.c.b16 %v881, %v881
        %883 = vrot.lane.b32.xlu0 %v882, 8
        %v884 = vpop.permute.xlu0 %883
        %vm886 = vcmask 126016
        %887 = vst.msk [vmem:[%s262] sm:$0xf] %vm886, %v884
        %v888 = vld [vmem:[%s637] sm:$0xff]
        %v889 = vrcp.pop %v888
        %v890 = vld [vmem:[%s645] sm:$0xff]
        %892 = vset.pattern.permute.xlu0 0
        %893 = vperm.xlu0 %892, %v889
        %v894 = vpop.permute.xlu0 %893
        %v896 = vmul.f32 %v890, %v894
        %v897 = vpack.c.bf16 %v896, %v896
        %v899 = vunpack.c.l.b16 %v897
        %v900 = vpack.c.b16 %v899, %v899
        %901 = vrot.lane.b32.xlu0 %v900, 16
        %v902 = vpop.permute.xlu0 %901
        %vm904 = vcmask 191616
        %905 = vst.msk [vmem:[%s262] sm:$0xf] %vm904, %v902
        %v906 = vld [vmem:[%s784] sm:$0xff]
        %v907 = vrcp.pop %v906
        %v908 = vld [vmem:[%s792] sm:$0xff]
        %910 = vset.pattern.permute.xlu0 0
        %911 = vperm.xlu0 %910, %v907
        %v912 = vpop.permute.xlu0 %911
        %v914 = vmul.f32 %v908, %v912
        %v915 = vpack.c.bf16 %v914, %v914
        %v917 = vunpack.c.l.b16 %v915
        %v918 = vpack.c.b16 %v917, %v917
        %919 = vrot.lane.b32.xlu0 %v918, 24
        %v920 = vpop.permute.xlu0 %919
        %vm922 = vcmask 257216
        %923 = vst.msk [vmem:[%s262] sm:$0xf] %vm922, %v920
      $region40: #{transformer_forward.44} parent=31 // pred_fallthru
        _
      %p924 = scmp.lt.s32.totalorder %s19, 1
      %s925 = scalar_select %p924, %s19, 1
      %p926 = scmp.lt.s32.totalorder %s20, 0
      %s927 = scalar_select %p926, %s20, 0
      %s928 = sadd.s32 %s927, %s925
      %s929 = smul.addr %s928, 4
      %s930 = scalar_lea.vmem %s3, %s929
      // Predicated region
      $region41: #{transformer_forward.44} parent=31 // pred_check
        %p931 = pneg %p137
      $region42: #{transformer_forward.44} parent=31 // pred_check_branch
        %933 = sbr.rel (%p931) target = $region44
      $region43: #{transformer_forward.44} parent=31 // pred_region
        _
      $region44: #{transformer_forward.44} parent=31 // pred_fallthru
        _
    $region32: #{transformer_forward.44} parent=5 // pred_fallthru
      _
    %p934 = scmp.le.s32.totalorder 2, %s9
    // Predicated region
    $region45: #{transformer_forward.44} parent=5 // pred_check
      %p935 = pneg %p934
    $region46: #{transformer_forward.44} parent=5 // pred_check_branch
      %937 = sbr.rel (%p935) target = $region48
    $region47: #{transformer_forward.44} parent=5 // pred_region
      %s938 = ssub.s32 %s9, 2
      // Predicated region
      $region49: #{transformer_forward.44} parent=47 // pred_check
        %p939 = pneg %p143
      $region50: #{transformer_forward.44} parent=47 // pred_check_branch
        %941 = sbr.rel (%p939) target = $region52
      $region51: #{transformer_forward.44} parent=47 // pred_region
        %p942 = scmp.lt.s32.totalorder %s22, 1
        %s943 = scalar_select %p942, %s22, 1
        %p944 = scmp.lt.s32.totalorder %s23, 0
        %s945 = scalar_select %p944, %s23, 0
        %s946 = sadd.s32 %s945, %s943
        %s947 = smul.addr %s946, 4
        %s948 = scalar_lea.vmem %s3, %s947
      $region52: #{transformer_forward.44} parent=47 // pred_fallthru
        _
    $region48: #{transformer_forward.44} parent=5 // pred_fallthru
      _
  $region6: #{transformer_forward.44} parent=0 // loop_footer
    %s13 = sadd.s32 1, %s9
  $region7: #{transformer_forward.44} parent=0 // loop_footer_branch
    %8 = sbr.rel target = $region3
  $region8: #{transformer_forward.44} parent=0 // loop_exit
    _

</llo_original>
